<compile_context>
chip_gen: v7x
topology: tpu7x:2x2x1
jax: 0.10.0
libtpu: 0.0.40
codegen_flags: <defaults>
</compile_context>

<pallas_src>
import functools

import jax
import jax.numpy as jnp
from jax import lax
from jax.experimental import pallas as pl
from jax.experimental.pallas import tpu as pltpu


def hybrid_encoder_kernel(
    x_ref, pvc_ref, pvr_ref, phc_ref, phr_ref, gates_ref,
    ln1w_ref, ln1b_ref, win_ref, bin_ref, wout_ref, bout_ref,
    ln2w_ref, ln2b_ref, w1_ref, b1_ref, w2_ref, b2_ref,
    o_ref,
    kw_sc,
    *, nhead, sigma,
):
    layer = pl.program_id(1)
    nb, T = pvc_ref.shape[0], pvc_ref.shape[1]          # batch-block size, seq len
    D = x_ref.shape[-1]
    hd = D // nhead

    # ---- layer 0 (per batch block): load activations + precompute Gaussian kernel ----
    @pl.when(layer == 0)
    def _init():
        o_ref[...] = x_ref[...]                          # residual stream becomes VMEM-resident
        dv = pvc_ref[...] - pvr_ref[...]                 # (nb,T,1)-(nb,1,T) -> (nb,T,T)
        dh = phc_ref[...] - phr_ref[...]
        dist_sq = dv * dv + dh * dh
        kwe = jnp.exp(dist_sq * (-1.0 / (2.0 * sigma * sigma)))
        inv = pl.reciprocal(jnp.sum(kwe, axis=-1, keepdims=True), approx=True)
        kw_sc[...] = (kwe * inv).astype(kw_sc.dtype)     # bf16, layer-invariant

    x = o_ref[...]                                       # (nb*T, D) f32 residual stream

    # ---- LayerNorm 1 (eps = 1e-5) ----
    mu = jnp.mean(x, axis=-1, keepdims=True)
    var = jnp.mean((x - mu) ** 2, axis=-1, keepdims=True)
    xn = (x - mu) * lax.rsqrt(var + 1e-5) * ln1w_ref[0] + ln1b_ref[0]
    xn_b = xn.astype(jnp.bfloat16)

    # ---- multi-head self-attention (no mask, eval dropout) ----
    # fused QKV projection over all NB*T tokens (bf16 in, f32 accumulate)
    qkv = jnp.dot(xn_b, win_ref[0], preferred_element_type=jnp.float32) + bin_ref[0]  # (nb*T,3D)
    qkv3 = qkv.reshape(nb, T, 3 * D)                     # f32 row-split (layout preserving)

    scale = 1.0 / (hd ** 0.5)
    ctx_heads = []
    for h in range(nhead):
        # static lane slices of the live value -- no scratch stores / reloads
        qh = qkv3[:, :, h * hd:(h + 1) * hd].astype(jnp.bfloat16)            # (nb,T,hd)
        kh = qkv3[:, :, D + h * hd:D + (h + 1) * hd].astype(jnp.bfloat16)
        vh = qkv3[:, :, 2 * D + h * hd:2 * D + (h + 1) * hd].astype(jnp.bfloat16)
        s = jnp.einsum("bqd,bkd->bqk", qh, kh,
                       preferred_element_type=jnp.float32) * scale           # (nb,T,T)
        s = s - jnp.max(s, axis=-1, keepdims=True)
        p = jnp.exp(s)
        p = p * pl.reciprocal(jnp.sum(p, axis=-1, keepdims=True), approx=True)
        ctx_heads.append(jnp.einsum("bqk,bkd->bqd", p.astype(jnp.bfloat16), vh,
                                    preferred_element_type=jnp.float32))     # (nb,T,hd)
    ctx = jnp.concatenate(ctx_heads, axis=-1) if nhead > 1 else ctx_heads[0]  # (nb,T,D)
    ctx_flat = ctx.reshape(nb * T, D).astype(jnp.bfloat16)
    std_out = jnp.dot(ctx_flat, wout_ref[0],
                      preferred_element_type=jnp.float32) + bout_ref[0]       # (nb*T,D)

    # ---- 2D Gaussian kernel attention (kw precomputed once per batch block) ----
    xn3_b = xn.reshape(nb, T, D).astype(jnp.bfloat16)
    kernel_out = jnp.einsum("bqk,bkd->bqd", kw_sc[...], xn3_b,
                            preferred_element_type=jnp.float32).reshape(nb * T, D)

    # ---- gated residual mix ----
    g = gates_ref[layer]                                  # scalar read from SMEM
    x1 = x + g * std_out + (1.0 - g) * kernel_out

    # ---- LayerNorm 2 + MLP (Linear -> exact GELU -> Linear) ----
    mu2 = jnp.mean(x1, axis=-1, keepdims=True)
    var2 = jnp.mean((x1 - mu2) ** 2, axis=-1, keepdims=True)
    xn2 = (x1 - mu2) * lax.rsqrt(var2 + 1e-5) * ln2w_ref[0] + ln2b_ref[0]
    hh = jnp.dot(xn2.astype(jnp.bfloat16), w1_ref[0],
                 preferred_element_type=jnp.float32) + b1_ref[0]              # (nb*T,4D)
    hh = 0.5 * hh * (1.0 + lax.erf(hh * (2.0 ** -0.5)))                       # exact GELU
    mlp_out = jnp.dot(hh.astype(jnp.bfloat16), w2_ref[0],
                      preferred_element_type=jnp.float32) + b2_ref[0]

    o_ref[...] = (x1 + mlp_out).astype(o_ref.dtype)       # resident until batch block changes


def hybrid_transformer_encoder(x, posv, posh, params, *, nhead, sigma=16.0,
                               block_b=None, vmem_limit_bytes=48 * 1024 * 1024):
    B, T, D = x.shape
    L = len(params)
    assert D % nhead == 0
    # in-kernel flat-token <-> per-element reshapes are layout preserving only for T % 8 == 0
    assert T % 8 == 0, "sequence length must be a multiple of 8"

    # batch blocking: largest divisor of B with nb*T <= 1024 rows (targets >= 512 where possible)
    if block_b is None:
        block_b = 1
        for cand in range(1, B + 1):
            if B % cand == 0 and cand * T <= 1024:
                block_b = cand
    nb = block_b
    assert B % nb == 0

    x_flat = x.reshape(B * T, D).astype(jnp.float32)

    # positions as column / row views so pairwise distance is a plain broadcast in-kernel
    pvc = posv.reshape(B, T, 1).astype(jnp.float32)
    pvr = posv.reshape(B, 1, T).astype(jnp.float32)
    phc = posh.reshape(B, T, 1).astype(jnp.float32)
    phr = posh.reshape(B, 1, T).astype(jnp.float32)

    # per-layer gate scalars -> SMEM table
    gates = jnp.stack([jax.nn.sigmoid(p["gate"]) for p in params]).astype(jnp.float32)  # (L,)

    # stack per-layer weights along a leading layer axis; big matrices pre-transposed
    # (input-dim major) and cast to bf16 for the MXU; biases / LN params stay f32.
    def stack(name, dtype=jnp.float32, transpose=False):
        return jnp.stack([p[name].T if transpose else p[name] for p in params]).astype(dtype)

    ln1w = stack("ln1w"); ln1b = stack("ln1b")
    win_t = stack("win", jnp.bfloat16, transpose=True)     # (L, D, 3D)
    bin_ = stack("bin")
    wout_t = stack("wout", jnp.bfloat16, transpose=True)   # (L, D, D)
    bout = stack("bout")
    ln2w = stack("ln2w"); ln2b = stack("ln2b")
    w1_t = stack("w1", jnp.bfloat16, transpose=True)       # (L, D, 4D)
    b1 = stack("b1")
    w2_t = stack("w2", jnp.bfloat16, transpose=True)       # (L, 4D, D)
    b2 = stack("b2")

    weights = [ln1w, ln1b, win_t, bin_, wout_t, bout, ln2w, ln2b, w1_t, b1, w2_t, b2]

    def pos_spec(shape):    # per-batch-block tile, constant over the layer axis (fetched once)
        return pl.BlockSpec((nb,) + shape, lambda b, l: (b, 0, 0))

    def layer_spec(arr):    # per-layer weight tile, streamed along the (inner) layer axis
        return pl.BlockSpec((1,) + arr.shape[1:], lambda b, l: (l, 0, 0))

    in_specs = [
        pl.BlockSpec((nb * T, D), lambda b, l: (b, 0)),      # flat residual-stream input
        pos_spec((T, 1)),                                    # posv column
        pos_spec((1, T)),                                    # posv row
        pos_spec((T, 1)),                                    # posh column
        pos_spec((1, T)),                                    # posh row
        pl.BlockSpec(memory_space=pltpu.MemorySpace.SMEM),   # per-layer gates (L,)
    ] + [layer_spec(w) for w in weights]

    kernel = functools.partial(hybrid_encoder_kernel, nhead=nhead, sigma=float(sigma))

    out_flat = pl.pallas_call(
        kernel,
        out_shape=jax.ShapeDtypeStruct((B * T, D), jnp.float32),
        grid_spec=pltpu.PrefetchScalarGridSpec(
            num_scalar_prefetch=0,
            grid=(B // nb, L),                               # batch blocks outer, layers inner
            in_specs=in_specs,
            out_specs=pl.BlockSpec((nb * T, D), lambda b, l: (b, 0)),
            scratch_shapes=[
                pltpu.VMEM((nb, T, T), jnp.bfloat16),        # Gaussian kernel weights (per block)
            ],
        ),
        input_output_aliases={0: 0},                         # output reuses the input HBM buffer
        compiler_params=pltpu.CompilerParams(
            dimension_semantics=("parallel", "arbitrary"),   # batch blocks shard across cores
            vmem_limit_bytes=vmem_limit_bytes,               # raise above 16/32 MiB defaults
        ),
    )(x_flat, pvc, pvr, phc, phr, gates, *weights)

    return out_flat.reshape(B, T, D)


def init_params(key, d_model, num_layers):
    D = d_model
    layers = []
    for _ in range(num_layers):
        key, *ks = jax.random.split(key, 13)

        def u(k, shape, s):
            return jax.random.uniform(k, shape, jnp.float32, -1.0, 1.0) * s

        layers.append(dict(
            ln1w=1.0 + u(ks[0], (1, D), 0.1),
            ln1b=u(ks[1], (1, D), 0.1),
            win=u(ks[2], (3 * D, D), 0.2),          # MHA in_proj_weight
            bin=u(ks[3], (1, 3 * D), 0.05),
            wout=u(ks[4], (D, D), 0.2),             # MHA out_proj
            bout=u(ks[5], (1, D), 0.05),
            gate=jnp.asarray(0.0, jnp.float32),     # matches nn.Parameter(torch.tensor(0.0))
            ln2w=1.0 + u(ks[6], (1, D), 0.1),
            ln2b=u(ks[7], (1, D), 0.1),
            w1=u(ks[8], (4 * D, D), 0.2),
            b1=u(ks[9], (1, 4 * D), 0.05),
            w2=u(ks[10], (D, 4 * D), 0.2),
            b2=u(ks[11], (1, D), 0.05),
        ))
    return layers


if __name__ == "__main__":
    B, T, D, NHEAD, NUM_LAYERS = 2, 8, 32, 8, 2

    root = jax.random.PRNGKey(0)
    k_x, k_pv, k_ph, k_params = jax.random.split(root, 4)

    x = jax.random.normal(k_x, (B, T, D), jnp.float32)
    posv = jax.random.randint(k_pv, (B, T), 0, 10).astype(jnp.float32)
    posh = jax.random.randint(k_ph, (B, T), 0, 10).astype(jnp.float32)
    params = init_params(k_params, D, NUM_LAYERS)

    out = hybrid_transformer_encoder(x, posv, posh, params, nhead=NHEAD, sigma=16.0)
    out = jax.block_until_ready(out)

    assert out.shape == (B, T, D)
    assert bool(jnp.all(jnp.isfinite(out)))
    print("KERNEL_OK")
</pallas_src>

<mosaic_0001>
module attributes {stable_mosaic.version = 11 : i64} {
  func.func @hybrid_encoder_kernel(%arg0: i32, %arg1: i32, %arg2: memref<16x32xf32, #tpu.memory_space<vmem>>, %arg3: memref<2x8x1xf32, #tpu.memory_space<vmem>>, %arg4: memref<2x1x8xf32, #tpu.memory_space<vmem>>, %arg5: memref<2x8x1xf32, #tpu.memory_space<vmem>>, %arg6: memref<2x1x8xf32, #tpu.memory_space<vmem>>, %arg7: memref<2xf32, #tpu.memory_space<smem>>, %arg8: memref<1x1x32xf32, #tpu.memory_space<vmem>>, %arg9: memref<1x1x32xf32, #tpu.memory_space<vmem>>, %arg10: memref<1x32x96xbf16, #tpu.memory_space<vmem>>, %arg11: memref<1x1x96xf32, #tpu.memory_space<vmem>>, %arg12: memref<1x32x32xbf16, #tpu.memory_space<vmem>>, %arg13: memref<1x1x32xf32, #tpu.memory_space<vmem>>, %arg14: memref<1x1x32xf32, #tpu.memory_space<vmem>>, %arg15: memref<1x1x32xf32, #tpu.memory_space<vmem>>, %arg16: memref<1x32x128xbf16, #tpu.memory_space<vmem>>, %arg17: memref<1x1x128xf32, #tpu.memory_space<vmem>>, %arg18: memref<1x128x32xbf16, #tpu.memory_space<vmem>>, %arg19: memref<1x1x32xf32, #tpu.memory_space<vmem>>, %arg20: memref<16x32xf32, #tpu.memory_space<vmem>>, %arg21: memref<2x8x8xbf16, #tpu.memory_space<vmem>>) attributes {dimension_semantics = [#tpu.dimension_semantics<parallel>, #tpu.dimension_semantics<arbitrary>], iteration_bounds = array<i64: 1, 2>, scalar_prefetch = 0 : i64, scratch_operands = 1 : i64, tpu.core_type = #tpu.core_type<tc>, window_params = [{transform_indices = @transform_0, window_bounds = array<i64: 16, 32>}, {transform_indices = @transform_1, window_bounds = array<i64: 2, 8, 1>}, {transform_indices = @transform_2, window_bounds = array<i64: 2, 1, 8>}, {transform_indices = @transform_3, window_bounds = array<i64: 2, 8, 1>}, {transform_indices = @transform_4, window_bounds = array<i64: 2, 1, 8>}, {transform_indices = @transform_5, window_bounds = array<i64: 2>}, {transform_indices = @transform_6, window_bounds = array<i64: 1, 1, 32>}, {transform_indices = @transform_7, window_bounds = array<i64: 1, 1, 32>}, {transform_indices = @transform_8, window_bounds = array<i64: 1, 32, 96>}, {transform_indices = @transform_9, window_bounds = array<i64: 1, 1, 96>}, {transform_indices = @transform_10, window_bounds = array<i64: 1, 32, 32>}, {transform_indices = @transform_11, window_bounds = array<i64: 1, 1, 32>}, {transform_indices = @transform_12, window_bounds = array<i64: 1, 1, 32>}, {transform_indices = @transform_13, window_bounds = array<i64: 1, 1, 32>}, {transform_indices = @transform_14, window_bounds = array<i64: 1, 32, 128>}, {transform_indices = @transform_15, window_bounds = array<i64: 1, 1, 128>}, {transform_indices = @transform_16, window_bounds = array<i64: 1, 128, 32>}, {transform_indices = @transform_17, window_bounds = array<i64: 1, 1, 32>}, {transform_indices = @transform_18, window_bounds = array<i64: 16, 32>}]} {
    %c0_i32 = arith.constant 0 : i32
    %0 = arith.cmpi eq, %arg1, %c0_i32 : i32
    %1 = arith.extui %0 : i1 to i32
    %c0_i32_0 = arith.constant 0 : i32
    %2 = arith.cmpi ne, %1, %c0_i32_0 : i32
    scf.if %2 {
      %c0_101 = arith.constant 0 : index
      %c0_102 = arith.constant 0 : index
      %283 = vector.load %arg2[%c0_101, %c0_102] : memref<16x32xf32, #tpu.memory_space<vmem>>, vector<16x32xf32>
      %c0_103 = arith.constant 0 : index
      %c0_104 = arith.constant 0 : index
      %284 = vector.load %arg20[%c0_103, %c0_104] : memref<16x32xf32, #tpu.memory_space<vmem>>, vector<16x32xf32>
      tpu.vector_store %arg20[%c0_103, %c0_104], %283 {strides = array<i32>} : memref<16x32xf32, #tpu.memory_space<vmem>>, vector<16x32xf32>,
      %c0_105 = arith.constant 0 : index
      %c0_106 = arith.constant 0 : index
      %c0_107 = arith.constant 0 : index
      %285 = vector.load %arg3[%c0_105, %c0_106, %c0_107] : memref<2x8x1xf32, #tpu.memory_space<vmem>>, vector<2x8x1xf32>
      %c0_108 = arith.constant 0 : index
      %c0_109 = arith.constant 0 : index
      %c0_110 = arith.constant 0 : index
      %286 = vector.load %arg4[%c0_108, %c0_109, %c0_110] : memref<2x1x8xf32, #tpu.memory_space<vmem>>, vector<2x1x8xf32>
      %287 = vector.broadcast %285 : vector<2x8x1xf32> to vector<2x8x8xf32>
      %288 = vector.broadcast %286 : vector<2x1x8xf32> to vector<2x8x8xf32>
      %289 = arith.subf %287, %288 : vector<2x8x8xf32>
      %c0_111 = arith.constant 0 : index
      %c0_112 = arith.constant 0 : index
      %c0_113 = arith.constant 0 : index
      %290 = vector.load %arg5[%c0_111, %c0_112, %c0_113] : memref<2x8x1xf32, #tpu.memory_space<vmem>>, vector<2x8x1xf32>
      %c0_114 = arith.constant 0 : index
      %c0_115 = arith.constant 0 : index
      %c0_116 = arith.constant 0 : index
      %291 = vector.load %arg6[%c0_114, %c0_115, %c0_116] : memref<2x1x8xf32, #tpu.memory_space<vmem>>, vector<2x1x8xf32>
      %292 = vector.broadcast %290 : vector<2x8x1xf32> to vector<2x8x8xf32>
      %293 = vector.broadcast %291 : vector<2x1x8xf32> to vector<2x8x8xf32>
      %294 = arith.subf %292, %293 : vector<2x8x8xf32>
      %295 = arith.mulf %289, %289 : vector<2x8x8xf32>
      %296 = arith.mulf %294, %294 : vector<2x8x8xf32>
      %297 = arith.addf %295, %296 : vector<2x8x8xf32>
      %cst_117 = arith.constant -0.001953125 : f32
      %298 = vector.broadcast %cst_117 : f32 to vector<2x8x8xf32>
      %299 = arith.mulf %297, %298 : vector<2x8x8xf32>
      %300 = math.exp %299 : vector<2x8x8xf32>
      %cst_118 = arith.constant dense<0.000000e+00> : vector<2x8xf32>
      %301 = vector.multi_reduction <add>, %300, %cst_118 [2] : vector<2x8x8xf32> to vector<2x8xf32>
      %302 = vector.shape_cast %301 : vector<2x8xf32> to vector<2x8x1xf32>
      %303 = tpu.reciprocal %302 {approx = true} : vector<2x8x1xf32> -> vector<2x8x1xf32>
      %304 = vector.broadcast %303 : vector<2x8x1xf32> to vector<2x8x8xf32>
      %305 = arith.mulf %300, %304 : vector<2x8x8xf32>
      %306 = arith.truncf %305 : vector<2x8x8xf32> to vector<2x8x8xbf16>
      %c0_119 = arith.constant 0 : index
      %c0_120 = arith.constant 0 : index
      %c0_121 = arith.constant 0 : index
      %307 = vector.load %arg21[%c0_119, %c0_120, %c0_121] : memref<2x8x8xbf16, #tpu.memory_space<vmem>>, vector<2x8x8xbf16>
      tpu.vector_store %arg21[%c0_119, %c0_120, %c0_121], %306 {strides = array<i32>} : memref<2x8x8xbf16, #tpu.memory_space<vmem>>, vector<2x8x8xbf16>,
    } else {
    }
    %c0 = arith.constant 0 : index
    %c0_1 = arith.constant 0 : index
    %3 = vector.load %arg20[%c0, %c0_1] : memref<16x32xf32, #tpu.memory_space<vmem>>, vector<16x32xf32>
    %cst = arith.constant dense<0.000000e+00> : vector<16xf32>
    %4 = vector.multi_reduction <add>, %3, %cst [1] : vector<16x32xf32> to vector<16xf32>
    %5 = vector.shape_cast %4 : vector<16xf32> to vector<16x1xf32>
    %cst_2 = arith.constant 3.200000e+01 : f32
    %6 = vector.broadcast %cst_2 : f32 to vector<16x1xf32>
    %7 = arith.divf %5, %6 : vector<16x1xf32>
    %8 = vector.broadcast %7 : vector<16x1xf32> to vector<16x32xf32>
    %9 = arith.subf %3, %8 : vector<16x32xf32>
    %10 = arith.mulf %9, %9 : vector<16x32xf32>
    %cst_3 = arith.constant dense<0.000000e+00> : vector<16xf32>
    %11 = vector.multi_reduction <add>, %10, %cst_3 [1] : vector<16x32xf32> to vector<16xf32>
    %12 = vector.shape_cast %11 : vector<16xf32> to vector<16x1xf32>
    %cst_4 = arith.constant 3.200000e+01 : f32
    %13 = vector.broadcast %cst_4 : f32 to vector<16x1xf32>
    %14 = arith.divf %12, %13 : vector<16x1xf32>
    %15 = vector.broadcast %7 : vector<16x1xf32> to vector<16x32xf32>
    %16 = arith.subf %3, %15 : vector<16x32xf32>
    %cst_5 = arith.constant 9.99999974E-6 : f32
    %17 = vector.broadcast %cst_5 : f32 to vector<16x1xf32>
    %18 = arith.addf %14, %17 : vector<16x1xf32>
    %19 = math.rsqrt %18 : vector<16x1xf32>
    %20 = vector.broadcast %19 : vector<16x1xf32> to vector<16x32xf32>
    %21 = arith.mulf %16, %20 : vector<16x32xf32>
    %c0_6 = arith.constant 0 : index
    %c0_7 = arith.constant 0 : index
    %c0_8 = arith.constant 0 : index
    %22 = vector.load %arg8[%c0_6, %c0_7, %c0_8] : memref<1x1x32xf32, #tpu.memory_space<vmem>>, vector<1x1x32xf32>
    %23 = vector.shape_cast %22 : vector<1x1x32xf32> to vector<1x32xf32>
    %24 = vector.broadcast %23 : vector<1x32xf32> to vector<16x32xf32>
    %25 = arith.mulf %21, %24 : vector<16x32xf32>
    %c0_9 = arith.constant 0 : index
    %c0_10 = arith.constant 0 : index
    %c0_11 = arith.constant 0 : index
    %26 = vector.load %arg9[%c0_9, %c0_10, %c0_11] : memref<1x1x32xf32, #tpu.memory_space<vmem>>, vector<1x1x32xf32>
    %27 = vector.shape_cast %26 : vector<1x1x32xf32> to vector<1x32xf32>
    %28 = vector.broadcast %27 : vector<1x32xf32> to vector<16x32xf32>
    %29 = arith.addf %25, %28 : vector<16x32xf32>
    %30 = arith.truncf %29 : vector<16x32xf32> to vector<16x32xbf16>
    %c0_12 = arith.constant 0 : index
    %c0_13 = arith.constant 0 : index
    %c0_14 = arith.constant 0 : index
    %31 = vector.load %arg10[%c0_12, %c0_13, %c0_14] : memref<1x32x96xbf16, #tpu.memory_space<vmem>>, vector<1x32x96xbf16>
    %32 = vector.shape_cast %31 : vector<1x32x96xbf16> to vector<32x96xbf16>
    %cst_15 = arith.constant dense<0.000000e+00> : vector<16x96xf32>
    %33 = tpu.matmul %30, %32, %cst_15 {dimension_numbers = #tpu.dot_dimension_numbers<[1], [0], [0], [1], [0, 0, 1, 1], [], []>} : vector<16x32xbf16>, vector<32x96xbf16>, vector<16x96xf32> -> vector<16x96xf32>
    %c0_16 = arith.constant 0 : index
    %c0_17 = arith.constant 0 : index
    %c0_18 = arith.constant 0 : index
    %34 = vector.load %arg11[%c0_16, %c0_17, %c0_18] : memref<1x1x96xf32, #tpu.memory_space<vmem>>, vector<1x1x96xf32>
    %35 = vector.shape_cast %34 : vector<1x1x96xf32> to vector<1x96xf32>
    %36 = vector.broadcast %35 : vector<1x96xf32> to vector<16x96xf32>
    %37 = arith.addf %33, %36 : vector<16x96xf32>
    %38 = vector.shape_cast %37 : vector<16x96xf32> to vector<2x8x96xf32>
    %39 = vector.extract_strided_slice %38 {offsets = [0, 0, 0], sizes = [2, 8, 4], strides = [1, 1, 1]} : vector<2x8x96xf32> to vector<2x8x4xf32>
    %40 = arith.truncf %39 : vector<2x8x4xf32> to vector<2x8x4xbf16>
    %41 = vector.extract_strided_slice %38 {offsets = [0, 0, 32], sizes = [2, 8, 4], strides = [1, 1, 1]} : vector<2x8x96xf32> to vector<2x8x4xf32>
    %42 = arith.truncf %41 : vector<2x8x4xf32> to vector<2x8x4xbf16>
    %43 = vector.extract_strided_slice %38 {offsets = [0, 0, 64], sizes = [2, 8, 4], strides = [1, 1, 1]} : vector<2x8x96xf32> to vector<2x8x4xf32>
    %44 = arith.truncf %43 : vector<2x8x4xf32> to vector<2x8x4xbf16>
    "tpu.trace_start"() <{level = 10 : i32, message = "bqd,bkd->bqk"}> : () -> ()
    %cst_19 = arith.constant dense<0.000000e+00> : vector<2x8x8xf32>
    %45 = tpu.matmul %40, %42, %cst_19 {dimension_numbers = #tpu.dot_dimension_numbers<[2], [2], [1], [1], [0, 0, 0, 1, 1, 1], [0], [0]>} : vector<2x8x4xbf16>, vector<2x8x4xbf16>, vector<2x8x8xf32> -> vector<2x8x8xf32>
    "tpu.trace_stop"() : () -> ()
    %cst_20 = arith.constant 5.000000e-01 : f32
    %46 = vector.broadcast %cst_20 : f32 to vector<2x8x8xf32>
    %47 = arith.mulf %45, %46 : vector<2x8x8xf32>
    %cst_21 = arith.constant dense<0xFF800000> : vector<2x8xf32>
    %48 = vector.multi_reduction <maximumf>, %47, %cst_21 [2] : vector<2x8x8xf32> to vector<2x8xf32>
    %49 = vector.shape_cast %48 : vector<2x8xf32> to vector<2x8x1xf32>
    %50 = vector.broadcast %49 : vector<2x8x1xf32> to vector<2x8x8xf32>
    %51 = arith.subf %47, %50 : vector<2x8x8xf32>
    %52 = math.exp %51 : vector<2x8x8xf32>
    %cst_22 = arith.constant dense<0.000000e+00> : vector<2x8xf32>
    %53 = vector.multi_reduction <add>, %52, %cst_22 [2] : vector<2x8x8xf32> to vector<2x8xf32>
    %54 = vector.shape_cast %53 : vector<2x8xf32> to vector<2x8x1xf32>
    %55 = tpu.reciprocal %54 {approx = true} : vector<2x8x1xf32> -> vector<2x8x1xf32>
    %56 = vector.broadcast %55 : vector<2x8x1xf32> to vector<2x8x8xf32>
    %57 = arith.mulf %52, %56 : vector<2x8x8xf32>
    %58 = arith.truncf %57 : vector<2x8x8xf32> to vector<2x8x8xbf16>
    "tpu.trace_start"() <{level = 10 : i32, message = "bqk,bkd->bqd"}> : () -> ()
    %cst_23 = arith.constant dense<0.000000e+00> : vector<2x8x4xf32>
    %59 = tpu.matmul %58, %44, %cst_23 {dimension_numbers = #tpu.dot_dimension_numbers<[2], [1], [1], [2], [0, 0, 0, 1, 1, 2], [0], [0]>} : vector<2x8x8xbf16>, vector<2x8x4xbf16>, vector<2x8x4xf32> -> vector<2x8x4xf32>
    "tpu.trace_stop"() : () -> ()
    %60 = vector.extract_strided_slice %38 {offsets = [0, 0, 4], sizes = [2, 8, 4], strides = [1, 1, 1]} : vector<2x8x96xf32> to vector<2x8x4xf32>
    %61 = arith.truncf %60 : vector<2x8x4xf32> to vector<2x8x4xbf16>
    %62 = vector.extract_strided_slice %38 {offsets = [0, 0, 36], sizes = [2, 8, 4], strides = [1, 1, 1]} : vector<2x8x96xf32> to vector<2x8x4xf32>
    %63 = arith.truncf %62 : vector<2x8x4xf32> to vector<2x8x4xbf16>
    %64 = vector.extract_strided_slice %38 {offsets = [0, 0, 68], sizes = [2, 8, 4], strides = [1, 1, 1]} : vector<2x8x96xf32> to vector<2x8x4xf32>
    %65 = arith.truncf %64 : vector<2x8x4xf32> to vector<2x8x4xbf16>
    "tpu.trace_start"() <{level = 10 : i32, message = "bqd,bkd->bqk"}> : () -> ()
    %cst_24 = arith.constant dense<0.000000e+00> : vector<2x8x8xf32>
    %66 = tpu.matmul %61, %63, %cst_24 {dimension_numbers = #tpu.dot_dimension_numbers<[2], [2], [1], [1], [0, 0, 0, 1, 1, 1], [0], [0]>} : vector<2x8x4xbf16>, vector<2x8x4xbf16>, vector<2x8x8xf32> -> vector<2x8x8xf32>
    "tpu.trace_stop"() : () -> ()
    %cst_25 = arith.constant 5.000000e-01 : f32
    %67 = vector.broadcast %cst_25 : f32 to vector<2x8x8xf32>
    %68 = arith.mulf %66, %67 : vector<2x8x8xf32>
    %cst_26 = arith.constant dense<0xFF800000> : vector<2x8xf32>
    %69 = vector.multi_reduction <maximumf>, %68, %cst_26 [2] : vector<2x8x8xf32> to vector<2x8xf32>
    %70 = vector.shape_cast %69 : vector<2x8xf32> to vector<2x8x1xf32>
    %71 = vector.broadcast %70 : vector<2x8x1xf32> to vector<2x8x8xf32>
    %72 = arith.subf %68, %71 : vector<2x8x8xf32>
    %73 = math.exp %72 : vector<2x8x8xf32>
    %cst_27 = arith.constant dense<0.000000e+00> : vector<2x8xf32>
    %74 = vector.multi_reduction <add>, %73, %cst_27 [2] : vector<2x8x8xf32> to vector<2x8xf32>
    %75 = vector.shape_cast %74 : vector<2x8xf32> to vector<2x8x1xf32>
    %76 = tpu.reciprocal %75 {approx = true} : vector<2x8x1xf32> -> vector<2x8x1xf32>
    %77 = vector.broadcast %76 : vector<2x8x1xf32> to vector<2x8x8xf32>
    %78 = arith.mulf %73, %77 : vector<2x8x8xf32>
    %79 = arith.truncf %78 : vector<2x8x8xf32> to vector<2x8x8xbf16>
    "tpu.trace_start"() <{level = 10 : i32, message = "bqk,bkd->bqd"}> : () -> ()
    %cst_28 = arith.constant dense<0.000000e+00> : vector<2x8x4xf32>
    %80 = tpu.matmul %79, %65, %cst_28 {dimension_numbers = #tpu.dot_dimension_numbers<[2], [1], [1], [2], [0, 0, 0, 1, 1, 2], [0], [0]>} : vector<2x8x8xbf16>, vector<2x8x4xbf16>, vector<2x8x4xf32> -> vector<2x8x4xf32>
    "tpu.trace_stop"() : () -> ()
    %81 = vector.extract_strided_slice %38 {offsets = [0, 0, 8], sizes = [2, 8, 4], strides = [1, 1, 1]} : vector<2x8x96xf32> to vector<2x8x4xf32>
    %82 = arith.truncf %81 : vector<2x8x4xf32> to vector<2x8x4xbf16>
    %83 = vector.extract_strided_slice %38 {offsets = [0, 0, 40], sizes = [2, 8, 4], strides = [1, 1, 1]} : vector<2x8x96xf32> to vector<2x8x4xf32>
    %84 = arith.truncf %83 : vector<2x8x4xf32> to vector<2x8x4xbf16>
    %85 = vector.extract_strided_slice %38 {offsets = [0, 0, 72], sizes = [2, 8, 4], strides = [1, 1, 1]} : vector<2x8x96xf32> to vector<2x8x4xf32>
    %86 = arith.truncf %85 : vector<2x8x4xf32> to vector<2x8x4xbf16>
    "tpu.trace_start"() <{level = 10 : i32, message = "bqd,bkd->bqk"}> : () -> ()
    %cst_29 = arith.constant dense<0.000000e+00> : vector<2x8x8xf32>
    %87 = tpu.matmul %82, %84, %cst_29 {dimension_numbers = #tpu.dot_dimension_numbers<[2], [2], [1], [1], [0, 0, 0, 1, 1, 1], [0], [0]>} : vector<2x8x4xbf16>, vector<2x8x4xbf16>, vector<2x8x8xf32> -> vector<2x8x8xf32>
    "tpu.trace_stop"() : () -> ()
    %cst_30 = arith.constant 5.000000e-01 : f32
    %88 = vector.broadcast %cst_30 : f32 to vector<2x8x8xf32>
    %89 = arith.mulf %87, %88 : vector<2x8x8xf32>
    %cst_31 = arith.constant dense<0xFF800000> : vector<2x8xf32>
    %90 = vector.multi_reduction <maximumf>, %89, %cst_31 [2] : vector<2x8x8xf32> to vector<2x8xf32>
    %91 = vector.shape_cast %90 : vector<2x8xf32> to vector<2x8x1xf32>
    %92 = vector.broadcast %91 : vector<2x8x1xf32> to vector<2x8x8xf32>
    %93 = arith.subf %89, %92 : vector<2x8x8xf32>
    %94 = math.exp %93 : vector<2x8x8xf32>
    %cst_32 = arith.constant dense<0.000000e+00> : vector<2x8xf32>
    %95 = vector.multi_reduction <add>, %94, %cst_32 [2] : vector<2x8x8xf32> to vector<2x8xf32>
    %96 = vector.shape_cast %95 : vector<2x8xf32> to vector<2x8x1xf32>
    %97 = tpu.reciprocal %96 {approx = true} : vector<2x8x1xf32> -> vector<2x8x1xf32>
    %98 = vector.broadcast %97 : vector<2x8x1xf32> to vector<2x8x8xf32>
    %99 = arith.mulf %94, %98 : vector<2x8x8xf32>
    %100 = arith.truncf %99 : vector<2x8x8xf32> to vector<2x8x8xbf16>
    "tpu.trace_start"() <{level = 10 : i32, message = "bqk,bkd->bqd"}> : () -> ()
    %cst_33 = arith.constant dense<0.000000e+00> : vector<2x8x4xf32>
    %101 = tpu.matmul %100, %86, %cst_33 {dimension_numbers = #tpu.dot_dimension_numbers<[2], [1], [1], [2], [0, 0, 0, 1, 1, 2], [0], [0]>} : vector<2x8x8xbf16>, vector<2x8x4xbf16>, vector<2x8x4xf32> -> vector<2x8x4xf32>
    "tpu.trace_stop"() : () -> ()
    %102 = vector.extract_strided_slice %38 {offsets = [0, 0, 12], sizes = [2, 8, 4], strides = [1, 1, 1]} : vector<2x8x96xf32> to vector<2x8x4xf32>
    %103 = arith.truncf %102 : vector<2x8x4xf32> to vector<2x8x4xbf16>
    %104 = vector.extract_strided_slice %38 {offsets = [0, 0, 44], sizes = [2, 8, 4], strides = [1, 1, 1]} : vector<2x8x96xf32> to vector<2x8x4xf32>
    %105 = arith.truncf %104 : vector<2x8x4xf32> to vector<2x8x4xbf16>
    %106 = vector.extract_strided_slice %38 {offsets = [0, 0, 76], sizes = [2, 8, 4], strides = [1, 1, 1]} : vector<2x8x96xf32> to vector<2x8x4xf32>
    %107 = arith.truncf %106 : vector<2x8x4xf32> to vector<2x8x4xbf16>
    "tpu.trace_start"() <{level = 10 : i32, message = "bqd,bkd->bqk"}> : () -> ()
    %cst_34 = arith.constant dense<0.000000e+00> : vector<2x8x8xf32>
    %108 = tpu.matmul %103, %105, %cst_34 {dimension_numbers = #tpu.dot_dimension_numbers<[2], [2], [1], [1], [0, 0, 0, 1, 1, 1], [0], [0]>} : vector<2x8x4xbf16>, vector<2x8x4xbf16>, vector<2x8x8xf32> -> vector<2x8x8xf32>
    "tpu.trace_stop"() : () -> ()
    %cst_35 = arith.constant 5.000000e-01 : f32
    %109 = vector.broadcast %cst_35 : f32 to vector<2x8x8xf32>
    %110 = arith.mulf %108, %109 : vector<2x8x8xf32>
    %cst_36 = arith.constant dense<0xFF800000> : vector<2x8xf32>
    %111 = vector.multi_reduction <maximumf>, %110, %cst_36 [2] : vector<2x8x8xf32> to vector<2x8xf32>
    %112 = vector.shape_cast %111 : vector<2x8xf32> to vector<2x8x1xf32>
    %113 = vector.broadcast %112 : vector<2x8x1xf32> to vector<2x8x8xf32>
    %114 = arith.subf %110, %113 : vector<2x8x8xf32>
    %115 = math.exp %114 : vector<2x8x8xf32>
    %cst_37 = arith.constant dense<0.000000e+00> : vector<2x8xf32>
    %116 = vector.multi_reduction <add>, %115, %cst_37 [2] : vector<2x8x8xf32> to vector<2x8xf32>
    %117 = vector.shape_cast %116 : vector<2x8xf32> to vector<2x8x1xf32>
    %118 = tpu.reciprocal %117 {approx = true} : vector<2x8x1xf32> -> vector<2x8x1xf32>
    %119 = vector.broadcast %118 : vector<2x8x1xf32> to vector<2x8x8xf32>
    %120 = arith.mulf %115, %119 : vector<2x8x8xf32>
    %121 = arith.truncf %120 : vector<2x8x8xf32> to vector<2x8x8xbf16>
    "tpu.trace_start"() <{level = 10 : i32, message = "bqk,bkd->bqd"}> : () -> ()
    %cst_38 = arith.constant dense<0.000000e+00> : vector<2x8x4xf32>
    %122 = tpu.matmul %121, %107, %cst_38 {dimension_numbers = #tpu.dot_dimension_numbers<[2], [1], [1], [2], [0, 0, 0, 1, 1, 2], [0], [0]>} : vector<2x8x8xbf16>, vector<2x8x4xbf16>, vector<2x8x4xf32> -> vector<2x8x4xf32>
    "tpu.trace_stop"() : () -> ()
    %123 = vector.extract_strided_slice %38 {offsets = [0, 0, 16], sizes = [2, 8, 4], strides = [1, 1, 1]} : vector<2x8x96xf32> to vector<2x8x4xf32>
    %124 = arith.truncf %123 : vector<2x8x4xf32> to vector<2x8x4xbf16>
    %125 = vector.extract_strided_slice %38 {offsets = [0, 0, 48], sizes = [2, 8, 4], strides = [1, 1, 1]} : vector<2x8x96xf32> to vector<2x8x4xf32>
    %126 = arith.truncf %125 : vector<2x8x4xf32> to vector<2x8x4xbf16>
    %127 = vector.extract_strided_slice %38 {offsets = [0, 0, 80], sizes = [2, 8, 4], strides = [1, 1, 1]} : vector<2x8x96xf32> to vector<2x8x4xf32>
    %128 = arith.truncf %127 : vector<2x8x4xf32> to vector<2x8x4xbf16>
    "tpu.trace_start"() <{level = 10 : i32, message = "bqd,bkd->bqk"}> : () -> ()
    %cst_39 = arith.constant dense<0.000000e+00> : vector<2x8x8xf32>
    %129 = tpu.matmul %124, %126, %cst_39 {dimension_numbers = #tpu.dot_dimension_numbers<[2], [2], [1], [1], [0, 0, 0, 1, 1, 1], [0], [0]>} : vector<2x8x4xbf16>, vector<2x8x4xbf16>, vector<2x8x8xf32> -> vector<2x8x8xf32>
    "tpu.trace_stop"() : () -> ()
    %cst_40 = arith.constant 5.000000e-01 : f32
    %130 = vector.broadcast %cst_40 : f32 to vector<2x8x8xf32>
    %131 = arith.mulf %129, %130 : vector<2x8x8xf32>
    %cst_41 = arith.constant dense<0xFF800000> : vector<2x8xf32>
    %132 = vector.multi_reduction <maximumf>, %131, %cst_41 [2] : vector<2x8x8xf32> to vector<2x8xf32>
    %133 = vector.shape_cast %132 : vector<2x8xf32> to vector<2x8x1xf32>
    %134 = vector.broadcast %133 : vector<2x8x1xf32> to vector<2x8x8xf32>
    %135 = arith.subf %131, %134 : vector<2x8x8xf32>
    %136 = math.exp %135 : vector<2x8x8xf32>
    %cst_42 = arith.constant dense<0.000000e+00> : vector<2x8xf32>
    %137 = vector.multi_reduction <add>, %136, %cst_42 [2] : vector<2x8x8xf32> to vector<2x8xf32>
    %138 = vector.shape_cast %137 : vector<2x8xf32> to vector<2x8x1xf32>
    %139 = tpu.reciprocal %138 {approx = true} : vector<2x8x1xf32> -> vector<2x8x1xf32>
    %140 = vector.broadcast %139 : vector<2x8x1xf32> to vector<2x8x8xf32>
    %141 = arith.mulf %136, %140 : vector<2x8x8xf32>
    %142 = arith.truncf %141 : vector<2x8x8xf32> to vector<2x8x8xbf16>
    "tpu.trace_start"() <{level = 10 : i32, message = "bqk,bkd->bqd"}> : () -> ()
    %cst_43 = arith.constant dense<0.000000e+00> : vector<2x8x4xf32>
    %143 = tpu.matmul %142, %128, %cst_43 {dimension_numbers = #tpu.dot_dimension_numbers<[2], [1], [1], [2], [0, 0, 0, 1, 1, 2], [0], [0]>} : vector<2x8x8xbf16>, vector<2x8x4xbf16>, vector<2x8x4xf32> -> vector<2x8x4xf32>
    "tpu.trace_stop"() : () -> ()
    %144 = vector.extract_strided_slice %38 {offsets = [0, 0, 20], sizes = [2, 8, 4], strides = [1, 1, 1]} : vector<2x8x96xf32> to vector<2x8x4xf32>
    %145 = arith.truncf %144 : vector<2x8x4xf32> to vector<2x8x4xbf16>
    %146 = vector.extract_strided_slice %38 {offsets = [0, 0, 52], sizes = [2, 8, 4], strides = [1, 1, 1]} : vector<2x8x96xf32> to vector<2x8x4xf32>
    %147 = arith.truncf %146 : vector<2x8x4xf32> to vector<2x8x4xbf16>
    %148 = vector.extract_strided_slice %38 {offsets = [0, 0, 84], sizes = [2, 8, 4], strides = [1, 1, 1]} : vector<2x8x96xf32> to vector<2x8x4xf32>
    %149 = arith.truncf %148 : vector<2x8x4xf32> to vector<2x8x4xbf16>
    "tpu.trace_start"() <{level = 10 : i32, message = "bqd,bkd->bqk"}> : () -> ()
    %cst_44 = arith.constant dense<0.000000e+00> : vector<2x8x8xf32>
    %150 = tpu.matmul %145, %147, %cst_44 {dimension_numbers = #tpu.dot_dimension_numbers<[2], [2], [1], [1], [0, 0, 0, 1, 1, 1], [0], [0]>} : vector<2x8x4xbf16>, vector<2x8x4xbf16>, vector<2x8x8xf32> -> vector<2x8x8xf32>
    "tpu.trace_stop"() : () -> ()
    %cst_45 = arith.constant 5.000000e-01 : f32
    %151 = vector.broadcast %cst_45 : f32 to vector<2x8x8xf32>
    %152 = arith.mulf %150, %151 : vector<2x8x8xf32>
    %cst_46 = arith.constant dense<0xFF800000> : vector<2x8xf32>
    %153 = vector.multi_reduction <maximumf>, %152, %cst_46 [2] : vector<2x8x8xf32> to vector<2x8xf32>
    %154 = vector.shape_cast %153 : vector<2x8xf32> to vector<2x8x1xf32>
    %155 = vector.broadcast %154 : vector<2x8x1xf32> to vector<2x8x8xf32>
    %156 = arith.subf %152, %155 : vector<2x8x8xf32>
    %157 = math.exp %156 : vector<2x8x8xf32>
    %cst_47 = arith.constant dense<0.000000e+00> : vector<2x8xf32>
    %158 = vector.multi_reduction <add>, %157, %cst_47 [2] : vector<2x8x8xf32> to vector<2x8xf32>
    %159 = vector.shape_cast %158 : vector<2x8xf32> to vector<2x8x1xf32>
    %160 = tpu.reciprocal %159 {approx = true} : vector<2x8x1xf32> -> vector<2x8x1xf32>
    %161 = vector.broadcast %160 : vector<2x8x1xf32> to vector<2x8x8xf32>
    %162 = arith.mulf %157, %161 : vector<2x8x8xf32>
    %163 = arith.truncf %162 : vector<2x8x8xf32> to vector<2x8x8xbf16>
    "tpu.trace_start"() <{level = 10 : i32, message = "bqk,bkd->bqd"}> : () -> ()
    %cst_48 = arith.constant dense<0.000000e+00> : vector<2x8x4xf32>
    %164 = tpu.matmul %163, %149, %cst_48 {dimension_numbers = #tpu.dot_dimension_numbers<[2], [1], [1], [2], [0, 0, 0, 1, 1, 2], [0], [0]>} : vector<2x8x8xbf16>, vector<2x8x4xbf16>, vector<2x8x4xf32> -> vector<2x8x4xf32>
    "tpu.trace_stop"() : () -> ()
    %165 = vector.extract_strided_slice %38 {offsets = [0, 0, 24], sizes = [2, 8, 4], strides = [1, 1, 1]} : vector<2x8x96xf32> to vector<2x8x4xf32>
    %166 = arith.truncf %165 : vector<2x8x4xf32> to vector<2x8x4xbf16>
    %167 = vector.extract_strided_slice %38 {offsets = [0, 0, 56], sizes = [2, 8, 4], strides = [1, 1, 1]} : vector<2x8x96xf32> to vector<2x8x4xf32>
    %168 = arith.truncf %167 : vector<2x8x4xf32> to vector<2x8x4xbf16>
    %169 = vector.extract_strided_slice %38 {offsets = [0, 0, 88], sizes = [2, 8, 4], strides = [1, 1, 1]} : vector<2x8x96xf32> to vector<2x8x4xf32>
    %170 = arith.truncf %169 : vector<2x8x4xf32> to vector<2x8x4xbf16>
    "tpu.trace_start"() <{level = 10 : i32, message = "bqd,bkd->bqk"}> : () -> ()
    %cst_49 = arith.constant dense<0.000000e+00> : vector<2x8x8xf32>
    %171 = tpu.matmul %166, %168, %cst_49 {dimension_numbers = #tpu.dot_dimension_numbers<[2], [2], [1], [1], [0, 0, 0, 1, 1, 1], [0], [0]>} : vector<2x8x4xbf16>, vector<2x8x4xbf16>, vector<2x8x8xf32> -> vector<2x8x8xf32>
    "tpu.trace_stop"() : () -> ()
    %cst_50 = arith.constant 5.000000e-01 : f32
    %172 = vector.broadcast %cst_50 : f32 to vector<2x8x8xf32>
    %173 = arith.mulf %171, %172 : vector<2x8x8xf32>
    %cst_51 = arith.constant dense<0xFF800000> : vector<2x8xf32>
    %174 = vector.multi_reduction <maximumf>, %173, %cst_51 [2] : vector<2x8x8xf32> to vector<2x8xf32>
    %175 = vector.shape_cast %174 : vector<2x8xf32> to vector<2x8x1xf32>
    %176 = vector.broadcast %175 : vector<2x8x1xf32> to vector<2x8x8xf32>
    %177 = arith.subf %173, %176 : vector<2x8x8xf32>
    %178 = math.exp %177 : vector<2x8x8xf32>
    %cst_52 = arith.constant dense<0.000000e+00> : vector<2x8xf32>
    %179 = vector.multi_reduction <add>, %178, %cst_52 [2] : vector<2x8x8xf32> to vector<2x8xf32>
    %180 = vector.shape_cast %179 : vector<2x8xf32> to vector<2x8x1xf32>
    %181 = tpu.reciprocal %180 {approx = true} : vector<2x8x1xf32> -> vector<2x8x1xf32>
    %182 = vector.broadcast %181 : vector<2x8x1xf32> to vector<2x8x8xf32>
    %183 = arith.mulf %178, %182 : vector<2x8x8xf32>
    %184 = arith.truncf %183 : vector<2x8x8xf32> to vector<2x8x8xbf16>
    "tpu.trace_start"() <{level = 10 : i32, message = "bqk,bkd->bqd"}> : () -> ()
    %cst_53 = arith.constant dense<0.000000e+00> : vector<2x8x4xf32>
    %185 = tpu.matmul %184, %170, %cst_53 {dimension_numbers = #tpu.dot_dimension_numbers<[2], [1], [1], [2], [0, 0, 0, 1, 1, 2], [0], [0]>} : vector<2x8x8xbf16>, vector<2x8x4xbf16>, vector<2x8x4xf32> -> vector<2x8x4xf32>
    "tpu.trace_stop"() : () -> ()
    %186 = vector.extract_strided_slice %38 {offsets = [0, 0, 28], sizes = [2, 8, 4], strides = [1, 1, 1]} : vector<2x8x96xf32> to vector<2x8x4xf32>
    %187 = arith.truncf %186 : vector<2x8x4xf32> to vector<2x8x4xbf16>
    %188 = vector.extract_strided_slice %38 {offsets = [0, 0, 60], sizes = [2, 8, 4], strides = [1, 1, 1]} : vector<2x8x96xf32> to vector<2x8x4xf32>
    %189 = arith.truncf %188 : vector<2x8x4xf32> to vector<2x8x4xbf16>
    %190 = vector.extract_strided_slice %38 {offsets = [0, 0, 92], sizes = [2, 8, 4], strides = [1, 1, 1]} : vector<2x8x96xf32> to vector<2x8x4xf32>
    %191 = arith.truncf %190 : vector<2x8x4xf32> to vector<2x8x4xbf16>
    "tpu.trace_start"() <{level = 10 : i32, message = "bqd,bkd->bqk"}> : () -> ()
    %cst_54 = arith.constant dense<0.000000e+00> : vector<2x8x8xf32>
    %192 = tpu.matmul %187, %189, %cst_54 {dimension_numbers = #tpu.dot_dimension_numbers<[2], [2], [1], [1], [0, 0, 0, 1, 1, 1], [0], [0]>} : vector<2x8x4xbf16>, vector<2x8x4xbf16>, vector<2x8x8xf32> -> vector<2x8x8xf32>
    "tpu.trace_stop"() : () -> ()
    %cst_55 = arith.constant 5.000000e-01 : f32
    %193 = vector.broadcast %cst_55 : f32 to vector<2x8x8xf32>
    %194 = arith.mulf %192, %193 : vector<2x8x8xf32>
    %cst_56 = arith.constant dense<0xFF800000> : vector<2x8xf32>
    %195 = vector.multi_reduction <maximumf>, %194, %cst_56 [2] : vector<2x8x8xf32> to vector<2x8xf32>
    %196 = vector.shape_cast %195 : vector<2x8xf32> to vector<2x8x1xf32>
    %197 = vector.broadcast %196 : vector<2x8x1xf32> to vector<2x8x8xf32>
    %198 = arith.subf %194, %197 : vector<2x8x8xf32>
    %199 = math.exp %198 : vector<2x8x8xf32>
    %cst_57 = arith.constant dense<0.000000e+00> : vector<2x8xf32>
    %200 = vector.multi_reduction <add>, %199, %cst_57 [2] : vector<2x8x8xf32> to vector<2x8xf32>
    %201 = vector.shape_cast %200 : vector<2x8xf32> to vector<2x8x1xf32>
    %202 = tpu.reciprocal %201 {approx = true} : vector<2x8x1xf32> -> vector<2x8x1xf32>
    %203 = vector.broadcast %202 : vector<2x8x1xf32> to vector<2x8x8xf32>
    %204 = arith.mulf %199, %203 : vector<2x8x8xf32>
    %205 = arith.truncf %204 : vector<2x8x8xf32> to vector<2x8x8xbf16>
    "tpu.trace_start"() <{level = 10 : i32, message = "bqk,bkd->bqd"}> : () -> ()
    %cst_58 = arith.constant dense<0.000000e+00> : vector<2x8x4xf32>
    %206 = tpu.matmul %205, %191, %cst_58 {dimension_numbers = #tpu.dot_dimension_numbers<[2], [1], [1], [2], [0, 0, 0, 1, 1, 2], [0], [0]>} : vector<2x8x8xbf16>, vector<2x8x4xbf16>, vector<2x8x4xf32> -> vector<2x8x4xf32>
    "tpu.trace_stop"() : () -> ()
    %207 = tpu.concatenate %59, %80, %101, %122, %143, %164, %185, %206 in 2 : vector<2x8x4xf32>, vector<2x8x4xf32>, vector<2x8x4xf32>, vector<2x8x4xf32>, vector<2x8x4xf32>, vector<2x8x4xf32>, vector<2x8x4xf32>, vector<2x8x4xf32> -> vector<2x8x32xf32>
    %208 = vector.shape_cast %207 : vector<2x8x32xf32> to vector<16x32xf32>
    %209 = arith.truncf %208 : vector<16x32xf32> to vector<16x32xbf16>
    %c0_59 = arith.constant 0 : index
    %c0_60 = arith.constant 0 : index
    %c0_61 = arith.constant 0 : index
    %210 = vector.load %arg12[%c0_59, %c0_60, %c0_61] : memref<1x32x32xbf16, #tpu.memory_space<vmem>>, vector<1x32x32xbf16>
    %211 = vector.shape_cast %210 : vector<1x32x32xbf16> to vector<32x32xbf16>
    %cst_62 = arith.constant dense<0.000000e+00> : vector<16x32xf32>
    %212 = tpu.matmul %209, %211, %cst_62 {dimension_numbers = #tpu.dot_dimension_numbers<[1], [0], [0], [1], [0, 0, 1, 1], [], []>} : vector<16x32xbf16>, vector<32x32xbf16>, vector<16x32xf32> -> vector<16x32xf32>
    %c0_63 = arith.constant 0 : index
    %c0_64 = arith.constant 0 : index
    %c0_65 = arith.constant 0 : index
    %213 = vector.load %arg13[%c0_63, %c0_64, %c0_65] : memref<1x1x32xf32, #tpu.memory_space<vmem>>, vector<1x1x32xf32>
    %214 = vector.shape_cast %213 : vector<1x1x32xf32> to vector<1x32xf32>
    %215 = vector.broadcast %214 : vector<1x32xf32> to vector<16x32xf32>
    %216 = arith.addf %212, %215 : vector<16x32xf32>
    %217 = vector.shape_cast %29 : vector<16x32xf32> to vector<2x8x32xf32>
    %218 = arith.truncf %217 : vector<2x8x32xf32> to vector<2x8x32xbf16>
    %c0_66 = arith.constant 0 : index
    %c0_67 = arith.constant 0 : index
    %c0_68 = arith.constant 0 : index
    %219 = vector.load %arg21[%c0_66, %c0_67, %c0_68] : memref<2x8x8xbf16, #tpu.memory_space<vmem>>, vector<2x8x8xbf16>
    "tpu.trace_start"() <{level = 10 : i32, message = "bqk,bkd->bqd"}> : () -> ()
    %cst_69 = arith.constant dense<0.000000e+00> : vector<2x8x32xf32>
    %220 = tpu.matmul %219, %218, %cst_69 {dimension_numbers = #tpu.dot_dimension_numbers<[2], [1], [1], [2], [0, 0, 0, 1, 1, 2], [0], [0]>} : vector<2x8x8xbf16>, vector<2x8x32xbf16>, vector<2x8x32xf32> -> vector<2x8x32xf32>
    "tpu.trace_stop"() : () -> ()
    %221 = vector.shape_cast %220 : vector<2x8x32xf32> to vector<16x32xf32>
    %222 = arith.index_cast %arg1 : i32 to index
    %223 = memref.load %arg7[%222] : memref<2xf32, #tpu.memory_space<smem>>
    %224 = vector.broadcast %223 : f32 to vector<16x32xf32>
    %225 = arith.mulf %224, %216 : vector<16x32xf32>
    %226 = arith.addf %3, %225 : vector<16x32xf32>
    %cst_70 = arith.constant 1.000000e+00 : f32
    %227 = arith.subf %cst_70, %223 : f32
    %228 = vector.broadcast %227 : f32 to vector<16x32xf32>
    %229 = arith.mulf %228, %221 : vector<16x32xf32>
    %230 = arith.addf %226, %229 : vector<16x32xf32>
    %cst_71 = arith.constant dense<0.000000e+00> : vector<16xf32>
    %231 = vector.multi_reduction <add>, %230, %cst_71 [1] : vector<16x32xf32> to vector<16xf32>
    %232 = vector.shape_cast %231 : vector<16xf32> to vector<16x1xf32>
    %cst_72 = arith.constant 3.200000e+01 : f32
    %233 = vector.broadcast %cst_72 : f32 to vector<16x1xf32>
    %234 = arith.divf %232, %233 : vector<16x1xf32>
    %235 = vector.broadcast %234 : vector<16x1xf32> to vector<16x32xf32>
    %236 = arith.subf %230, %235 : vector<16x32xf32>
    %237 = arith.mulf %236, %236 : vector<16x32xf32>
    %cst_73 = arith.constant dense<0.000000e+00> : vector<16xf32>
    %238 = vector.multi_reduction <add>, %237, %cst_73 [1] : vector<16x32xf32> to vector<16xf32>
    %239 = vector.shape_cast %238 : vector<16xf32> to vector<16x1xf32>
    %cst_74 = arith.constant 3.200000e+01 : f32
    %240 = vector.broadcast %cst_74 : f32 to vector<16x1xf32>
    %241 = arith.divf %239, %240 : vector<16x1xf32>
    %242 = vector.broadcast %234 : vector<16x1xf32> to vector<16x32xf32>
    %243 = arith.subf %230, %242 : vector<16x32xf32>
    %cst_75 = arith.constant 9.99999974E-6 : f32
    %244 = vector.broadcast %cst_75 : f32 to vector<16x1xf32>
    %245 = arith.addf %241, %244 : vector<16x1xf32>
    %246 = math.rsqrt %245 : vector<16x1xf32>
    %247 = vector.broadcast %246 : vector<16x1xf32> to vector<16x32xf32>
    %248 = arith.mulf %243, %247 : vector<16x32xf32>
    %c0_76 = arith.constant 0 : index
    %c0_77 = arith.constant 0 : index
    %c0_78 = arith.constant 0 : index
    %249 = vector.load %arg14[%c0_76, %c0_77, %c0_78] : memref<1x1x32xf32, #tpu.memory_space<vmem>>, vector<1x1x32xf32>
    %250 = vector.shape_cast %249 : vector<1x1x32xf32> to vector<1x32xf32>
    %251 = vector.broadcast %250 : vector<1x32xf32> to vector<16x32xf32>
    %252 = arith.mulf %248, %251 : vector<16x32xf32>
    %c0_79 = arith.constant 0 : index
    %c0_80 = arith.constant 0 : index
    %c0_81 = arith.constant 0 : index
    %253 = vector.load %arg15[%c0_79, %c0_80, %c0_81] : memref<1x1x32xf32, #tpu.memory_space<vmem>>, vector<1x1x32xf32>
    %254 = vector.shape_cast %253 : vector<1x1x32xf32> to vector<1x32xf32>
    %255 = vector.broadcast %254 : vector<1x32xf32> to vector<16x32xf32>
    %256 = arith.addf %252, %255 : vector<16x32xf32>
    %257 = arith.truncf %256 : vector<16x32xf32> to vector<16x32xbf16>
    %c0_82 = arith.constant 0 : index
    %c0_83 = arith.constant 0 : index
    %c0_84 = arith.constant 0 : index
    %258 = vector.load %arg16[%c0_82, %c0_83, %c0_84] : memref<1x32x128xbf16, #tpu.memory_space<vmem>>, vector<1x32x128xbf16>
    %259 = vector.shape_cast %258 : vector<1x32x128xbf16> to vector<32x128xbf16>
    %cst_85 = arith.constant dense<0.000000e+00> : vector<16x128xf32>
    %260 = tpu.matmul %257, %259, %cst_85 {dimension_numbers = #tpu.dot_dimension_numbers<[1], [0], [0], [1], [0, 0, 1, 1], [], []>} : vector<16x32xbf16>, vector<32x128xbf16>, vector<16x128xf32> -> vector<16x128xf32>
    %c0_86 = arith.constant 0 : index
    %c0_87 = arith.constant 0 : index
    %c0_88 = arith.constant 0 : index
    %261 = vector.load %arg17[%c0_86, %c0_87, %c0_88] : memref<1x1x128xf32, #tpu.memory_space<vmem>>, vector<1x1x128xf32>
    %262 = vector.shape_cast %261 : vector<1x1x128xf32> to vector<1x128xf32>
    %263 = vector.broadcast %262 : vector<1x128xf32> to vector<16x128xf32>
    %264 = arith.addf %260, %263 : vector<16x128xf32>
    %cst_89 = arith.constant 5.000000e-01 : f32
    %265 = vector.broadcast %cst_89 : f32 to vector<16x128xf32>
    %266 = arith.mulf %265, %264 : vector<16x128xf32>
    %cst_90 = arith.constant 0.707106769 : f32
    %267 = vector.broadcast %cst_90 : f32 to vector<16x128xf32>
    %268 = arith.mulf %264, %267 : vector<16x128xf32>
    %269 = math.erf %268 : vector<16x128xf32>
    %cst_91 = arith.constant 1.000000e+00 : f32
    %270 = vector.broadcast %cst_91 : f32 to vector<16x128xf32>
    %271 = arith.addf %270, %269 : vector<16x128xf32>
    %272 = arith.mulf %266, %271 : vector<16x128xf32>
    %273 = arith.truncf %272 : vector<16x128xf32> to vector<16x128xbf16>
    %c0_92 = arith.constant 0 : index
    %c0_93 = arith.constant 0 : index
    %c0_94 = arith.constant 0 : index
    %274 = vector.load %arg18[%c0_92, %c0_93, %c0_94] : memref<1x128x32xbf16, #tpu.memory_space<vmem>>, vector<1x128x32xbf16>
    %275 = vector.shape_cast %274 : vector<1x128x32xbf16> to vector<128x32xbf16>
    %cst_95 = arith.constant dense<0.000000e+00> : vector<16x32xf32>
    %276 = tpu.matmul %273, %275, %cst_95 {dimension_numbers = #tpu.dot_dimension_numbers<[1], [0], [0], [1], [0, 0, 1, 1], [], []>} : vector<16x128xbf16>, vector<128x32xbf16>, vector<16x32xf32> -> vector<16x32xf32>
    %c0_96 = arith.constant 0 : index
    %c0_97 = arith.constant 0 : index
    %c0_98 = arith.constant 0 : index
    %277 = vector.load %arg19[%c0_96, %c0_97, %c0_98] : memref<1x1x32xf32, #tpu.memory_space<vmem>>, vector<1x1x32xf32>
    %278 = vector.shape_cast %277 : vector<1x1x32xf32> to vector<1x32xf32>
    %279 = vector.broadcast %278 : vector<1x32xf32> to vector<16x32xf32>
    %280 = arith.addf %276, %279 : vector<16x32xf32>
    %281 = arith.addf %230, %280 : vector<16x32xf32>
    %c0_99 = arith.constant 0 : index
    %c0_100 = arith.constant 0 : index
    %282 = vector.load %arg20[%c0_99, %c0_100] : memref<16x32xf32, #tpu.memory_space<vmem>>, vector<16x32xf32>
    tpu.vector_store %arg20[%c0_99, %c0_100], %281 {strides = array<i32>} : memref<16x32xf32, #tpu.memory_space<vmem>>, vector<16x32xf32>,
    return
  }
  func.func @transform_0(%arg0: i32, %arg1: i32) -> (i32, i32) {
    %c0_i32 = arith.constant 0 : i32
    %c0_i32_0 = arith.constant 0 : i32
    return %arg0, %c0_i32 : i32, i32
  }
  func.func @transform_1(%arg0: i32, %arg1: i32) -> (i32, i32, i32) {
    %c0_i32 = arith.constant 0 : i32
    %c0_i32_0 = arith.constant 0 : i32
    %c0_i32_1 = arith.constant 0 : i32
    return %arg0, %c0_i32, %c0_i32_0 : i32, i32, i32
  }
  func.func @transform_2(%arg0: i32, %arg1: i32) -> (i32, i32, i32) {
    %c0_i32 = arith.constant 0 : i32
    %c0_i32_0 = arith.constant 0 : i32
    %c0_i32_1 = arith.constant 0 : i32
    return %arg0, %c0_i32, %c0_i32_0 : i32, i32, i32
  }
  func.func @transform_3(%arg0: i32, %arg1: i32) -> (i32, i32, i32) {
    %c0_i32 = arith.constant 0 : i32
    %c0_i32_0 = arith.constant 0 : i32
    %c0_i32_1 = arith.constant 0 : i32
    return %arg0, %c0_i32, %c0_i32_0 : i32, i32, i32
  }
  func.func @transform_4(%arg0: i32, %arg1: i32) -> (i32, i32, i32) {
    %c0_i32 = arith.constant 0 : i32
    %c0_i32_0 = arith.constant 0 : i32
    %c0_i32_1 = arith.constant 0 : i32
    return %arg0, %c0_i32, %c0_i32_0 : i32, i32, i32
  }
  func.func @transform_5(%arg0: i32, %arg1: i32) -> i32 {
    %c0_i32 = arith.constant 0 : i32
    %c0_i32_0 = arith.constant 0 : i32
    return %c0_i32 : i32
  }
  func.func @transform_6(%arg0: i32, %arg1: i32) -> (i32, i32, i32) {
    %c0_i32 = arith.constant 0 : i32
    %c0_i32_0 = arith.constant 0 : i32
    %c0_i32_1 = arith.constant 0 : i32
    return %arg1, %c0_i32, %c0_i32_0 : i32, i32, i32
  }
  func.func @transform_7(%arg0: i32, %arg1: i32) -> (i32, i32, i32) {
    %c0_i32 = arith.constant 0 : i32
    %c0_i32_0 = arith.constant 0 : i32
    %c0_i32_1 = arith.constant 0 : i32
    return %arg1, %c0_i32, %c0_i32_0 : i32, i32, i32
  }
  func.func @transform_8(%arg0: i32, %arg1: i32) -> (i32, i32, i32) {
    %c0_i32 = arith.constant 0 : i32
    %c0_i32_0 = arith.constant 0 : i32
    %c0_i32_1 = arith.constant 0 : i32
    return %arg1, %c0_i32, %c0_i32_0 : i32, i32, i32
  }
  func.func @transform_9(%arg0: i32, %arg1: i32) -> (i32, i32, i32) {
    %c0_i32 = arith.constant 0 : i32
    %c0_i32_0 = arith.constant 0 : i32
    %c0_i32_1 = arith.constant 0 : i32
    return %arg1, %c0_i32, %c0_i32_0 : i32, i32, i32
  }
  func.func @transform_10(%arg0: i32, %arg1: i32) -> (i32, i32, i32) {
    %c0_i32 = arith.constant 0 : i32
    %c0_i32_0 = arith.constant 0 : i32
    %c0_i32_1 = arith.constant 0 : i32
    return %arg1, %c0_i32, %c0_i32_0 : i32, i32, i32
  }
  func.func @transform_11(%arg0: i32, %arg1: i32) -> (i32, i32, i32) {
    %c0_i32 = arith.constant 0 : i32
    %c0_i32_0 = arith.constant 0 : i32
    %c0_i32_1 = arith.constant 0 : i32
    return %arg1, %c0_i32, %c0_i32_0 : i32, i32, i32
  }
  func.func @transform_12(%arg0: i32, %arg1: i32) -> (i32, i32, i32) {
    %c0_i32 = arith.constant 0 : i32
    %c0_i32_0 = arith.constant 0 : i32
    %c0_i32_1 = arith.constant 0 : i32
    return %arg1, %c0_i32, %c0_i32_0 : i32, i32, i32
  }
  func.func @transform_13(%arg0: i32, %arg1: i32) -> (i32, i32, i32) {
    %c0_i32 = arith.constant 0 : i32
    %c0_i32_0 = arith.constant 0 : i32
    %c0_i32_1 = arith.constant 0 : i32
    return %arg1, %c0_i32, %c0_i32_0 : i32, i32, i32
  }
  func.func @transform_14(%arg0: i32, %arg1: i32) -> (i32, i32, i32) {
    %c0_i32 = arith.constant 0 : i32
    %c0_i32_0 = arith.constant 0 : i32
    %c0_i32_1 = arith.constant 0 : i32
    return %arg1, %c0_i32, %c0_i32_0 : i32, i32, i32
  }
  func.func @transform_15(%arg0: i32, %arg1: i32) -> (i32, i32, i32) {
    %c0_i32 = arith.constant 0 : i32
    %c0_i32_0 = arith.constant 0 : i32
    %c0_i32_1 = arith.constant 0 : i32
    return %arg1, %c0_i32, %c0_i32_0 : i32, i32, i32
  }
  func.func @transform_16(%arg0: i32, %arg1: i32) -> (i32, i32, i32) {
    %c0_i32 = arith.constant 0 : i32
    %c0_i32_0 = arith.constant 0 : i32
    %c0_i32_1 = arith.constant 0 : i32
    return %arg1, %c0_i32, %c0_i32_0 : i32, i32, i32
  }
  func.func @transform_17(%arg0: i32, %arg1: i32) -> (i32, i32, i32) {
    %c0_i32 = arith.constant 0 : i32
    %c0_i32_0 = arith.constant 0 : i32
    %c0_i32_1 = arith.constant 0 : i32
    return %arg1, %c0_i32, %c0_i32_0 : i32, i32, i32
  }
  func.func @transform_18(%arg0: i32, %arg1: i32) -> (i32, i32) {
    %c0_i32 = arith.constant 0 : i32
    %c0_i32_0 = arith.constant 0 : i32
    return %arg0, %c0_i32 : i32, i32
  }
}

</mosaic_0001>

<llo_original>
// kernel: tpu_custom_call.1
$region0: #{tpu_custom_call.1}
  #allocation0 [shape = 'u32[]', space=smem, size = 0x4, offset = 0x4, fixed_abs, tag = 'smem constant byte address 0x4 - core index']
  #allocation1 [shape = 'u32[144,128]{1,0:T(1,128)}', space=vmem, size = 0x12000, scoped, tag = 'internal scratch']
  #allocation2 [shape = 'bf16[2,8,8]{2,1,0:T(8,128)(2,1)}', space=vmem, size = 0x1000, scoped, tag = 'scratch operand']
  %s0 = inlined_call_operand.hbm [shape: f32[16,32], index: 0, kind: input, shape index: {}, may-alias: {0,18}]
  %s1 = inlined_call_operand.vmem [shape: f32[2,8,1], index: 1, kind: input, shape index: {}]
  %s2 = inlined_call_operand.vmem [shape: f32[2,1,8], index: 2, kind: input, shape index: {}]
  %s3 = inlined_call_operand.vmem [shape: f32[2,8,1], index: 3, kind: input, shape index: {}]
  %s4 = inlined_call_operand.vmem [shape: f32[2,1,8], index: 4, kind: input, shape index: {}]
  %s5 = inlined_call_operand.vmem [shape: f32[2], index: 5, kind: input, shape index: {}]
  %s6 = inlined_call_operand.vmem [shape: f32[2,1,32], index: 6, kind: input, shape index: {}]
  %s7 = inlined_call_operand.vmem [shape: f32[2,1,32], index: 7, kind: input, shape index: {}]
  %s8 = inlined_call_operand.vmem [shape: bf16[2,32,96], index: 8, kind: input, shape index: {}]
  %s9 = inlined_call_operand.vmem [shape: f32[2,1,96], index: 9, kind: input, shape index: {}]
  %s10 = inlined_call_operand.vmem [shape: bf16[2,32,32], index: 10, kind: input, shape index: {}]
  %s11 = inlined_call_operand.vmem [shape: f32[2,1,32], index: 11, kind: input, shape index: {}]
  %s12 = inlined_call_operand.vmem [shape: f32[2,1,32], index: 12, kind: input, shape index: {}]
  %s13 = inlined_call_operand.vmem [shape: f32[2,1,32], index: 13, kind: input, shape index: {}]
  %s14 = inlined_call_operand.vmem [shape: bf16[2,32,128], index: 14, kind: input, shape index: {}]
  %s15 = inlined_call_operand.vmem [shape: f32[2,1,128], index: 15, kind: input, shape index: {}]
  %s16 = inlined_call_operand.vmem [shape: bf16[2,128,32], index: 16, kind: input, shape index: {}]
  %s17 = inlined_call_operand.vmem [shape: f32[2,1,32], index: 17, kind: input, shape index: {}]
  %s18 = inlined_call_operand.hbm [shape: f32[16,32], index: 18, kind: output, shape index: {}, may-alias: {0,18}]
  %s19 = sld [smem:[#allocation0]]
  $region117: #{tpu_custom_call.1} parent=0
    _
  %s21 = ssub.s32 1, %s19
  %s22 = scalar_select 0, %s21, %s19
  $region1: #{tpu_custom_call.1} parent=0
    #allocation3 [shape = 'u8[8192]{0}', space=vmem, size = 0x2000, scoped, tag = 'input window, operand 0, single buffered']
    #allocation4 [shape = 's32[2]{0}', space=sflag, size = 0x8, scoped, tag = 'scoped memory for tpu_custom_call.1']
    #allocation5 [shape = 's32[2]{0}', space=sflag, size = 0x8, scoped, tag = 'scoped memory for tpu_custom_call.1']
    #allocation6 [shape = 's32[2]{0}', space=sflag, size = 0x8, scoped, tag = 'scoped memory for tpu_custom_call.1']
    #allocation7 [shape = 'u8[512]{0}', space=smem, size = 0x200, scoped, tag = 'input window, operand 5, single buffered']
    #allocation8 [shape = 'u8[8192]{0}', space=vmem, size = 0x2000, scoped, tag = 'output window, operand 0, single buffered']
    %23 = vsyncpa [#allocation4], 0
    %24 = vsyncpa [#allocation6], 0
    %25 = vsyncpa [#allocation5], 0
    loop: start=0, step=1, limit=4
    $region2: #{tpu_custom_call.1} parent=1 // loop_pre_header
      _
    $region3: #{tpu_custom_call.1} parent=1 // loop_header
      %s27 = sphi 0, %s31
      %p28 = scmp.ge.s32.totalorder %s27, 4
      %s34 = sphi 0, %s46
      %s35 = sphi 0, %s42
      %s36 = sphi 0, %s34
      %s37 = sphi 0, %s35
      %s38 = sphi 0, %s36
      %s39 = sphi 0, %s37
      %s49 = sphi 0, %s51
      %s52 = sphi 0, %s49
      %s53 = sphi 0, %s52
      %s69 = sphi 0, %s53
      %s75 = sphi 0, %s77
      %s78 = sphi 0, %s75
      %s79 = sphi 0, %s78
      %s95 = sphi 0, %s79
      %s101 = sphi 0, %s103
      %s104 = sphi 0, %s101
      %s105 = sphi 0, %s104
      %s121 = sphi 0, %s105
      %s127 = sphi 0, %s129
      %s130 = sphi 0, %s127
      %s131 = sphi 0, %s130
      %s147 = sphi 0, %s131
      %s153 = sphi 0, %s155
      %s156 = sphi 0, %s153
      %s157 = sphi 0, %s156
      %s173 = sphi 0, %s157
      %s177 = sphi 0, %s177
      %s179 = sphi 0, %s177
      %s180 = sphi 0, %s179
      %s194 = sphi 0, %s180
      %s200 = sphi 0, %s202
      %s203 = sphi 0, %s200
      %s204 = sphi 0, %s203
      %s220 = sphi 0, %s204
      %s226 = sphi 0, %s228
      %s229 = sphi 0, %s226
      %s230 = sphi 0, %s229
      %s246 = sphi 0, %s230
      %s252 = sphi 0, %s254
      %s255 = sphi 0, %s252
      %s256 = sphi 0, %s255
      %s272 = sphi 0, %s256
      %s278 = sphi 0, %s280
      %s281 = sphi 0, %s278
      %s282 = sphi 0, %s281
      %s298 = sphi 0, %s282
      %s304 = sphi 0, %s306
      %s307 = sphi 0, %s304
      %s308 = sphi 0, %s307
      %s324 = sphi 0, %s308
      %s330 = sphi 0, %s332
      %s333 = sphi 0, %s330
      %s334 = sphi 0, %s333
      %s350 = sphi 0, %s334
      %s356 = sphi 0, %s358
      %s359 = sphi 0, %s356
      %s360 = sphi 0, %s359
      %s376 = sphi 0, %s360
      %s382 = sphi 0, %s384
      %s385 = sphi 0, %s382
      %s386 = sphi 0, %s385
      %s402 = sphi 0, %s386
      %s408 = sphi 0, %s410
      %s411 = sphi 0, %s408
      %s412 = sphi 0, %s411
      %s428 = sphi 0, %s412
      %s434 = sphi 0, %s436
      %s437 = sphi 0, %s434
      %s438 = sphi 0, %s437
      %s454 = sphi 0, %s438
      %s460 = sphi 0, %s462
      %s463 = sphi 0, %s460
      %s464 = sphi 0, %s463
      %s480 = sphi 0, %s464
      %s486 = sphi 0, %s488
      %s489 = sphi 0, %s486
      %s490 = sphi 0, %s489
      %s506 = sphi 0, %s490
      %s512 = sphi 0, %s514
      %s515 = sphi 0, %s512
      %s516 = sphi 0, %s515
      %s532 = sphi 0, %s516
    $region4: #{tpu_custom_call.1} parent=1 // loop_header_branch
      %30 = sbr.rel (%p28) target = $region8
    $region5: #{tpu_custom_call.1} parent=1 // loop_body
      %s32 = ssub.s32 %s27, 1
      %s33 = ssub.s32 %s27, 2
      %s40 = sadd.s32 1, %s35
      %p41 = scmp.ge.s32.totalorder %s40, 2
      %s42 = scalar_select %p41, 0, %s40
      %s43 = sadd.s32 1, %s34
      %s44 = scalar_select %p41, %s43, %s34
      %p45 = scmp.ge.s32.totalorder %s44, 1
      %s46 = scalar_select %p45, 0, %s44
      %s47 = ssub.s32 %s34, %s46
      %p48 = scmp.eq.s32.totalorder %s47, 0
      %s50 = sadd.s32 %s49, 1
      %s51 = scalar_select %p48, %s49, %s50
      %p54 = pneg %p48
      %p55 = scmp.eq.s32.totalorder %s27, 1
      %p56 = por %p54, %p55
      %p57 = scmp.ne.s32.totalorder %s49, %s52
      %p58 = scmp.eq.s32.totalorder %s27, 0
      %p59 = por %p57, %p58
      %p60 = scmp.ne.s32.totalorder %s49, %s52
      %p61 = scmp.eq.s32.totalorder %s32, 1
      %p62 = por %p60, %p61
      %p63 = scmp.ne.s32.totalorder %s52, %s53
      %p64 = scmp.eq.s32.totalorder %s32, 0
      %p65 = por %p63, %p64
      %p66 = scmp.ne.s32.totalorder %s52, %s53
      %p67 = scmp.eq.s32.totalorder %s33, 1
      %p68 = por %p66, %p67
      %p70 = scmp.ne.s32.totalorder %s53, %s69
      %p71 = scmp.eq.s32.totalorder %s33, 0
      %p72 = por %p70, %p71
      %s73 = ssub.s32 %s34, %s46
      %p74 = scmp.eq.s32.totalorder %s73, 0
      %s76 = sadd.s32 %s75, 1
      %s77 = scalar_select %p74, %s75, %s76
      %p80 = pneg %p74
      %p81 = scmp.eq.s32.totalorder %s27, 1
      %p82 = por %p80, %p81
      %p83 = scmp.ne.s32.totalorder %s75, %s78
      %p84 = scmp.eq.s32.totalorder %s27, 0
      %p85 = por %p83, %p84
      %p86 = scmp.ne.s32.totalorder %s75, %s78
      %p87 = scmp.eq.s32.totalorder %s32, 1
      %p88 = por %p86, %p87
      %p89 = scmp.ne.s32.totalorder %s78, %s79
      %p90 = scmp.eq.s32.totalorder %s32, 0
      %p91 = por %p89, %p90
      %p92 = scmp.ne.s32.totalorder %s78, %s79
      %p93 = scmp.eq.s32.totalorder %s33, 1
      %p94 = por %p92, %p93
      %p96 = scmp.ne.s32.totalorder %s79, %s95
      %p97 = scmp.eq.s32.totalorder %s33, 0
      %p98 = por %p96, %p97
      %s99 = ssub.s32 %s34, %s46
      %p100 = scmp.eq.s32.totalorder %s99, 0
      %s102 = sadd.s32 %s101, 1
      %s103 = scalar_select %p100, %s101, %s102
      %p106 = pneg %p100
      %p107 = scmp.eq.s32.totalorder %s27, 1
      %p108 = por %p106, %p107
      %p109 = scmp.ne.s32.totalorder %s101, %s104
      %p110 = scmp.eq.s32.totalorder %s27, 0
      %p111 = por %p109, %p110
      %p112 = scmp.ne.s32.totalorder %s101, %s104
      %p113 = scmp.eq.s32.totalorder %s32, 1
      %p114 = por %p112, %p113
      %p115 = scmp.ne.s32.totalorder %s104, %s105
      %p116 = scmp.eq.s32.totalorder %s32, 0
      %p117 = por %p115, %p116
      %p118 = scmp.ne.s32.totalorder %s104, %s105
      %p119 = scmp.eq.s32.totalorder %s33, 1
      %p120 = por %p118, %p119
      %p122 = scmp.ne.s32.totalorder %s105, %s121
      %p123 = scmp.eq.s32.totalorder %s33, 0
      %p124 = por %p122, %p123
      %s125 = ssub.s32 %s34, %s46
      %p126 = scmp.eq.s32.totalorder %s125, 0
      %s128 = sadd.s32 %s127, 1
      %s129 = scalar_select %p126, %s127, %s128
      %p132 = pneg %p126
      %p133 = scmp.eq.s32.totalorder %s27, 1
      %p134 = por %p132, %p133
      %p135 = scmp.ne.s32.totalorder %s127, %s130
      %p136 = scmp.eq.s32.totalorder %s27, 0
      %p137 = por %p135, %p136
      %p138 = scmp.ne.s32.totalorder %s127, %s130
      %p139 = scmp.eq.s32.totalorder %s32, 1
      %p140 = por %p138, %p139
      %p141 = scmp.ne.s32.totalorder %s130, %s131
      %p142 = scmp.eq.s32.totalorder %s32, 0
      %p143 = por %p141, %p142
      %p144 = scmp.ne.s32.totalorder %s130, %s131
      %p145 = scmp.eq.s32.totalorder %s33, 1
      %p146 = por %p144, %p145
      %p148 = scmp.ne.s32.totalorder %s131, %s147
      %p149 = scmp.eq.s32.totalorder %s33, 0
      %p150 = por %p148, %p149
      %s151 = ssub.s32 %s34, %s46
      %p152 = scmp.eq.s32.totalorder %s151, 0
      %s154 = sadd.s32 %s153, 1
      %s155 = scalar_select %p152, %s153, %s154
      %p158 = pneg %p152
      %p159 = scmp.eq.s32.totalorder %s27, 1
      %p160 = por %p158, %p159
      %p161 = scmp.ne.s32.totalorder %s153, %s156
      %p162 = scmp.eq.s32.totalorder %s27, 0
      %p163 = por %p161, %p162
      %p164 = scmp.ne.s32.totalorder %s153, %s156
      %p165 = scmp.eq.s32.totalorder %s32, 1
      %p166 = por %p164, %p165
      %p167 = scmp.ne.s32.totalorder %s156, %s157
      %p168 = scmp.eq.s32.totalorder %s32, 0
      %p169 = por %p167, %p168
      %p170 = scmp.ne.s32.totalorder %s156, %s157
      %p171 = scmp.eq.s32.totalorder %s33, 1
      %p172 = por %p170, %p171
      %p174 = scmp.ne.s32.totalorder %s157, %s173
      %p175 = scmp.eq.s32.totalorder %s33, 0
      %p176 = por %p174, %p175
      %s178 = sadd.s32 %s177, 1
      %p181 = scmp.eq.s32.totalorder %s27, 1
      %p182 = scmp.ne.s32.totalorder %s177, %s179
      %p183 = scmp.eq.s32.totalorder %s27, 0
      %p184 = por %p182, %p183
      %p185 = scmp.ne.s32.totalorder %s177, %s179
      %p186 = scmp.eq.s32.totalorder %s32, 1
      %p187 = por %p185, %p186
      %p188 = scmp.ne.s32.totalorder %s179, %s180
      %p189 = scmp.eq.s32.totalorder %s32, 0
      %p190 = por %p188, %p189
      %p191 = scmp.ne.s32.totalorder %s179, %s180
      %p192 = scmp.eq.s32.totalorder %s33, 1
      %p193 = por %p191, %p192
      %p195 = scmp.ne.s32.totalorder %s180, %s194
      %p196 = scmp.eq.s32.totalorder %s33, 0
      %p197 = por %p195, %p196
      %s198 = ssub.s32 %s35, %s42
      %p199 = scmp.eq.s32.totalorder %s198, 0
      %s201 = sadd.s32 %s200, 1
      %s202 = scalar_select %p199, %s200, %s201
      %p205 = pneg %p199
      %p206 = scmp.eq.s32.totalorder %s27, 1
      %p207 = por %p205, %p206
      %p208 = scmp.ne.s32.totalorder %s200, %s203
      %p209 = scmp.eq.s32.totalorder %s27, 0
      %p210 = por %p208, %p209
      %p211 = scmp.ne.s32.totalorder %s200, %s203
      %p212 = scmp.eq.s32.totalorder %s32, 1
      %p213 = por %p211, %p212
      %p214 = scmp.ne.s32.totalorder %s203, %s204
      %p215 = scmp.eq.s32.totalorder %s32, 0
      %p216 = por %p214, %p215
      %p217 = scmp.ne.s32.totalorder %s203, %s204
      %p218 = scmp.eq.s32.totalorder %s33, 1
      %p219 = por %p217, %p218
      %p221 = scmp.ne.s32.totalorder %s204, %s220
      %p222 = scmp.eq.s32.totalorder %s33, 0
      %p223 = por %p221, %p222
      %s224 = ssub.s32 %s35, %s42
      %p225 = scmp.eq.s32.totalorder %s224, 0
      %s227 = sadd.s32 %s226, 1
      %s228 = scalar_select %p225, %s226, %s227
      %p231 = pneg %p225
      %p232 = scmp.eq.s32.totalorder %s27, 1
      %p233 = por %p231, %p232
      %p234 = scmp.ne.s32.totalorder %s226, %s229
      %p235 = scmp.eq.s32.totalorder %s27, 0
      %p236 = por %p234, %p235
      %p237 = scmp.ne.s32.totalorder %s226, %s229
      %p238 = scmp.eq.s32.totalorder %s32, 1
      %p239 = por %p237, %p238
      %p240 = scmp.ne.s32.totalorder %s229, %s230
      %p241 = scmp.eq.s32.totalorder %s32, 0
      %p242 = por %p240, %p241
      %p243 = scmp.ne.s32.totalorder %s229, %s230
      %p244 = scmp.eq.s32.totalorder %s33, 1
      %p245 = por %p243, %p244
      %p247 = scmp.ne.s32.totalorder %s230, %s246
      %p248 = scmp.eq.s32.totalorder %s33, 0
      %p249 = por %p247, %p248
      %s250 = ssub.s32 %s35, %s42
      %p251 = scmp.eq.s32.totalorder %s250, 0
      %s253 = sadd.s32 %s252, 1
      %s254 = scalar_select %p251, %s252, %s253
      %p257 = pneg %p251
      %p258 = scmp.eq.s32.totalorder %s27, 1
      %p259 = por %p257, %p258
      %p260 = scmp.ne.s32.totalorder %s252, %s255
      %p261 = scmp.eq.s32.totalorder %s27, 0
      %p262 = por %p260, %p261
      %p263 = scmp.ne.s32.totalorder %s252, %s255
      %p264 = scmp.eq.s32.totalorder %s32, 1
      %p265 = por %p263, %p264
      %p266 = scmp.ne.s32.totalorder %s255, %s256
      %p267 = scmp.eq.s32.totalorder %s32, 0
      %p268 = por %p266, %p267
      %p269 = scmp.ne.s32.totalorder %s255, %s256
      %p270 = scmp.eq.s32.totalorder %s33, 1
      %p271 = por %p269, %p270
      %p273 = scmp.ne.s32.totalorder %s256, %s272
      %p274 = scmp.eq.s32.totalorder %s33, 0
      %p275 = por %p273, %p274
      %s276 = ssub.s32 %s35, %s42
      %p277 = scmp.eq.s32.totalorder %s276, 0
      %s279 = sadd.s32 %s278, 1
      %s280 = scalar_select %p277, %s278, %s279
      %p283 = pneg %p277
      %p284 = scmp.eq.s32.totalorder %s27, 1
      %p285 = por %p283, %p284
      %p286 = scmp.ne.s32.totalorder %s278, %s281
      %p287 = scmp.eq.s32.totalorder %s27, 0
      %p288 = por %p286, %p287
      %p289 = scmp.ne.s32.totalorder %s278, %s281
      %p290 = scmp.eq.s32.totalorder %s32, 1
      %p291 = por %p289, %p290
      %p292 = scmp.ne.s32.totalorder %s281, %s282
      %p293 = scmp.eq.s32.totalorder %s32, 0
      %p294 = por %p292, %p293
      %p295 = scmp.ne.s32.totalorder %s281, %s282
      %p296 = scmp.eq.s32.totalorder %s33, 1
      %p297 = por %p295, %p296
      %p299 = scmp.ne.s32.totalorder %s282, %s298
      %p300 = scmp.eq.s32.totalorder %s33, 0
      %p301 = por %p299, %p300
      %s302 = ssub.s32 %s35, %s42
      %p303 = scmp.eq.s32.totalorder %s302, 0
      %s305 = sadd.s32 %s304, 1
      %s306 = scalar_select %p303, %s304, %s305
      %p309 = pneg %p303
      %p310 = scmp.eq.s32.totalorder %s27, 1
      %p311 = por %p309, %p310
      %p312 = scmp.ne.s32.totalorder %s304, %s307
      %p313 = scmp.eq.s32.totalorder %s27, 0
      %p314 = por %p312, %p313
      %p315 = scmp.ne.s32.totalorder %s304, %s307
      %p316 = scmp.eq.s32.totalorder %s32, 1
      %p317 = por %p315, %p316
      %p318 = scmp.ne.s32.totalorder %s307, %s308
      %p319 = scmp.eq.s32.totalorder %s32, 0
      %p320 = por %p318, %p319
      %p321 = scmp.ne.s32.totalorder %s307, %s308
      %p322 = scmp.eq.s32.totalorder %s33, 1
      %p323 = por %p321, %p322
      %p325 = scmp.ne.s32.totalorder %s308, %s324
      %p326 = scmp.eq.s32.totalorder %s33, 0
      %p327 = por %p325, %p326
      %s328 = ssub.s32 %s35, %s42
      %p329 = scmp.eq.s32.totalorder %s328, 0
      %s331 = sadd.s32 %s330, 1
      %s332 = scalar_select %p329, %s330, %s331
      %p335 = pneg %p329
      %p336 = scmp.eq.s32.totalorder %s27, 1
      %p337 = por %p335, %p336
      %p338 = scmp.ne.s32.totalorder %s330, %s333
      %p339 = scmp.eq.s32.totalorder %s27, 0
      %p340 = por %p338, %p339
      %p341 = scmp.ne.s32.totalorder %s330, %s333
      %p342 = scmp.eq.s32.totalorder %s32, 1
      %p343 = por %p341, %p342
      %p344 = scmp.ne.s32.totalorder %s333, %s334
      %p345 = scmp.eq.s32.totalorder %s32, 0
      %p346 = por %p344, %p345
      %p347 = scmp.ne.s32.totalorder %s333, %s334
      %p348 = scmp.eq.s32.totalorder %s33, 1
      %p349 = por %p347, %p348
      %p351 = scmp.ne.s32.totalorder %s334, %s350
      %p352 = scmp.eq.s32.totalorder %s33, 0
      %p353 = por %p351, %p352
      %s354 = ssub.s32 %s35, %s42
      %p355 = scmp.eq.s32.totalorder %s354, 0
      %s357 = sadd.s32 %s356, 1
      %s358 = scalar_select %p355, %s356, %s357
      %p361 = pneg %p355
      %p362 = scmp.eq.s32.totalorder %s27, 1
      %p363 = por %p361, %p362
      %p364 = scmp.ne.s32.totalorder %s356, %s359
      %p365 = scmp.eq.s32.totalorder %s27, 0
      %p366 = por %p364, %p365
      %p367 = scmp.ne.s32.totalorder %s356, %s359
      %p368 = scmp.eq.s32.totalorder %s32, 1
      %p369 = por %p367, %p368
      %p370 = scmp.ne.s32.totalorder %s359, %s360
      %p371 = scmp.eq.s32.totalorder %s32, 0
      %p372 = por %p370, %p371
      %p373 = scmp.ne.s32.totalorder %s359, %s360
      %p374 = scmp.eq.s32.totalorder %s33, 1
      %p375 = por %p373, %p374
      %p377 = scmp.ne.s32.totalorder %s360, %s376
      %p378 = scmp.eq.s32.totalorder %s33, 0
      %p379 = por %p377, %p378
      %s380 = ssub.s32 %s35, %s42
      %p381 = scmp.eq.s32.totalorder %s380, 0
      %s383 = sadd.s32 %s382, 1
      %s384 = scalar_select %p381, %s382, %s383
      %p387 = pneg %p381
      %p388 = scmp.eq.s32.totalorder %s27, 1
      %p389 = por %p387, %p388
      %p390 = scmp.ne.s32.totalorder %s382, %s385
      %p391 = scmp.eq.s32.totalorder %s27, 0
      %p392 = por %p390, %p391
      %p393 = scmp.ne.s32.totalorder %s382, %s385
      %p394 = scmp.eq.s32.totalorder %s32, 1
      %p395 = por %p393, %p394
      %p396 = scmp.ne.s32.totalorder %s385, %s386
      %p397 = scmp.eq.s32.totalorder %s32, 0
      %p398 = por %p396, %p397
      %p399 = scmp.ne.s32.totalorder %s385, %s386
      %p400 = scmp.eq.s32.totalorder %s33, 1
      %p401 = por %p399, %p400
      %p403 = scmp.ne.s32.totalorder %s386, %s402
      %p404 = scmp.eq.s32.totalorder %s33, 0
      %p405 = por %p403, %p404
      %s406 = ssub.s32 %s35, %s42
      %p407 = scmp.eq.s32.totalorder %s406, 0
      %s409 = sadd.s32 %s408, 1
      %s410 = scalar_select %p407, %s408, %s409
      %p413 = pneg %p407
      %p414 = scmp.eq.s32.totalorder %s27, 1
      %p415 = por %p413, %p414
      %p416 = scmp.ne.s32.totalorder %s408, %s411
      %p417 = scmp.eq.s32.totalorder %s27, 0
      %p418 = por %p416, %p417
      %p419 = scmp.ne.s32.totalorder %s408, %s411
      %p420 = scmp.eq.s32.totalorder %s32, 1
      %p421 = por %p419, %p420
      %p422 = scmp.ne.s32.totalorder %s411, %s412
      %p423 = scmp.eq.s32.totalorder %s32, 0
      %p424 = por %p422, %p423
      %p425 = scmp.ne.s32.totalorder %s411, %s412
      %p426 = scmp.eq.s32.totalorder %s33, 1
      %p427 = por %p425, %p426
      %p429 = scmp.ne.s32.totalorder %s412, %s428
      %p430 = scmp.eq.s32.totalorder %s33, 0
      %p431 = por %p429, %p430
      %s432 = ssub.s32 %s35, %s42
      %p433 = scmp.eq.s32.totalorder %s432, 0
      %s435 = sadd.s32 %s434, 1
      %s436 = scalar_select %p433, %s434, %s435
      %p439 = pneg %p433
      %p440 = scmp.eq.s32.totalorder %s27, 1
      %p441 = por %p439, %p440
      %p442 = scmp.ne.s32.totalorder %s434, %s437
      %p443 = scmp.eq.s32.totalorder %s27, 0
      %p444 = por %p442, %p443
      %p445 = scmp.ne.s32.totalorder %s434, %s437
      %p446 = scmp.eq.s32.totalorder %s32, 1
      %p447 = por %p445, %p446
      %p448 = scmp.ne.s32.totalorder %s437, %s438
      %p449 = scmp.eq.s32.totalorder %s32, 0
      %p450 = por %p448, %p449
      %p451 = scmp.ne.s32.totalorder %s437, %s438
      %p452 = scmp.eq.s32.totalorder %s33, 1
      %p453 = por %p451, %p452
      %p455 = scmp.ne.s32.totalorder %s438, %s454
      %p456 = scmp.eq.s32.totalorder %s33, 0
      %p457 = por %p455, %p456
      %s458 = ssub.s32 %s35, %s42
      %p459 = scmp.eq.s32.totalorder %s458, 0
      %s461 = sadd.s32 %s460, 1
      %s462 = scalar_select %p459, %s460, %s461
      %p465 = pneg %p459
      %p466 = scmp.eq.s32.totalorder %s27, 1
      %p467 = por %p465, %p466
      %p468 = scmp.ne.s32.totalorder %s460, %s463
      %p469 = scmp.eq.s32.totalorder %s27, 0
      %p470 = por %p468, %p469
      %p471 = scmp.ne.s32.totalorder %s460, %s463
      %p472 = scmp.eq.s32.totalorder %s32, 1
      %p473 = por %p471, %p472
      %p474 = scmp.ne.s32.totalorder %s463, %s464
      %p475 = scmp.eq.s32.totalorder %s32, 0
      %p476 = por %p474, %p475
      %p477 = scmp.ne.s32.totalorder %s463, %s464
      %p478 = scmp.eq.s32.totalorder %s33, 1
      %p479 = por %p477, %p478
      %p481 = scmp.ne.s32.totalorder %s464, %s480
      %p482 = scmp.eq.s32.totalorder %s33, 0
      %p483 = por %p481, %p482
      %s484 = ssub.s32 %s35, %s42
      %p485 = scmp.eq.s32.totalorder %s484, 0
      %s487 = sadd.s32 %s486, 1
      %s488 = scalar_select %p485, %s486, %s487
      %p491 = pneg %p485
      %p492 = scmp.eq.s32.totalorder %s27, 1
      %p493 = por %p491, %p492
      %p494 = scmp.ne.s32.totalorder %s486, %s489
      %p495 = scmp.eq.s32.totalorder %s27, 0
      %p496 = por %p494, %p495
      %p497 = scmp.ne.s32.totalorder %s486, %s489
      %p498 = scmp.eq.s32.totalorder %s32, 1
      %p499 = por %p497, %p498
      %p500 = scmp.ne.s32.totalorder %s489, %s490
      %p501 = scmp.eq.s32.totalorder %s32, 0
      %p502 = por %p500, %p501
      %p503 = scmp.ne.s32.totalorder %s489, %s490
      %p504 = scmp.eq.s32.totalorder %s33, 1
      %p505 = por %p503, %p504
      %p507 = scmp.ne.s32.totalorder %s490, %s506
      %p508 = scmp.eq.s32.totalorder %s33, 0
      %p509 = por %p507, %p508
      %s510 = ssub.s32 %s34, %s46
      %p511 = scmp.eq.s32.totalorder %s510, 0
      %s513 = sadd.s32 %s512, 1
      %s514 = scalar_select %p511, %s512, %s513
      %p517 = pneg %p511
      %p518 = scmp.eq.s32.totalorder %s27, 1
      %p519 = por %p517, %p518
      %p520 = scmp.ne.s32.totalorder %s512, %s515
      %p521 = scmp.eq.s32.totalorder %s27, 0
      %p522 = por %p520, %p521
      %p523 = scmp.ne.s32.totalorder %s512, %s515
      %p524 = scmp.eq.s32.totalorder %s32, 1
      %p525 = por %p523, %p524
      %p526 = scmp.ne.s32.totalorder %s515, %s516
      %p527 = scmp.eq.s32.totalorder %s32, 0
      %p528 = por %p526, %p527
      %p529 = scmp.ne.s32.totalorder %s515, %s516
      %p530 = scmp.eq.s32.totalorder %s33, 1
      %p531 = por %p529, %p530
      %p533 = scmp.ne.s32.totalorder %s516, %s532
      %p534 = scmp.eq.s32.totalorder %s33, 0
      %p535 = por %p533, %p534
      %p536 = scmp.le.s32.totalorder 1, %s27
      %p537 = scmp.lt.s32.totalorder %s27, 3
      %p538 = pnand %p536, %p537
      %p539 = pneg %p538
      // Predicated region
      $region9: #{tpu_custom_call.1} parent=5 // pred_check
        _
      $region10: #{tpu_custom_call.1} parent=5 // pred_check_branch
        %541 = sbr.rel (%p538) target = $region12
      $region11: #{tpu_custom_call.1} parent=5 // pred_region
        %s542 = ssub.s32 %s27, 1
        // Predicated region
        $region13: #{tpu_custom_call.1} parent=11 // pred_check
          %p543 = pneg %p65
        $region14: #{tpu_custom_call.1} parent=11 // pred_check_branch
          %545 = sbr.rel (%p543) target = $region16
        $region15: #{tpu_custom_call.1} parent=11 // pred_region
          %s546 = smul.u32 2, %s36
          %s548 = ssub.s32 256, 256
          %549 = vsyncadd [#allocation4], %s548
          %s550 = smul.addr %s546, 128
          %s551 = scalar_lea.hbm %s0, %s550
          %s552 = sshll.u32 [#allocation3], 4
          %s553 = int_to_ptr.vmem [resolvable:$true] %s552
          %558 = dma.hbm_to_vmem [thread:$0]  %s551, 256, %s553, [#allocation4], 128, 128, 8
        $region16: #{tpu_custom_call.1} parent=11 // pred_fallthru
          _
        // Predicated region
        $region17: #{tpu_custom_call.1} parent=11 // pred_check
          %p559 = pneg %p91
        $region18: #{tpu_custom_call.1} parent=11 // pred_check_branch
          %561 = sbr.rel (%p559) target = $region20
        $region19: #{tpu_custom_call.1} parent=11 // pred_region
          %s562 = smul.u32 2, %s36
          %p563 = scmp.lt.s32.totalorder %s562, 1
          %s564 = scalar_select %p563, %s562, 1
          %s565 = smul.addr %s564, 8
          %s566 = scalar_lea.vmem %s1, %s565
          %s567 = smul.u32 2, %s36
        $region20: #{tpu_custom_call.1} parent=11 // pred_fallthru
          _
        // Predicated region
        $region21: #{tpu_custom_call.1} parent=11 // pred_check
          %p568 = pneg %p117
        $region22: #{tpu_custom_call.1} parent=11 // pred_check_branch
          %570 = sbr.rel (%p568) target = $region24
        $region23: #{tpu_custom_call.1} parent=11 // pred_region
          %s571 = smul.u32 2, %s36
          %p572 = scmp.lt.s32.totalorder %s571, 1
          %s573 = scalar_select %p572, %s571, 1
          %s574 = scalar_lea.vmem %s2, %s573
          %s575 = smul.u32 2, %s36
        $region24: #{tpu_custom_call.1} parent=11 // pred_fallthru
          _
        // Predicated region
        $region25: #{tpu_custom_call.1} parent=11 // pred_check
          %p576 = pneg %p143
        $region26: #{tpu_custom_call.1} parent=11 // pred_check_branch
          %578 = sbr.rel (%p576) target = $region28
        $region27: #{tpu_custom_call.1} parent=11 // pred_region
          %s579 = smul.u32 2, %s36
          %p580 = scmp.lt.s32.totalorder %s579, 1
          %s581 = scalar_select %p580, %s579, 1
          %s582 = smul.addr %s581, 8
          %s583 = scalar_lea.vmem %s3, %s582
          %s584 = smul.u32 2, %s36
        $region28: #{tpu_custom_call.1} parent=11 // pred_fallthru
          _
        // Predicated region
        $region29: #{tpu_custom_call.1} parent=11 // pred_check
          %p585 = pneg %p169
        $region30: #{tpu_custom_call.1} parent=11 // pred_check_branch
          %587 = sbr.rel (%p585) target = $region32
        $region31: #{tpu_custom_call.1} parent=11 // pred_region
          %s588 = smul.u32 2, %s36
          %p589 = scmp.lt.s32.totalorder %s588, 1
          %s590 = scalar_select %p589, %s588, 1
          %s591 = scalar_lea.vmem %s4, %s590
          %s592 = smul.u32 2, %s36
        $region32: #{tpu_custom_call.1} parent=11 // pred_fallthru
          _
        // Predicated region
        $region33: #{tpu_custom_call.1} parent=11 // pred_check
          %p593 = pneg %p190
        $region34: #{tpu_custom_call.1} parent=11 // pred_check_branch
          %595 = sbr.rel (%p593) target = $region36
        $region35: #{tpu_custom_call.1} parent=11 // pred_region
          %s597 = ssub.s32 16, 16
          %598 = vsyncadd [#allocation6], %s597
          %s600 = sshll.u32 %s5, 4
          %s601 = int_to_ptr.vmem [resolvable:$true] %s600
          %603 = dma.vmem_to_smem %s601, 16, [#allocation7], [#allocation6]
        $region36: #{tpu_custom_call.1} parent=11 // pred_fallthru
          _
      $region12: #{tpu_custom_call.1} parent=5 // pred_fallthru
        _
      %p604 = scmp.lt.s32.totalorder %s27, 2
      // Predicated region
      $region37: #{tpu_custom_call.1} parent=5 // pred_check
        %p605 = pneg %p604
      $region38: #{tpu_custom_call.1} parent=5 // pred_check_branch
        %607 = sbr.rel (%p605) target = $region40
      $region39: #{tpu_custom_call.1} parent=5 // pred_region
        // Predicated region
        $region41: #{tpu_custom_call.1} parent=39 // pred_check
          %p608 = pneg %p210
        $region42: #{tpu_custom_call.1} parent=39 // pred_check_branch
          %610 = sbr.rel (%p608) target = $region44
        $region43: #{tpu_custom_call.1} parent=39 // pred_region
          %p611 = scmp.lt.s32.totalorder %s35, 1
          %s612 = scalar_select %p611, %s35, 1
          %s613 = scalar_lea.vmem %s6, %s612
        $region44: #{tpu_custom_call.1} parent=39 // pred_fallthru
          _
        // Predicated region
        $region45: #{tpu_custom_call.1} parent=39 // pred_check
          %p614 = pneg %p236
        $region46: #{tpu_custom_call.1} parent=39 // pred_check_branch
          %616 = sbr.rel (%p614) target = $region48
        $region47: #{tpu_custom_call.1} parent=39 // pred_region
          %p617 = scmp.lt.s32.totalorder %s35, 1
          %s618 = scalar_select %p617, %s35, 1
          %s619 = scalar_lea.vmem %s7, %s618
        $region48: #{tpu_custom_call.1} parent=39 // pred_fallthru
          _
        // Predicated region
        $region49: #{tpu_custom_call.1} parent=39 // pred_check
          %p620 = pneg %p262
        $region50: #{tpu_custom_call.1} parent=39 // pred_check_branch
          %622 = sbr.rel (%p620) target = $region52
        $region51: #{tpu_custom_call.1} parent=39 // pred_region
          %p623 = scmp.lt.s32.totalorder %s35, 1
          %s624 = scalar_select %p623, %s35, 1
          %s625 = smul.addr %s624, 4
          %s626 = smul.addr %s625, 4
          %s627 = scalar_lea.vmem %s8, %s626
        $region52: #{tpu_custom_call.1} parent=39 // pred_fallthru
          _
        // Predicated region
        $region53: #{tpu_custom_call.1} parent=39 // pred_check
          %p628 = pneg %p288
        $region54: #{tpu_custom_call.1} parent=39 // pred_check_branch
          %630 = sbr.rel (%p628) target = $region56
        $region55: #{tpu_custom_call.1} parent=39 // pred_region
          %p631 = scmp.lt.s32.totalorder %s35, 1
          %s632 = scalar_select %p631, %s35, 1
          %s633 = scalar_lea.vmem %s9, %s632
        $region56: #{tpu_custom_call.1} parent=39 // pred_fallthru
          _
        // Predicated region
        $region57: #{tpu_custom_call.1} parent=39 // pred_check
          %p634 = pneg %p314
        $region58: #{tpu_custom_call.1} parent=39 // pred_check_branch
          %636 = sbr.rel (%p634) target = $region60
        $region59: #{tpu_custom_call.1} parent=39 // pred_region
          %p637 = scmp.lt.s32.totalorder %s35, 1
          %s638 = scalar_select %p637, %s35, 1
          %s639 = smul.addr %s638, 4
          %s640 = smul.addr %s639, 4
          %s641 = scalar_lea.vmem %s10, %s640
        $region60: #{tpu_custom_call.1} parent=39 // pred_fallthru
          _
        // Predicated region
        $region61: #{tpu_custom_call.1} parent=39 // pred_check
          %p642 = pneg %p340
        $region62: #{tpu_custom_call.1} parent=39 // pred_check_branch
          %644 = sbr.rel (%p642) target = $region64
        $region63: #{tpu_custom_call.1} parent=39 // pred_region
          %p645 = scmp.lt.s32.totalorder %s35, 1
          %s646 = scalar_select %p645, %s35, 1
          %s647 = scalar_lea.vmem %s11, %s646
        $region64: #{tpu_custom_call.1} parent=39 // pred_fallthru
          _
        // Predicated region
        $region65: #{tpu_custom_call.1} parent=39 // pred_check
          %p648 = pneg %p366
        $region66: #{tpu_custom_call.1} parent=39 // pred_check_branch
          %650 = sbr.rel (%p648) target = $region68
        $region67: #{tpu_custom_call.1} parent=39 // pred_region
          %p651 = scmp.lt.s32.totalorder %s35, 1
          %s652 = scalar_select %p651, %s35, 1
          %s653 = scalar_lea.vmem %s12, %s652
        $region68: #{tpu_custom_call.1} parent=39 // pred_fallthru
          _
        // Predicated region
        $region69: #{tpu_custom_call.1} parent=39 // pred_check
          %p654 = pneg %p392
        $region70: #{tpu_custom_call.1} parent=39 // pred_check_branch
          %656 = sbr.rel (%p654) target = $region72
        $region71: #{tpu_custom_call.1} parent=39 // pred_region
          %p657 = scmp.lt.s32.totalorder %s35, 1
          %s658 = scalar_select %p657, %s35, 1
          %s659 = scalar_lea.vmem %s13, %s658
        $region72: #{tpu_custom_call.1} parent=39 // pred_fallthru
          _
        // Predicated region
        $region73: #{tpu_custom_call.1} parent=39 // pred_check
          %p660 = pneg %p418
        $region74: #{tpu_custom_call.1} parent=39 // pred_check_branch
          %662 = sbr.rel (%p660) target = $region76
        $region75: #{tpu_custom_call.1} parent=39 // pred_region
          %p663 = scmp.lt.s32.totalorder %s35, 1
          %s664 = scalar_select %p663, %s35, 1
          %s665 = smul.addr %s664, 4
          %s666 = smul.addr %s665, 4
          %s667 = scalar_lea.vmem %s14, %s666
        $region76: #{tpu_custom_call.1} parent=39 // pred_fallthru
          _
        // Predicated region
        $region77: #{tpu_custom_call.1} parent=39 // pred_check
          %p668 = pneg %p444
        $region78: #{tpu_custom_call.1} parent=39 // pred_check_branch
          %670 = sbr.rel (%p668) target = $region80
        $region79: #{tpu_custom_call.1} parent=39 // pred_region
          %p671 = scmp.lt.s32.totalorder %s35, 1
          %s672 = scalar_select %p671, %s35, 1
          %s673 = scalar_lea.vmem %s15, %s672
        $region80: #{tpu_custom_call.1} parent=39 // pred_fallthru
          _
        // Predicated region
        $region81: #{tpu_custom_call.1} parent=39 // pred_check
          %p674 = pneg %p470
        $region82: #{tpu_custom_call.1} parent=39 // pred_check_branch
          %676 = sbr.rel (%p674) target = $region84
        $region83: #{tpu_custom_call.1} parent=39 // pred_region
          %p677 = scmp.lt.s32.totalorder %s35, 1
          %s678 = scalar_select %p677, %s35, 1
          %s679 = smul.addr %s678, 16
          %s680 = smul.addr %s679, 4
          %s681 = scalar_lea.vmem %s16, %s680
        $region84: #{tpu_custom_call.1} parent=39 // pred_fallthru
          _
        // Predicated region
        $region85: #{tpu_custom_call.1} parent=39 // pred_check
          %p682 = pneg %p496
        $region86: #{tpu_custom_call.1} parent=39 // pred_check_branch
          %684 = sbr.rel (%p682) target = $region88
        $region87: #{tpu_custom_call.1} parent=39 // pred_region
          %p685 = scmp.lt.s32.totalorder %s35, 1
          %s686 = scalar_select %p685, %s35, 1
          %s687 = scalar_lea.vmem %s17, %s686
        $region88: #{tpu_custom_call.1} parent=39 // pred_fallthru
          _
      $region40: #{tpu_custom_call.1} parent=5 // pred_fallthru
        _
      %p688 = scmp.le.s32.totalorder 1, %s27
      %p689 = scmp.lt.s32.totalorder %s27, 3
      %p690 = pnand %p688, %p689
      %p691 = pneg %p690
      // Predicated region
      $region89: #{tpu_custom_call.1} parent=5 // pred_check
        _
      $region90: #{tpu_custom_call.1} parent=5 // pred_check_branch
        %693 = sbr.rel (%p690) target = $region92
      $region91: #{tpu_custom_call.1} parent=5 // pred_region
        %s694 = ssub.s32 %s27, 1
        // Predicated region
        $region93: #{tpu_custom_call.1} parent=91 // pred_check
          %p695 = pneg %p65
        $region94: #{tpu_custom_call.1} parent=91 // pred_check_branch
          %697 = sbr.rel (%p695) target = $region96
        $region95: #{tpu_custom_call.1} parent=91 // pred_region
          %698 = dma.done [#allocation4], 256
        $region96: #{tpu_custom_call.1} parent=91 // pred_fallthru
          _
        // Predicated region
        $region97: #{tpu_custom_call.1} parent=91 // pred_check
          %p699 = pneg %p190
        $region98: #{tpu_custom_call.1} parent=91 // pred_check_branch
          %701 = sbr.rel (%p699) target = $region100
        $region99: #{tpu_custom_call.1} parent=91 // pred_region
          %702 = dma.done [#allocation6], 16
        $region100: #{tpu_custom_call.1} parent=91 // pred_fallthru
          _
        %703 = sfence
        %p704 = pneg %p65
        %p705 = pneg %p62
        %s706 = smul.u32 2, %s36
        %p707 = scmp.lt.s32.totalorder %s706, 1
        %s708 = scalar_select %p707, %s706, 1
        %s709 = smul.addr %s708, 8
        %s710 = scalar_lea.vmem %s1, %s709
        %p711 = pneg %p91
        %p712 = pneg %p88
        %s713 = smul.u32 2, %s36
        %p714 = scmp.lt.s32.totalorder %s713, 1
        %s715 = scalar_select %p714, %s713, 1
        %s716 = scalar_lea.vmem %s2, %s715
        %p717 = pneg %p117
        %p718 = pneg %p114
        %s719 = smul.u32 2, %s36
        %p720 = scmp.lt.s32.totalorder %s719, 1
        %s721 = scalar_select %p720, %s719, 1
        %s722 = smul.addr %s721, 8
        %s723 = scalar_lea.vmem %s3, %s722
        %p724 = pneg %p143
        %p725 = pneg %p140
        %s726 = smul.u32 2, %s36
        %p727 = scmp.lt.s32.totalorder %s726, 1
        %s728 = scalar_select %p727, %s726, 1
        %s729 = scalar_lea.vmem %s4, %s728
        %p730 = pneg %p169
        %p731 = pneg %p166
        %p732 = pneg %p190
        %p733 = pneg %p187
        %p734 = scmp.lt.s32.totalorder %s37, 1
        %s735 = scalar_select %p734, %s37, 1
        %s736 = scalar_lea.vmem %s6, %s735
        %p737 = pneg %p216
        %p738 = pneg %p213
        %p739 = scmp.lt.s32.totalorder %s37, 1
        %s740 = scalar_select %p739, %s37, 1
        %s741 = scalar_lea.vmem %s7, %s740
        %p742 = pneg %p242
        %p743 = pneg %p239
        %p744 = scmp.lt.s32.totalorder %s37, 1
        %s745 = scalar_select %p744, %s37, 1
        %s746 = smul.addr %s745, 4
        %s747 = smul.addr %s746, 4
        %s748 = scalar_lea.vmem %s8, %s747
        %p749 = pneg %p268
        %p750 = pneg %p265
        %p751 = scmp.lt.s32.totalorder %s37, 1
        %s752 = scalar_select %p751, %s37, 1
        %s753 = scalar_lea.vmem %s9, %s752
        %p754 = pneg %p294
        %p755 = pneg %p291
        %p756 = scmp.lt.s32.totalorder %s37, 1
        %s757 = scalar_select %p756, %s37, 1
        %s758 = smul.addr %s757, 4
        %s759 = smul.addr %s758, 4
        %s760 = scalar_lea.vmem %s10, %s759
        %p761 = pneg %p320
        %p762 = pneg %p317
        %p763 = scmp.lt.s32.totalorder %s37, 1
        %s764 = scalar_select %p763, %s37, 1
        %s765 = scalar_lea.vmem %s11, %s764
        %p766 = pneg %p346
        %p767 = pneg %p343
        %p768 = scmp.lt.s32.totalorder %s37, 1
        %s769 = scalar_select %p768, %s37, 1
        %s770 = scalar_lea.vmem %s12, %s769
        %p771 = pneg %p372
        %p772 = pneg %p369
        %p773 = scmp.lt.s32.totalorder %s37, 1
        %s774 = scalar_select %p773, %s37, 1
        %s775 = scalar_lea.vmem %s13, %s774
        %p776 = pneg %p398
        %p777 = pneg %p395
        %p778 = scmp.lt.s32.totalorder %s37, 1
        %s779 = scalar_select %p778, %s37, 1
        %s780 = smul.addr %s779, 4
        %s781 = smul.addr %s780, 4
        %s782 = scalar_lea.vmem %s14, %s781
        %p783 = pneg %p424
        %p784 = pneg %p421
        %p785 = scmp.lt.s32.totalorder %s37, 1
        %s786 = scalar_select %p785, %s37, 1
        %s787 = scalar_lea.vmem %s15, %s786
        %p788 = pneg %p450
        %p789 = pneg %p447
        %p790 = scmp.lt.s32.totalorder %s37, 1
        %s791 = scalar_select %p790, %s37, 1
        %s792 = smul.addr %s791, 16
        %s793 = smul.addr %s792, 4
        %s794 = scalar_lea.vmem %s16, %s793
        %p795 = pneg %p476
        %p796 = pneg %p473
        %p797 = scmp.lt.s32.totalorder %s37, 1
        %s798 = scalar_select %p797, %s37, 1
        %s799 = scalar_lea.vmem %s17, %s798
        %p800 = pneg %p502
        %p801 = pneg %p499
        %p802 = pneg %p528
        %p803 = pneg %p525
        %s804 = smul.u32 2, %s36
        %s805 = smul.u32 2, %s36
        %p806 = scmp.lt.s32.totalorder %s805, 1
        %s807 = scalar_select %p806, %s805, 1
        %s808 = smul.addr %s807, 8
        %s809 = scalar_lea.vmem %s1, %s808
        %s810 = smul.u32 2, %s36
        %s811 = smul.u32 2, %s36
        %p812 = scmp.lt.s32.totalorder %s811, 1
        %s813 = scalar_select %p812, %s811, 1
        %s814 = scalar_lea.vmem %s2, %s813
        %s815 = smul.u32 2, %s36
        %s816 = smul.u32 2, %s36
        %p817 = scmp.lt.s32.totalorder %s816, 1
        %s818 = scalar_select %p817, %s816, 1
        %s819 = smul.addr %s818, 8
        %s820 = scalar_lea.vmem %s3, %s819
        %s821 = smul.u32 2, %s36
        %s822 = smul.u32 2, %s36
        %p823 = scmp.lt.s32.totalorder %s822, 1
        %s824 = scalar_select %p823, %s822, 1
        %s825 = scalar_lea.vmem %s4, %s824
        %s826 = smul.u32 2, %s36
        %p827 = scmp.lt.s32.totalorder %s37, 1
        %s828 = scalar_select %p827, %s37, 1
        %s829 = scalar_lea.vmem %s6, %s828
        %p830 = scmp.lt.s32.totalorder %s37, 1
        %s831 = scalar_select %p830, %s37, 1
        %s832 = scalar_lea.vmem %s7, %s831
        %p833 = scmp.lt.s32.totalorder %s37, 1
        %s834 = scalar_select %p833, %s37, 1
        %s835 = smul.addr %s834, 4
        %s836 = smul.addr %s835, 4
        %s837 = scalar_lea.vmem %s8, %s836
        %p838 = scmp.lt.s32.totalorder %s37, 1
        %s839 = scalar_select %p838, %s37, 1
        %s840 = scalar_lea.vmem %s9, %s839
        %p841 = scmp.lt.s32.totalorder %s37, 1
        %s842 = scalar_select %p841, %s37, 1
        %s843 = smul.addr %s842, 4
        %s844 = smul.addr %s843, 4
        %s845 = scalar_lea.vmem %s10, %s844
        %p846 = scmp.lt.s32.totalorder %s37, 1
        %s847 = scalar_select %p846, %s37, 1
        %s848 = scalar_lea.vmem %s11, %s847
        %p849 = scmp.lt.s32.totalorder %s37, 1
        %s850 = scalar_select %p849, %s37, 1
        %s851 = scalar_lea.vmem %s12, %s850
        %p852 = scmp.lt.s32.totalorder %s37, 1
        %s853 = scalar_select %p852, %s37, 1
        %s854 = scalar_lea.vmem %s13, %s853
        %p855 = scmp.lt.s32.totalorder %s37, 1
        %s856 = scalar_select %p855, %s37, 1
        %s857 = smul.addr %s856, 4
        %s858 = smul.addr %s857, 4
        %s859 = scalar_lea.vmem %s14, %s858
        %p860 = scmp.lt.s32.totalorder %s37, 1
        %s861 = scalar_select %p860, %s37, 1
        %s862 = scalar_lea.vmem %s15, %s861
        %p863 = scmp.lt.s32.totalorder %s37, 1
        %s864 = scalar_select %p863, %s37, 1
        %s865 = smul.addr %s864, 16
        %s866 = smul.addr %s865, 4
        %s867 = scalar_lea.vmem %s16, %s866
        %p868 = scmp.lt.s32.totalorder %s37, 1
        %s869 = scalar_select %p868, %s37, 1
        %s870 = scalar_lea.vmem %s17, %s869
        %s871 = smul.u32 2, %s36
        %p873 = scmp.eq.s32.totalorder %s37, 0
        // Predicated region
        $region101: #{tpu_custom_call.1} parent=91 // pred_check
          %p874 = pneg %p873
        $region102: #{tpu_custom_call.1} parent=91 // pred_check_branch
          %876 = sbr.rel (%p874) target = $region104
        $region103: #{tpu_custom_call.1} parent=91 // pred_region
          %v877 = vld [vmem:[#allocation3] sm:$0xff]
          %v878 = vld [vmem:[#allocation3 + $0x8] sm:$0xff]
          %vm879 = vcmask 261120
          %880 = vst.msk [vmem:[#allocation8] sm:$0xff] %vm879, %v877
          %881 = vst.msk [vmem:[#allocation8 + $0x8] sm:$0xff] %vm879, %v878
          %v882 = vld [vmem:[%s809] sm:$0xff]
          %v883 = vld [vmem:[%s809 + $0x8] sm:$0xff]
          %v884 = vld [vmem:[%s814] sm:$0x1]
          %v885 = vld [vmem:[%s814 + $0x1] sm:$0x1]
          %887 = vset.pattern.permute.xlu0 0
          %888 = vperm.xlu0 %887, %v882
          %v889 = vpop.permute.xlu0 %888
          %892 = vset.pattern.permute.xlu0 0
          %893 = vperm.xlu0 %892, %v883
          %v894 = vpop.permute.xlu0 %893
          %v898 = vlaneseq
          %v899 = vshrl.u32 %v898, 7
          %v900 = vsub.s32 0, %v899
          %v901 = vrot.slane %v884, %v900
          %v902 = vlaneseq
          %v903 = vshrl.u32 %v902, 7
          %v904 = vsub.s32 0, %v903
          %v905 = vrot.slane %v885, %v904
          %v908 = vsub.f32 %v889, %v901
          %v909 = vsub.f32 %v894, %v905
          %v910 = vld [vmem:[%s820] sm:$0xff]
          %v911 = vld [vmem:[%s820 + $0x8] sm:$0xff]
          %v912 = vld [vmem:[%s825] sm:$0x1]
          %v913 = vld [vmem:[%s825 + $0x1] sm:$0x1]
          %915 = vset.pattern.permute.xlu0 0
          %916 = vperm.xlu0 %915, %v910
          %v917 = vpop.permute.xlu0 %916
          %920 = vset.pattern.permute.xlu0 0
          %921 = vperm.xlu0 %920, %v911
          %v922 = vpop.permute.xlu0 %921
          %v926 = vlaneseq
          %v927 = vshrl.u32 %v926, 7
          %v928 = vsub.s32 0, %v927
          %v929 = vrot.slane %v912, %v928
          %v930 = vlaneseq
          %v931 = vshrl.u32 %v930, 7
          %v932 = vsub.s32 0, %v931
          %v933 = vrot.slane %v913, %v932
          %v936 = vsub.f32 %v917, %v929
          %v937 = vsub.f32 %v922, %v933
          %v938 = vmul.f32 %v908, %v908
          %v939 = vmul.f32 %v909, %v909
          %v940 = vmul.f32 %v936, %v936
          %v941 = vmul.f32 %v937, %v937
          %v942 = vadd.f32 %v938, %v940
          %v943 = vadd.f32 %v939, %v941
          %v944 = vmul.f32 %v942, -0.001953125
          %v945 = vmul.f32 %v943, -0.001953125
          %v946 = vmul.f32 %v944, 1.442695
          %v947 = vpow.pop %v946
          %v948 = vmul.f32 %v945, 1.442695
          %v949 = vpow.pop %v948
          %vm950 = vcmask 64512
          %v951 = vsel %vm950, %v947, 0.0
          %952 = vadd.xlane.f32.xlu0 %v951
          %v953 = vpop.xlane.xlu0 %952
          %v954 = vsel %vm950, %v949, 0.0
          %955 = vadd.xlane.f32.xlu0 %v954
          %v956 = vpop.xlane.xlu0 %955
          %v957 = vrcp.pop %v953
          %v958 = vrcp.pop %v956
          %v959 = vmul.f32 %v947, %v957
          %v960 = vmul.f32 %v949, %v958
          %v961 = vpack.c.bf16 %v959, %v959
          %v962 = vpack.c.bf16 %v960, %v960
          %vm963 = vcmask 60416
          %964 = vst.msk [vmem:[#allocation2] sm:$0xf] %vm963, %v961
          %965 = vst.msk [vmem:[#allocation2 + $0x4] sm:$0xf] %vm963, %v962
        $region104: #{tpu_custom_call.1} parent=91 // pred_fallthru
          _
        %v966 = vld [vmem:[#allocation8] sm:$0xff]
        %v967 = vld [vmem:[#allocation8 + $0x8] sm:$0xff]
        %vm968 = vcmask 261120
        %v969 = vsel %vm968, %v966, 0.0
        %970 = vadd.xlane.f32.xlu0 %v969
        %v971 = vpop.xlane.xlu0 %970
        %v972 = vsel %vm968, %v967, 0.0
        %973 = vadd.xlane.f32.xlu0 %v972
        %v974 = vpop.xlane.xlu0 %973
        %v975 = vrcp.pop 32.0
        %v976 = vmul.f32 %v971, %v975
        %v977 = vmul.f32 %v974, %v975
        %v978 = vsub.f32 %v966, %v976
        %v979 = vsub.f32 %v967, %v977
        %v980 = vmul.f32 %v978, %v978
        %v981 = vmul.f32 %v979, %v979
        %v982 = vsel %vm968, %v980, 0.0
        %983 = vadd.xlane.f32.xlu0 %v982
        %v984 = vpop.xlane.xlu0 %983
        %v985 = vsel %vm968, %v981, 0.0
        %986 = vadd.xlane.f32.xlu0 %v985
        %v987 = vpop.xlane.xlu0 %986
        %v988 = vmul.f32 %v984, %v975
        %v989 = vmul.f32 %v987, %v975
        %v990 = vadd.f32 %v988, 1e-05
        %v991 = vadd.f32 %v989, 1e-05
        %v992 = vrsqrt.pop %v990
        %v993 = vrsqrt.pop %v991
        %v994 = vmul.f32 %v978, %v992
        %v995 = vmul.f32 %v979, %v993
        %v996 = vld [vmem:[%s829] sm:$0x1]
        %v998 = vlaneseq
        %v999 = vshrl.u32 %v998, 7
        %v1000 = vsub.s32 0, %v999
        %v1001 = vrot.slane %v996, %v1000
        %v1003 = vmul.f32 %v994, %v1001
        %v1004 = vmul.f32 %v995, %v1001
        %v1005 = vld [vmem:[%s832] sm:$0x1]
        %v1007 = vlaneseq
        %v1008 = vshrl.u32 %v1007, 7
        %v1009 = vsub.s32 0, %v1008
        %v1010 = vrot.slane %v1005, %v1009
        %v1012 = vadd.f32 %v1003, %v1010
        %v1013 = vadd.f32 %v1004, %v1010
        %v1014 = vpack.c.bf16 %v1013, %v1012
        %v1015 = vld [vmem:[%s837] sm:$0xf]
        %v1016 = vld [vmem:[%s837 + $0x4] sm:$0xf]
        %v1017 = vld [vmem:[%s837 + $0x8] sm:$0xf]
        %v1018 = vld [vmem:[%s837 + $0xc] sm:$0xf]
        %v1019 = vld [vmem:[%s840] sm:$0x1]
        %v1021 = vlaneseq
        %v1022 = vshrl.u32 %v1021, 7
        %v1023 = vsub.s32 0, %v1022
        %v1024 = vrot.slane %v1019, %v1023
        %v1030 = vunpack.c.l.b16 %v1015
        %v1031 = vunpack.c.l.b16 %v1016
        %v1032 = vunpack.c.l.b16 %v1017
        %v1033 = vunpack.c.l.b16 %v1018
        %v1034 = vpack.c.b16 %v1031, %v1030
        %v1035 = vpack.c.b16 %v1033, %v1032
        %v1039 = vsel %vm968, %v1014, 0
        %1041 = vmatprep.subr.bf16.mxu0 0
        %1042 = vmatpush1.bf16.msra.mxu0 %v1034
        %1043 = vmatprep.subr.bf16.mxu0 0
        %1044 = vmatpush1.bf16.msra.mxu0 %v1035
        %1045 = vmatprep.subr.bf16.mxu0 0
        %1046 = vmatpush1.bf16.msra.mxu0 0
        %1047 = vmatprep.subr.bf16.mxu0 0
        %1048 = vmatpush1.bf16.msra.mxu0 0
        %1049 = vmatprep.subr.bf16.mxu0 0
        %1050 = vmatpush1.bf16.msra.mxu0 0
        %1051 = vmatprep.subr.bf16.mxu0 0
        %1052 = vmatpush1.bf16.msra.mxu0 0
        %1053 = vmatprep.subr.bf16.mxu0 0
        %1054 = vmatpush1.bf16.msra.mxu0 0
        %1055 = vmatprep.subr.bf16.mxu0 0
        %1056 = vmatpush1.bf16.msra.mxu0 0
        %1057 = vmatprep.subr.bf16.mxu0 0
        %1058 = vmatpush1.bf16.msra.mxu0 0
        %1059 = vmatprep.subr.bf16.mxu0 0
        %1060 = vmatpush1.bf16.msra.mxu0 0
        %1061 = vmatprep.subr.bf16.mxu0 0
        %1062 = vmatpush1.bf16.msra.mxu0 0
        %1063 = vmatprep.subr.bf16.mxu0 0
        %1064 = vmatpush1.bf16.msra.mxu0 0
        %1065 = vmatprep.subr.bf16.mxu0 0
        %1066 = vmatpush1.bf16.msra.mxu0 0
        %1067 = vmatprep.subr.bf16.mxu0 0
        %1068 = vmatpush1.bf16.msra.mxu0 0
        %1069 = vmatprep.subr.bf16.mxu0 0
        %1070 = vmatpush1.bf16.msra.mxu0 0
        %1071 = vmatprep.subr.bf16.mxu0 0
        %1072 = vmatpush1.bf16.msra.mxu0 0
        %1073 = vmatprep.mubr.bf16.mxu0 0
        %1074 = vmatmul.mubr.bf16.gmra.mrb[0].mxu0 %v1039
        %v1075 = vpop.f32.mrb[0].mxu0
        %v1076 = vadd.f32 %v1024, %v1075
        %v1077 = vpop.f32.mrb[0].mxu0
        %v1078 = vpop.f32.mrb[0].mxu0
        %v1079 = vadd.f32 %v1024, %v1078
        %v1080 = vpop.f32.mrb[0].mxu0
        %1081 = vdwg.mxu0
        %v1082 = vpack.c.bf16 %v1076, %v1076
        %v1083 = vpack.c.bf16 %v1079, %v1079
        %1085 = vrot.lane.b32.xlu0 %v1082, 96
        %v1086 = vpop.permute.xlu0 %1085
        %vm1087 = vcmask 31744
        %v1089 = vsel %vm1087, %v1082, 0
        %v1092 = vsel %vm1087, %v1086, 0
        %1094 = vmatprep.subr.bf16.mxu0 0
        %1095 = vmatpush1.bf16.xpose.msra.mxu0 %v1092
        %1096 = vmatprep.subr.bf16.mxu0 0
        %1097 = vmatpush1.bf16.xpose.msra.mxu0 0
        %1098 = vmatprep.subr.bf16.mxu0 0
        %1099 = vmatpush1.bf16.xpose.msra.mxu0 0
        %1100 = vmatprep.subr.bf16.mxu0 0
        %1101 = vmatpush1.bf16.xpose.msra.mxu0 0
        %1102 = vmatprep.subr.bf16.mxu0 0
        %1103 = vmatpush1.bf16.xpose.msra.mxu0 0
        %1104 = vmatprep.subr.bf16.mxu0 0
        %1105 = vmatpush1.bf16.xpose.msra.mxu0 0
        %1106 = vmatprep.subr.bf16.mxu0 0
        %1107 = vmatpush1.bf16.xpose.msra.mxu0 0
        %1108 = vmatprep.subr.bf16.mxu0 0
        %1109 = vmatpush1.bf16.xpose.msra.mxu0 0
        %1110 = vmatprep.subr.bf16.mxu0 0
        %1111 = vmatpush1.bf16.xpose.msra.mxu0 0
        %1112 = vmatprep.subr.bf16.mxu0 0
        %1113 = vmatpush1.bf16.xpose.msra.mxu0 0
        %1114 = vmatprep.subr.bf16.mxu0 0
        %1115 = vmatpush1.bf16.xpose.msra.mxu0 0
        %1116 = vmatprep.subr.bf16.mxu0 0
        %1117 = vmatpush1.bf16.xpose.msra.mxu0 0
        %1118 = vmatprep.subr.bf16.mxu0 0
        %1119 = vmatpush1.bf16.xpose.msra.mxu0 0
        %1120 = vmatprep.subr.bf16.mxu0 0
        %1121 = vmatpush1.bf16.xpose.msra.mxu0 0
        %1122 = vmatprep.subr.bf16.mxu0 0
        %1123 = vmatpush1.bf16.xpose.msra.mxu0 0
        %1124 = vmatprep.subr.bf16.mxu0 0
        %1125 = vmatpush1.bf16.xpose.msra.mxu0 0
        %1126 = vmatprep.mubr.bf16.mxu0 0
        %1127 = vmatmul.mubr.bf16.gmra.mrb[0].mxu0 %v1089
        %v1128 = vpop.f32.mrb[0].mxu0
        %v1129 = vadd.f32 0.0, %v1128
        %v1130 = vpop.f32.mrb[0].mxu0
        %v1131 = vpop.f32.mrb[0].mxu0
        %v1132 = vpop.f32.mrb[0].mxu0
        %1133 = vdwg.mxu0
        %1135 = vrot.lane.b32.xlu0 %v1083, 96
        %v1136 = vpop.permute.xlu0 %1135
        %v1138 = vsel %vm1087, %v1083, 0
        %v1141 = vsel %vm1087, %v1136, 0
        %1143 = vmatprep.subr.bf16.mxu0 0
        %1144 = vmatpush1.bf16.xpose.msra.mxu0 %v1141
        %1145 = vmatprep.subr.bf16.mxu0 0
        %1146 = vmatpush1.bf16.xpose.msra.mxu0 0
        %1147 = vmatprep.subr.bf16.mxu0 0
        %1148 = vmatpush1.bf16.xpose.msra.mxu0 0
        %1149 = vmatprep.subr.bf16.mxu0 0
        %1150 = vmatpush1.bf16.xpose.msra.mxu0 0
        %1151 = vmatprep.subr.bf16.mxu0 0
        %1152 = vmatpush1.bf16.xpose.msra.mxu0 0
        %1153 = vmatprep.subr.bf16.mxu0 0
        %1154 = vmatpush1.bf16.xpose.msra.mxu0 0
        %1155 = vmatprep.subr.bf16.mxu0 0
        %1156 = vmatpush1.bf16.xpose.msra.mxu0 0
        %1157 = vmatprep.subr.bf16.mxu0 0
        %1158 = vmatpush1.bf16.xpose.msra.mxu0 0
        %1159 = vmatprep.subr.bf16.mxu0 0
        %1160 = vmatpush1.bf16.xpose.msra.mxu0 0
        %1161 = vmatprep.subr.bf16.mxu0 0
        %1162 = vmatpush1.bf16.xpose.msra.mxu0 0
        %1163 = vmatprep.subr.bf16.mxu0 0
        %1164 = vmatpush1.bf16.xpose.msra.mxu0 0
        %1165 = vmatprep.subr.bf16.mxu0 0
        %1166 = vmatpush1.bf16.xpose.msra.mxu0 0
        %1167 = vmatprep.subr.bf16.mxu0 0
        %1168 = vmatpush1.bf16.xpose.msra.mxu0 0
        %1169 = vmatprep.subr.bf16.mxu0 0
        %1170 = vmatpush1.bf16.xpose.msra.mxu0 0
        %1171 = vmatprep.subr.bf16.mxu0 0
        %1172 = vmatpush1.bf16.xpose.msra.mxu0 0
        %1173 = vmatprep.subr.bf16.mxu0 0
        %1174 = vmatpush1.bf16.xpose.msra.mxu0 0
        %1175 = vmatprep.mubr.bf16.mxu0 0
        %1176 = vmatmul.mubr.bf16.gmra.mrb[0].mxu0 %v1138
        %v1177 = vpop.f32.mrb[0].mxu0
        %v1178 = vadd.f32 0.0, %v1177
        %v1179 = vpop.f32.mrb[0].mxu0
        %v1180 = vpop.f32.mrb[0].mxu0
        %v1181 = vpop.f32.mrb[0].mxu0
        %1182 = vdwg.mxu0
        %v1183 = vmul.f32 %v1129, 0.5
        %v1184 = vmul.f32 %v1178, 0.5
        %vm1185 = vcmask 64512
        %v1186 = vsel %vm1185, %v1183, -inf
        %1187 = vmax.xlane.f32.xlu0 %v1186
        %v1188 = vpop.xlane.xlu0 %1187
        %v1189 = vsel %vm1185, %v1184, -inf
        %1190 = vmax.xlane.f32.xlu0 %v1189
        %v1191 = vpop.xlane.xlu0 %1190
        %v1192 = vsub.f32 %v1183, %v1188
        %v1193 = vsub.f32 %v1184, %v1191
        %v1194 = vmul.f32 %v1192, 1.442695
        %v1195 = vpow.pop %v1194
        %v1196 = vmul.f32 %v1193, 1.442695
        %v1197 = vpow.pop %v1196
        %v1198 = vsel %vm1185, %v1195, 0.0
        %1199 = vadd.xlane.f32.xlu0 %v1198
        %v1200 = vpop.xlane.xlu0 %1199
        %v1201 = vsel %vm1185, %v1197, 0.0
        %1202 = vadd.xlane.f32.xlu0 %v1201
        %v1203 = vpop.xlane.xlu0 %1202
        %v1204 = vrcp.pop %v1200
        %v1205 = vrcp.pop %v1203
        %v1206 = vmul.f32 %v1195, %v1204
        %v1207 = vmul.f32 %v1197, %v1205
        %v1208 = vpack.c.bf16 %v1206, %v1206
        %v1209 = vpack.c.bf16 %v1207, %v1207
        %1210 = vrot.lane.b32.xlu0 %v1082, 64
        %v1211 = vpop.permute.xlu0 %1210
        %v1213 = vsel %vm1185, %v1208, 0
        %vm1215 = vcmask 1043456
        %v1217 = vsel %vm1215, %v1211, 0
        %1219 = vmatprep.subr.bf16.mxu0 0
        %1220 = vmatpush1.bf16.msra.mxu0 %v1217
        %1221 = vmatprep.subr.bf16.mxu0 0
        %1222 = vmatpush1.bf16.msra.mxu0 0
        %1223 = vmatprep.subr.bf16.mxu0 0
        %1224 = vmatpush1.bf16.msra.mxu0 0
        %1225 = vmatprep.subr.bf16.mxu0 0
        %1226 = vmatpush1.bf16.msra.mxu0 0
        %1227 = vmatprep.subr.bf16.mxu0 0
        %1228 = vmatpush1.bf16.msra.mxu0 0
        %1229 = vmatprep.subr.bf16.mxu0 0
        %1230 = vmatpush1.bf16.msra.mxu0 0
        %1231 = vmatprep.subr.bf16.mxu0 0
        %1232 = vmatpush1.bf16.msra.mxu0 0
        %1233 = vmatprep.subr.bf16.mxu0 0
        %1234 = vmatpush1.bf16.msra.mxu0 0
        %1235 = vmatprep.subr.bf16.mxu0 0
        %1236 = vmatpush1.bf16.msra.mxu0 0
        %1237 = vmatprep.subr.bf16.mxu0 0
        %1238 = vmatpush1.bf16.msra.mxu0 0
        %1239 = vmatprep.subr.bf16.mxu0 0
        %1240 = vmatpush1.bf16.msra.mxu0 0
        %1241 = vmatprep.subr.bf16.mxu0 0
        %1242 = vmatpush1.bf16.msra.mxu0 0
        %1243 = vmatprep.subr.bf16.mxu0 0
        %1244 = vmatpush1.bf16.msra.mxu0 0
        %1245 = vmatprep.subr.bf16.mxu0 0
        %1246 = vmatpush1.bf16.msra.mxu0 0
        %1247 = vmatprep.subr.bf16.mxu0 0
        %1248 = vmatpush1.bf16.msra.mxu0 0
        %1249 = vmatprep.subr.bf16.mxu0 0
        %1250 = vmatpush1.bf16.msra.mxu0 0
        %1251 = vmatprep.mubr.bf16.mxu0 0
        %1252 = vmatmul.mubr.bf16.gmra.mrb[0].mxu0 %v1213
        %v1253 = vpop.f32.mrb[0].mxu0
        %v1254 = vadd.f32 0.0, %v1253
        %v1255 = vpop.f32.mrb[0].mxu0
        %v1256 = vpop.f32.mrb[0].mxu0
        %v1257 = vpop.f32.mrb[0].mxu0
        %1258 = vdwg.mxu0
        %1259 = vrot.lane.b32.xlu0 %v1083, 64
        %v1260 = vpop.permute.xlu0 %1259
        %v1262 = vsel %vm1185, %v1209, 0
        %v1265 = vsel %vm1215, %v1260, 0
        %1267 = vmatprep.subr.bf16.mxu0 0
        %1268 = vmatpush1.bf16.msra.mxu0 %v1265
        %1269 = vmatprep.subr.bf16.mxu0 0
        %1270 = vmatpush1.bf16.msra.mxu0 0
        %1271 = vmatprep.subr.bf16.mxu0 0
        %1272 = vmatpush1.bf16.msra.mxu0 0
        %1273 = vmatprep.subr.bf16.mxu0 0
        %1274 = vmatpush1.bf16.msra.mxu0 0
        %1275 = vmatprep.subr.bf16.mxu0 0
        %1276 = vmatpush1.bf16.msra.mxu0 0
        %1277 = vmatprep.subr.bf16.mxu0 0
        %1278 = vmatpush1.bf16.msra.mxu0 0
        %1279 = vmatprep.subr.bf16.mxu0 0
        %1280 = vmatpush1.bf16.msra.mxu0 0
        %1281 = vmatprep.subr.bf16.mxu0 0
        %1282 = vmatpush1.bf16.msra.mxu0 0
        %1283 = vmatprep.subr.bf16.mxu0 0
        %1284 = vmatpush1.bf16.msra.mxu0 0
        %1285 = vmatprep.subr.bf16.mxu0 0
        %1286 = vmatpush1.bf16.msra.mxu0 0
        %1287 = vmatprep.subr.bf16.mxu0 0
        %1288 = vmatpush1.bf16.msra.mxu0 0
        %1289 = vmatprep.subr.bf16.mxu0 0
        %1290 = vmatpush1.bf16.msra.mxu0 0
        %1291 = vmatprep.subr.bf16.mxu0 0
        %1292 = vmatpush1.bf16.msra.mxu0 0
        %1293 = vmatprep.subr.bf16.mxu0 0
        %1294 = vmatpush1.bf16.msra.mxu0 0
        %1295 = vmatprep.subr.bf16.mxu0 0
        %1296 = vmatpush1.bf16.msra.mxu0 0
        %1297 = vmatprep.subr.bf16.mxu0 0
        %1298 = vmatpush1.bf16.msra.mxu0 0
        %1299 = vmatprep.mubr.bf16.mxu0 0
        %1300 = vmatmul.mubr.bf16.gmra.mrb[0].mxu0 %v1262
        %v1301 = vpop.f32.mrb[0].mxu0
        %v1302 = vadd.f32 0.0, %v1301
        %v1303 = vpop.f32.mrb[0].mxu0
        %v1304 = vpop.f32.mrb[0].mxu0
        %v1305 = vpop.f32.mrb[0].mxu0
        %1306 = vdwg.mxu0
        %1307 = vrot.lane.b32.xlu0 %v1082, 124
        %v1308 = vpop.permute.xlu0 %1307
        %1309 = vrot.lane.b32.xlu0 %v1082, 92
        %v1310 = vpop.permute.xlu0 %1309
        %v1312 = vsel %vm1087, %v1308, 0
        %v1315 = vsel %vm1087, %v1310, 0
        %1317 = vmatprep.subr.bf16.mxu0 0
        %1318 = vmatpush1.bf16.xpose.msra.mxu0 %v1315
        %1319 = vmatprep.subr.bf16.mxu0 0
        %1320 = vmatpush1.bf16.xpose.msra.mxu0 0
        %1321 = vmatprep.subr.bf16.mxu0 0
        %1322 = vmatpush1.bf16.xpose.msra.mxu0 0
        %1323 = vmatprep.subr.bf16.mxu0 0
        %1324 = vmatpush1.bf16.xpose.msra.mxu0 0
        %1325 = vmatprep.subr.bf16.mxu0 0
        %1326 = vmatpush1.bf16.xpose.msra.mxu0 0
        %1327 = vmatprep.subr.bf16.mxu0 0
        %1328 = vmatpush1.bf16.xpose.msra.mxu0 0
        %1329 = vmatprep.subr.bf16.mxu0 0
        %1330 = vmatpush1.bf16.xpose.msra.mxu0 0
        %1331 = vmatprep.subr.bf16.mxu0 0
        %1332 = vmatpush1.bf16.xpose.msra.mxu0 0
        %1333 = vmatprep.subr.bf16.mxu0 0
        %1334 = vmatpush1.bf16.xpose.msra.mxu0 0
        %1335 = vmatprep.subr.bf16.mxu0 0
        %1336 = vmatpush1.bf16.xpose.msra.mxu0 0
        %1337 = vmatprep.subr.bf16.mxu0 0
        %1338 = vmatpush1.bf16.xpose.msra.mxu0 0
        %1339 = vmatprep.subr.bf16.mxu0 0
        %1340 = vmatpush1.bf16.xpose.msra.mxu0 0
        %1341 = vmatprep.subr.bf16.mxu0 0
        %1342 = vmatpush1.bf16.xpose.msra.mxu0 0
        %1343 = vmatprep.subr.bf16.mxu0 0
        %1344 = vmatpush1.bf16.xpose.msra.mxu0 0
        %1345 = vmatprep.subr.bf16.mxu0 0
        %1346 = vmatpush1.bf16.xpose.msra.mxu0 0
        %1347 = vmatprep.subr.bf16.mxu0 0
        %1348 = vmatpush1.bf16.xpose.msra.mxu0 0
        %1349 = vmatprep.mubr.bf16.mxu0 0
        %1350 = vmatmul.mubr.bf16.gmra.mrb[0].mxu0 %v1312
        %v1351 = vpop.f32.mrb[0].mxu0
        %v1352 = vadd.f32 0.0, %v1351
        %v1353 = vpop.f32.mrb[0].mxu0
        %v1354 = vpop.f32.mrb[0].mxu0
        %v1355 = vpop.f32.mrb[0].mxu0
        %1356 = vdwg.mxu0
        %1357 = vrot.lane.b32.xlu0 %v1083, 124
        %v1358 = vpop.permute.xlu0 %1357
        %1359 = vrot.lane.b32.xlu0 %v1083, 92
        %v1360 = vpop.permute.xlu0 %1359
        %v1362 = vsel %vm1087, %v1358, 0
        %v1365 = vsel %vm1087, %v1360, 0
        %1367 = vmatprep.subr.bf16.mxu0 0
        %1368 = vmatpush1.bf16.xpose.msra.mxu0 %v1365
        %1369 = vmatprep.subr.bf16.mxu0 0
        %1370 = vmatpush1.bf16.xpose.msra.mxu0 0
        %1371 = vmatprep.subr.bf16.mxu0 0
        %1372 = vmatpush1.bf16.xpose.msra.mxu0 0
        %1373 = vmatprep.subr.bf16.mxu0 0
        %1374 = vmatpush1.bf16.xpose.msra.mxu0 0
        %1375 = vmatprep.subr.bf16.mxu0 0
        %1376 = vmatpush1.bf16.xpose.msra.mxu0 0
        %1377 = vmatprep.subr.bf16.mxu0 0
        %1378 = vmatpush1.bf16.xpose.msra.mxu0 0
        %1379 = vmatprep.subr.bf16.mxu0 0
        %1380 = vmatpush1.bf16.xpose.msra.mxu0 0
        %1381 = vmatprep.subr.bf16.mxu0 0
        %1382 = vmatpush1.bf16.xpose.msra.mxu0 0
        %1383 = vmatprep.subr.bf16.mxu0 0
        %1384 = vmatpush1.bf16.xpose.msra.mxu0 0
        %1385 = vmatprep.subr.bf16.mxu0 0
        %1386 = vmatpush1.bf16.xpose.msra.mxu0 0
        %1387 = vmatprep.subr.bf16.mxu0 0
        %1388 = vmatpush1.bf16.xpose.msra.mxu0 0
        %1389 = vmatprep.subr.bf16.mxu0 0
        %1390 = vmatpush1.bf16.xpose.msra.mxu0 0
        %1391 = vmatprep.subr.bf16.mxu0 0
        %1392 = vmatpush1.bf16.xpose.msra.mxu0 0
        %1393 = vmatprep.subr.bf16.mxu0 0
        %1394 = vmatpush1.bf16.xpose.msra.mxu0 0
        %1395 = vmatprep.subr.bf16.mxu0 0
        %1396 = vmatpush1.bf16.xpose.msra.mxu0 0
        %1397 = vmatprep.subr.bf16.mxu0 0
        %1398 = vmatpush1.bf16.xpose.msra.mxu0 0
        %1399 = vmatprep.mubr.bf16.mxu0 0
        %1400 = vmatmul.mubr.bf16.gmra.mrb[0].mxu0 %v1362
        %v1401 = vpop.f32.mrb[0].mxu0
        %v1402 = vadd.f32 0.0, %v1401
        %v1403 = vpop.f32.mrb[0].mxu0
        %v1404 = vpop.f32.mrb[0].mxu0
        %v1405 = vpop.f32.mrb[0].mxu0
        %1406 = vdwg.mxu0
        %v1407 = vmul.f32 %v1352, 0.5
        %v1408 = vmul.f32 %v1402, 0.5
        %v1409 = vsel %vm1185, %v1407, -inf
        %1410 = vmax.xlane.f32.xlu0 %v1409
        %v1411 = vpop.xlane.xlu0 %1410
        %v1412 = vsel %vm1185, %v1408, -inf
        %1413 = vmax.xlane.f32.xlu0 %v1412
        %v1414 = vpop.xlane.xlu0 %1413
        %v1415 = vsub.f32 %v1407, %v1411
        %v1416 = vsub.f32 %v1408, %v1414
        %v1417 = vmul.f32 %v1415, 1.442695
        %v1418 = vpow.pop %v1417
        %v1419 = vmul.f32 %v1416, 1.442695
        %v1420 = vpow.pop %v1419
        %v1421 = vsel %vm1185, %v1418, 0.0
        %1422 = vadd.xlane.f32.xlu0 %v1421
        %v1423 = vpop.xlane.xlu0 %1422
        %v1424 = vsel %vm1185, %v1420, 0.0
        %1425 = vadd.xlane.f32.xlu0 %v1424
        %v1426 = vpop.xlane.xlu0 %1425
        %v1427 = vrcp.pop %v1423
        %v1428 = vrcp.pop %v1426
        %v1429 = vmul.f32 %v1418, %v1427
        %v1430 = vmul.f32 %v1420, %v1428
        %v1431 = vpack.c.bf16 %v1429, %v1429
        %v1432 = vpack.c.bf16 %v1430, %v1430
        %1433 = vrot.lane.b32.xlu0 %v1082, 60
        %v1434 = vpop.permute.xlu0 %1433
        %v1436 = vsel %vm1185, %v1431, 0
        %v1439 = vsel %vm1215, %v1434, 0
        %1441 = vmatprep.subr.bf16.mxu0 0
        %1442 = vmatpush1.bf16.msra.mxu0 %v1439
        %1443 = vmatprep.subr.bf16.mxu0 0
        %1444 = vmatpush1.bf16.msra.mxu0 0
        %1445 = vmatprep.subr.bf16.mxu0 0
        %1446 = vmatpush1.bf16.msra.mxu0 0
        %1447 = vmatprep.subr.bf16.mxu0 0
        %1448 = vmatpush1.bf16.msra.mxu0 0
        %1449 = vmatprep.subr.bf16.mxu0 0
        %1450 = vmatpush1.bf16.msra.mxu0 0
        %1451 = vmatprep.subr.bf16.mxu0 0
        %1452 = vmatpush1.bf16.msra.mxu0 0
        %1453 = vmatprep.subr.bf16.mxu0 0
        %1454 = vmatpush1.bf16.msra.mxu0 0
        %1455 = vmatprep.subr.bf16.mxu0 0
        %1456 = vmatpush1.bf16.msra.mxu0 0
        %1457 = vmatprep.subr.bf16.mxu0 0
        %1458 = vmatpush1.bf16.msra.mxu0 0
        %1459 = vmatprep.subr.bf16.mxu0 0
        %1460 = vmatpush1.bf16.msra.mxu0 0
        %1461 = vmatprep.subr.bf16.mxu0 0
        %1462 = vmatpush1.bf16.msra.mxu0 0
        %1463 = vmatprep.subr.bf16.mxu0 0
        %1464 = vmatpush1.bf16.msra.mxu0 0
        %1465 = vmatprep.subr.bf16.mxu0 0
        %1466 = vmatpush1.bf16.msra.mxu0 0
        %1467 = vmatprep.subr.bf16.mxu0 0
        %1468 = vmatpush1.bf16.msra.mxu0 0
        %1469 = vmatprep.subr.bf16.mxu0 0
        %1470 = vmatpush1.bf16.msra.mxu0 0
        %1471 = vmatprep.subr.bf16.mxu0 0
        %1472 = vmatpush1.bf16.msra.mxu0 0
        %1473 = vmatprep.mubr.bf16.mxu0 0
        %1474 = vmatmul.mubr.bf16.gmra.mrb[0].mxu0 %v1436
        %v1475 = vpop.f32.mrb[0].mxu0
        %v1476 = vadd.f32 0.0, %v1475
        %v1477 = vpop.f32.mrb[0].mxu0
        %v1478 = vpop.f32.mrb[0].mxu0
        %v1479 = vpop.f32.mrb[0].mxu0
        %1480 = vdwg.mxu0
        %1481 = vrot.lane.b32.xlu0 %v1083, 60
        %v1482 = vpop.permute.xlu0 %1481
        %v1484 = vsel %vm1185, %v1432, 0
        %v1487 = vsel %vm1215, %v1482, 0
        %1489 = vmatprep.subr.bf16.mxu0 0
        %1490 = vmatpush1.bf16.msra.mxu0 %v1487
        %1491 = vmatprep.subr.bf16.mxu0 0
        %1492 = vmatpush1.bf16.msra.mxu0 0
        %1493 = vmatprep.subr.bf16.mxu0 0
        %1494 = vmatpush1.bf16.msra.mxu0 0
        %1495 = vmatprep.subr.bf16.mxu0 0
        %1496 = vmatpush1.bf16.msra.mxu0 0
        %1497 = vmatprep.subr.bf16.mxu0 0
        %1498 = vmatpush1.bf16.msra.mxu0 0
        %1499 = vmatprep.subr.bf16.mxu0 0
        %1500 = vmatpush1.bf16.msra.mxu0 0
        %1501 = vmatprep.subr.bf16.mxu0 0
        %1502 = vmatpush1.bf16.msra.mxu0 0
        %1503 = vmatprep.subr.bf16.mxu0 0
        %1504 = vmatpush1.bf16.msra.mxu0 0
        %1505 = vmatprep.subr.bf16.mxu0 0
        %1506 = vmatpush1.bf16.msra.mxu0 0
        %1507 = vmatprep.subr.bf16.mxu0 0
        %1508 = vmatpush1.bf16.msra.mxu0 0
        %1509 = vmatprep.subr.bf16.mxu0 0
        %1510 = vmatpush1.bf16.msra.mxu0 0
        %1511 = vmatprep.subr.bf16.mxu0 0
        %1512 = vmatpush1.bf16.msra.mxu0 0
        %1513 = vmatprep.subr.bf16.mxu0 0
        %1514 = vmatpush1.bf16.msra.mxu0 0
        %1515 = vmatprep.subr.bf16.mxu0 0
        %1516 = vmatpush1.bf16.msra.mxu0 0
        %1517 = vmatprep.subr.bf16.mxu0 0
        %1518 = vmatpush1.bf16.msra.mxu0 0
        %1519 = vmatprep.subr.bf16.mxu0 0
        %1520 = vmatpush1.bf16.msra.mxu0 0
        %1521 = vmatprep.mubr.bf16.mxu0 0
        %1522 = vmatmul.mubr.bf16.gmra.mrb[0].mxu0 %v1484
        %v1523 = vpop.f32.mrb[0].mxu0
        %v1524 = vadd.f32 0.0, %v1523
        %v1525 = vpop.f32.mrb[0].mxu0
        %v1526 = vpop.f32.mrb[0].mxu0
        %v1527 = vpop.f32.mrb[0].mxu0
        %1528 = vdwg.mxu0
        %1529 = vrot.lane.b32.xlu0 %v1082, 120
        %v1530 = vpop.permute.xlu0 %1529
        %1531 = vrot.lane.b32.xlu0 %v1082, 88
        %v1532 = vpop.permute.xlu0 %1531
        %v1534 = vsel %vm1087, %v1530, 0
        %v1537 = vsel %vm1087, %v1532, 0
        %1539 = vmatprep.subr.bf16.mxu0 0
        %1540 = vmatpush1.bf16.xpose.msra.mxu0 %v1537
        %1541 = vmatprep.subr.bf16.mxu0 0
        %1542 = vmatpush1.bf16.xpose.msra.mxu0 0
        %1543 = vmatprep.subr.bf16.mxu0 0
        %1544 = vmatpush1.bf16.xpose.msra.mxu0 0
        %1545 = vmatprep.subr.bf16.mxu0 0
        %1546 = vmatpush1.bf16.xpose.msra.mxu0 0
        %1547 = vmatprep.subr.bf16.mxu0 0
        %1548 = vmatpush1.bf16.xpose.msra.mxu0 0
        %1549 = vmatprep.subr.bf16.mxu0 0
        %1550 = vmatpush1.bf16.xpose.msra.mxu0 0
        %1551 = vmatprep.subr.bf16.mxu0 0
        %1552 = vmatpush1.bf16.xpose.msra.mxu0 0
        %1553 = vmatprep.subr.bf16.mxu0 0
        %1554 = vmatpush1.bf16.xpose.msra.mxu0 0
        %1555 = vmatprep.subr.bf16.mxu0 0
        %1556 = vmatpush1.bf16.xpose.msra.mxu0 0
        %1557 = vmatprep.subr.bf16.mxu0 0
        %1558 = vmatpush1.bf16.xpose.msra.mxu0 0
        %1559 = vmatprep.subr.bf16.mxu0 0
        %1560 = vmatpush1.bf16.xpose.msra.mxu0 0
        %1561 = vmatprep.subr.bf16.mxu0 0
        %1562 = vmatpush1.bf16.xpose.msra.mxu0 0
        %1563 = vmatprep.subr.bf16.mxu0 0
        %1564 = vmatpush1.bf16.xpose.msra.mxu0 0
        %1565 = vmatprep.subr.bf16.mxu0 0
        %1566 = vmatpush1.bf16.xpose.msra.mxu0 0
        %1567 = vmatprep.subr.bf16.mxu0 0
        %1568 = vmatpush1.bf16.xpose.msra.mxu0 0
        %1569 = vmatprep.subr.bf16.mxu0 0
        %1570 = vmatpush1.bf16.xpose.msra.mxu0 0
        %1571 = vmatprep.mubr.bf16.mxu0 0
        %1572 = vmatmul.mubr.bf16.gmra.mrb[0].mxu0 %v1534
        %v1573 = vpop.f32.mrb[0].mxu0
        %v1574 = vadd.f32 0.0, %v1573
        %v1575 = vpop.f32.mrb[0].mxu0
        %v1576 = vpop.f32.mrb[0].mxu0
        %v1577 = vpop.f32.mrb[0].mxu0
        %1578 = vdwg.mxu0
        %1579 = vrot.lane.b32.xlu0 %v1083, 120
        %v1580 = vpop.permute.xlu0 %1579
        %1581 = vrot.lane.b32.xlu0 %v1083, 88
        %v1582 = vpop.permute.xlu0 %1581
        %v1584 = vsel %vm1087, %v1580, 0
        %v1587 = vsel %vm1087, %v1582, 0
        %1589 = vmatprep.subr.bf16.mxu0 0
        %1590 = vmatpush1.bf16.xpose.msra.mxu0 %v1587
        %1591 = vmatprep.subr.bf16.mxu0 0
        %1592 = vmatpush1.bf16.xpose.msra.mxu0 0
        %1593 = vmatprep.subr.bf16.mxu0 0
        %1594 = vmatpush1.bf16.xpose.msra.mxu0 0
        %1595 = vmatprep.subr.bf16.mxu0 0
        %1596 = vmatpush1.bf16.xpose.msra.mxu0 0
        %1597 = vmatprep.subr.bf16.mxu0 0
        %1598 = vmatpush1.bf16.xpose.msra.mxu0 0
        %1599 = vmatprep.subr.bf16.mxu0 0
        %1600 = vmatpush1.bf16.xpose.msra.mxu0 0
        %1601 = vmatprep.subr.bf16.mxu0 0
        %1602 = vmatpush1.bf16.xpose.msra.mxu0 0
        %1603 = vmatprep.subr.bf16.mxu0 0
        %1604 = vmatpush1.bf16.xpose.msra.mxu0 0
        %1605 = vmatprep.subr.bf16.mxu0 0
        %1606 = vmatpush1.bf16.xpose.msra.mxu0 0
        %1607 = vmatprep.subr.bf16.mxu0 0
        %1608 = vmatpush1.bf16.xpose.msra.mxu0 0
        %1609 = vmatprep.subr.bf16.mxu0 0
        %1610 = vmatpush1.bf16.xpose.msra.mxu0 0
        %1611 = vmatprep.subr.bf16.mxu0 0
        %1612 = vmatpush1.bf16.xpose.msra.mxu0 0
        %1613 = vmatprep.subr.bf16.mxu0 0
        %1614 = vmatpush1.bf16.xpose.msra.mxu0 0
        %1615 = vmatprep.subr.bf16.mxu0 0
        %1616 = vmatpush1.bf16.xpose.msra.mxu0 0
        %1617 = vmatprep.subr.bf16.mxu0 0
        %1618 = vmatpush1.bf16.xpose.msra.mxu0 0
        %1619 = vmatprep.subr.bf16.mxu0 0
        %1620 = vmatpush1.bf16.xpose.msra.mxu0 0
        %1621 = vmatprep.mubr.bf16.mxu0 0
        %1622 = vmatmul.mubr.bf16.gmra.mrb[0].mxu0 %v1584
        %v1623 = vpop.f32.mrb[0].mxu0
        %v1624 = vadd.f32 0.0, %v1623
        %v1625 = vpop.f32.mrb[0].mxu0
        %v1626 = vpop.f32.mrb[0].mxu0
        %v1627 = vpop.f32.mrb[0].mxu0
        %1628 = vdwg.mxu0
        %v1629 = vmul.f32 %v1574, 0.5
        %v1630 = vmul.f32 %v1624, 0.5
        %v1631 = vsel %vm1185, %v1629, -inf
        %1632 = vmax.xlane.f32.xlu0 %v1631
        %v1633 = vpop.xlane.xlu0 %1632
        %v1634 = vsel %vm1185, %v1630, -inf
        %1635 = vmax.xlane.f32.xlu0 %v1634
        %v1636 = vpop.xlane.xlu0 %1635
        %v1637 = vsub.f32 %v1629, %v1633
        %v1638 = vsub.f32 %v1630, %v1636
        %v1639 = vmul.f32 %v1637, 1.442695
        %v1640 = vpow.pop %v1639
        %v1641 = vmul.f32 %v1638, 1.442695
        %v1642 = vpow.pop %v1641
        %v1643 = vsel %vm1185, %v1640, 0.0
        %1644 = vadd.xlane.f32.xlu0 %v1643
        %v1645 = vpop.xlane.xlu0 %1644
        %v1646 = vsel %vm1185, %v1642, 0.0
        %1647 = vadd.xlane.f32.xlu0 %v1646
        %v1648 = vpop.xlane.xlu0 %1647
        %v1649 = vrcp.pop %v1645
        %v1650 = vrcp.pop %v1648
        %v1651 = vmul.f32 %v1640, %v1649
        %v1652 = vmul.f32 %v1642, %v1650
        %v1653 = vpack.c.bf16 %v1651, %v1651
        %v1654 = vpack.c.bf16 %v1652, %v1652
        %1655 = vrot.lane.b32.xlu0 %v1082, 56
        %v1656 = vpop.permute.xlu0 %1655
        %v1658 = vsel %vm1185, %v1653, 0
        %v1661 = vsel %vm1215, %v1656, 0
        %1663 = vmatprep.subr.bf16.mxu0 0
        %1664 = vmatpush1.bf16.msra.mxu0 %v1661
        %1665 = vmatprep.subr.bf16.mxu0 0
        %1666 = vmatpush1.bf16.msra.mxu0 0
        %1667 = vmatprep.subr.bf16.mxu0 0
        %1668 = vmatpush1.bf16.msra.mxu0 0
        %1669 = vmatprep.subr.bf16.mxu0 0
        %1670 = vmatpush1.bf16.msra.mxu0 0
        %1671 = vmatprep.subr.bf16.mxu0 0
        %1672 = vmatpush1.bf16.msra.mxu0 0
        %1673 = vmatprep.subr.bf16.mxu0 0
        %1674 = vmatpush1.bf16.msra.mxu0 0
        %1675 = vmatprep.subr.bf16.mxu0 0
        %1676 = vmatpush1.bf16.msra.mxu0 0
        %1677 = vmatprep.subr.bf16.mxu0 0
        %1678 = vmatpush1.bf16.msra.mxu0 0
        %1679 = vmatprep.subr.bf16.mxu0 0
        %1680 = vmatpush1.bf16.msra.mxu0 0
        %1681 = vmatprep.subr.bf16.mxu0 0
        %1682 = vmatpush1.bf16.msra.mxu0 0
        %1683 = vmatprep.subr.bf16.mxu0 0
        %1684 = vmatpush1.bf16.msra.mxu0 0
        %1685 = vmatprep.subr.bf16.mxu0 0
        %1686 = vmatpush1.bf16.msra.mxu0 0
        %1687 = vmatprep.subr.bf16.mxu0 0
        %1688 = vmatpush1.bf16.msra.mxu0 0
        %1689 = vmatprep.subr.bf16.mxu0 0
        %1690 = vmatpush1.bf16.msra.mxu0 0
        %1691 = vmatprep.subr.bf16.mxu0 0
        %1692 = vmatpush1.bf16.msra.mxu0 0
        %1693 = vmatprep.subr.bf16.mxu0 0
        %1694 = vmatpush1.bf16.msra.mxu0 0
        %1695 = vmatprep.mubr.bf16.mxu0 0
        %1696 = vmatmul.mubr.bf16.gmra.mrb[0].mxu0 %v1658
        %v1697 = vpop.f32.mrb[0].mxu0
        %v1698 = vadd.f32 0.0, %v1697
        %v1699 = vpop.f32.mrb[0].mxu0
        %v1700 = vpop.f32.mrb[0].mxu0
        %v1701 = vpop.f32.mrb[0].mxu0
        %1702 = vdwg.mxu0
        %1703 = vrot.lane.b32.xlu0 %v1083, 56
        %v1704 = vpop.permute.xlu0 %1703
        %v1706 = vsel %vm1185, %v1654, 0
        %v1709 = vsel %vm1215, %v1704, 0
        %1711 = vmatprep.subr.bf16.mxu0 0
        %1712 = vmatpush1.bf16.msra.mxu0 %v1709
        %1713 = vmatprep.subr.bf16.mxu0 0
        %1714 = vmatpush1.bf16.msra.mxu0 0
        %1715 = vmatprep.subr.bf16.mxu0 0
        %1716 = vmatpush1.bf16.msra.mxu0 0
        %1717 = vmatprep.subr.bf16.mxu0 0
        %1718 = vmatpush1.bf16.msra.mxu0 0
        %1719 = vmatprep.subr.bf16.mxu0 0
        %1720 = vmatpush1.bf16.msra.mxu0 0
        %1721 = vmatprep.subr.bf16.mxu0 0
        %1722 = vmatpush1.bf16.msra.mxu0 0
        %1723 = vmatprep.subr.bf16.mxu0 0
        %1724 = vmatpush1.bf16.msra.mxu0 0
        %1725 = vmatprep.subr.bf16.mxu0 0
        %1726 = vmatpush1.bf16.msra.mxu0 0
        %1727 = vmatprep.subr.bf16.mxu0 0
        %1728 = vmatpush1.bf16.msra.mxu0 0
        %1729 = vmatprep.subr.bf16.mxu0 0
        %1730 = vmatpush1.bf16.msra.mxu0 0
        %1731 = vmatprep.subr.bf16.mxu0 0
        %1732 = vmatpush1.bf16.msra.mxu0 0
        %1733 = vmatprep.subr.bf16.mxu0 0
        %1734 = vmatpush1.bf16.msra.mxu0 0
        %1735 = vmatprep.subr.bf16.mxu0 0
        %1736 = vmatpush1.bf16.msra.mxu0 0
        %1737 = vmatprep.subr.bf16.mxu0 0
        %1738 = vmatpush1.bf16.msra.mxu0 0
        %1739 = vmatprep.subr.bf16.mxu0 0
        %1740 = vmatpush1.bf16.msra.mxu0 0
        %1741 = vmatprep.subr.bf16.mxu0 0
        %1742 = vmatpush1.bf16.msra.mxu0 0
        %1743 = vmatprep.mubr.bf16.mxu0 0
        %1744 = vmatmul.mubr.bf16.gmra.mrb[0].mxu0 %v1706
        %v1745 = vpop.f32.mrb[0].mxu0
        %v1746 = vadd.f32 0.0, %v1745
        %v1747 = vpop.f32.mrb[0].mxu0
        %v1748 = vpop.f32.mrb[0].mxu0
        %v1749 = vpop.f32.mrb[0].mxu0
        %1750 = vdwg.mxu0
        %1751 = vrot.lane.b32.xlu0 %v1082, 116
        %v1752 = vpop.permute.xlu0 %1751
        %1753 = vrot.lane.b32.xlu0 %v1082, 84
        %v1754 = vpop.permute.xlu0 %1753
        %v1756 = vsel %vm1087, %v1752, 0
        %v1759 = vsel %vm1087, %v1754, 0
        %1761 = vmatprep.subr.bf16.mxu0 0
        %1762 = vmatpush1.bf16.xpose.msra.mxu0 %v1759
        %1763 = vmatprep.subr.bf16.mxu0 0
        %1764 = vmatpush1.bf16.xpose.msra.mxu0 0
        %1765 = vmatprep.subr.bf16.mxu0 0
        %1766 = vmatpush1.bf16.xpose.msra.mxu0 0
        %1767 = vmatprep.subr.bf16.mxu0 0
        %1768 = vmatpush1.bf16.xpose.msra.mxu0 0
        %1769 = vmatprep.subr.bf16.mxu0 0
        %1770 = vmatpush1.bf16.xpose.msra.mxu0 0
        %1771 = vmatprep.subr.bf16.mxu0 0
        %1772 = vmatpush1.bf16.xpose.msra.mxu0 0
        %1773 = vmatprep.subr.bf16.mxu0 0
        %1774 = vmatpush1.bf16.xpose.msra.mxu0 0
        %1775 = vmatprep.subr.bf16.mxu0 0
        %1776 = vmatpush1.bf16.xpose.msra.mxu0 0
        %1777 = vmatprep.subr.bf16.mxu0 0
        %1778 = vmatpush1.bf16.xpose.msra.mxu0 0
        %1779 = vmatprep.subr.bf16.mxu0 0
        %1780 = vmatpush1.bf16.xpose.msra.mxu0 0
        %1781 = vmatprep.subr.bf16.mxu0 0
        %1782 = vmatpush1.bf16.xpose.msra.mxu0 0
        %1783 = vmatprep.subr.bf16.mxu0 0
        %1784 = vmatpush1.bf16.xpose.msra.mxu0 0
        %1785 = vmatprep.subr.bf16.mxu0 0
        %1786 = vmatpush1.bf16.xpose.msra.mxu0 0
        %1787 = vmatprep.subr.bf16.mxu0 0
        %1788 = vmatpush1.bf16.xpose.msra.mxu0 0
        %1789 = vmatprep.subr.bf16.mxu0 0
        %1790 = vmatpush1.bf16.xpose.msra.mxu0 0
        %1791 = vmatprep.subr.bf16.mxu0 0
        %1792 = vmatpush1.bf16.xpose.msra.mxu0 0
        %1793 = vmatprep.mubr.bf16.mxu0 0
        %1794 = vmatmul.mubr.bf16.gmra.mrb[0].mxu0 %v1756
        %v1795 = vpop.f32.mrb[0].mxu0
        %v1796 = vadd.f32 0.0, %v1795
        %v1797 = vpop.f32.mrb[0].mxu0
        %v1798 = vpop.f32.mrb[0].mxu0
        %v1799 = vpop.f32.mrb[0].mxu0
        %1800 = vdwg.mxu0
        %1801 = vrot.lane.b32.xlu0 %v1083, 116
        %v1802 = vpop.permute.xlu0 %1801
        %1803 = vrot.lane.b32.xlu0 %v1083, 84
        %v1804 = vpop.permute.xlu0 %1803
        %v1806 = vsel %vm1087, %v1802, 0
        %v1809 = vsel %vm1087, %v1804, 0
        %1811 = vmatprep.subr.bf16.mxu0 0
        %1812 = vmatpush1.bf16.xpose.msra.mxu0 %v1809
        %1813 = vmatprep.subr.bf16.mxu0 0
        %1814 = vmatpush1.bf16.xpose.msra.mxu0 0
        %1815 = vmatprep.subr.bf16.mxu0 0
        %1816 = vmatpush1.bf16.xpose.msra.mxu0 0
        %1817 = vmatprep.subr.bf16.mxu0 0
        %1818 = vmatpush1.bf16.xpose.msra.mxu0 0
        %1819 = vmatprep.subr.bf16.mxu0 0
        %1820 = vmatpush1.bf16.xpose.msra.mxu0 0
        %1821 = vmatprep.subr.bf16.mxu0 0
        %1822 = vmatpush1.bf16.xpose.msra.mxu0 0
        %1823 = vmatprep.subr.bf16.mxu0 0
        %1824 = vmatpush1.bf16.xpose.msra.mxu0 0
        %1825 = vmatprep.subr.bf16.mxu0 0
        %1826 = vmatpush1.bf16.xpose.msra.mxu0 0
        %1827 = vmatprep.subr.bf16.mxu0 0
        %1828 = vmatpush1.bf16.xpose.msra.mxu0 0
        %1829 = vmatprep.subr.bf16.mxu0 0
        %1830 = vmatpush1.bf16.xpose.msra.mxu0 0
        %1831 = vmatprep.subr.bf16.mxu0 0
        %1832 = vmatpush1.bf16.xpose.msra.mxu0 0
        %1833 = vmatprep.subr.bf16.mxu0 0
        %1834 = vmatpush1.bf16.xpose.msra.mxu0 0
        %1835 = vmatprep.subr.bf16.mxu0 0
        %1836 = vmatpush1.bf16.xpose.msra.mxu0 0
        %1837 = vmatprep.subr.bf16.mxu0 0
        %1838 = vmatpush1.bf16.xpose.msra.mxu0 0
        %1839 = vmatprep.subr.bf16.mxu0 0
        %1840 = vmatpush1.bf16.xpose.msra.mxu0 0
        %1841 = vmatprep.subr.bf16.mxu0 0
        %1842 = vmatpush1.bf16.xpose.msra.mxu0 0
        %1843 = vmatprep.mubr.bf16.mxu0 0
        %1844 = vmatmul.mubr.bf16.gmra.mrb[0].mxu0 %v1806
        %v1845 = vpop.f32.mrb[0].mxu0
        %v1846 = vadd.f32 0.0, %v1845
        %v1847 = vpop.f32.mrb[0].mxu0
        %v1848 = vpop.f32.mrb[0].mxu0
        %v1849 = vpop.f32.mrb[0].mxu0
        %1850 = vdwg.mxu0
        %v1851 = vmul.f32 %v1796, 0.5
        %v1852 = vmul.f32 %v1846, 0.5
        %v1853 = vsel %vm1185, %v1851, -inf
        %1854 = vmax.xlane.f32.xlu0 %v1853
        %v1855 = vpop.xlane.xlu0 %1854
        %v1856 = vsel %vm1185, %v1852, -inf
        %1857 = vmax.xlane.f32.xlu0 %v1856
        %v1858 = vpop.xlane.xlu0 %1857
        %v1859 = vsub.f32 %v1851, %v1855
        %v1860 = vsub.f32 %v1852, %v1858
        %v1861 = vmul.f32 %v1859, 1.442695
        %v1862 = vpow.pop %v1861
        %v1863 = vmul.f32 %v1860, 1.442695
        %v1864 = vpow.pop %v1863
        %v1865 = vsel %vm1185, %v1862, 0.0
        %1866 = vadd.xlane.f32.xlu0 %v1865
        %v1867 = vpop.xlane.xlu0 %1866
        %v1868 = vsel %vm1185, %v1864, 0.0
        %1869 = vadd.xlane.f32.xlu0 %v1868
        %v1870 = vpop.xlane.xlu0 %1869
        %v1871 = vrcp.pop %v1867
        %v1872 = vrcp.pop %v1870
        %v1873 = vmul.f32 %v1862, %v1871
        %v1874 = vmul.f32 %v1864, %v1872
        %v1875 = vpack.c.bf16 %v1873, %v1873
        %v1876 = vpack.c.bf16 %v1874, %v1874
        %1877 = vrot.lane.b32.xlu0 %v1082, 52
        %v1878 = vpop.permute.xlu0 %1877
        %v1880 = vsel %vm1185, %v1875, 0
        %v1883 = vsel %vm1215, %v1878, 0
        %1885 = vmatprep.subr.bf16.mxu0 0
        %1886 = vmatpush1.bf16.msra.mxu0 %v1883
        %1887 = vmatprep.subr.bf16.mxu0 0
        %1888 = vmatpush1.bf16.msra.mxu0 0
        %1889 = vmatprep.subr.bf16.mxu0 0
        %1890 = vmatpush1.bf16.msra.mxu0 0
        %1891 = vmatprep.subr.bf16.mxu0 0
        %1892 = vmatpush1.bf16.msra.mxu0 0
        %1893 = vmatprep.subr.bf16.mxu0 0
        %1894 = vmatpush1.bf16.msra.mxu0 0
        %1895 = vmatprep.subr.bf16.mxu0 0
        %1896 = vmatpush1.bf16.msra.mxu0 0
        %1897 = vmatprep.subr.bf16.mxu0 0
        %1898 = vmatpush1.bf16.msra.mxu0 0
        %1899 = vmatprep.subr.bf16.mxu0 0
        %1900 = vmatpush1.bf16.msra.mxu0 0
        %1901 = vmatprep.subr.bf16.mxu0 0
        %1902 = vmatpush1.bf16.msra.mxu0 0
        %1903 = vmatprep.subr.bf16.mxu0 0
        %1904 = vmatpush1.bf16.msra.mxu0 0
        %1905 = vmatprep.subr.bf16.mxu0 0
        %1906 = vmatpush1.bf16.msra.mxu0 0
        %1907 = vmatprep.subr.bf16.mxu0 0
        %1908 = vmatpush1.bf16.msra.mxu0 0
        %1909 = vmatprep.subr.bf16.mxu0 0
        %1910 = vmatpush1.bf16.msra.mxu0 0
        %1911 = vmatprep.subr.bf16.mxu0 0
        %1912 = vmatpush1.bf16.msra.mxu0 0
        %1913 = vmatprep.subr.bf16.mxu0 0
        %1914 = vmatpush1.bf16.msra.mxu0 0
        %1915 = vmatprep.subr.bf16.mxu0 0
        %1916 = vmatpush1.bf16.msra.mxu0 0
        %1917 = vmatprep.mubr.bf16.mxu0 0
        %1918 = vmatmul.mubr.bf16.gmra.mrb[0].mxu0 %v1880
        %v1919 = vpop.f32.mrb[0].mxu0
        %v1920 = vadd.f32 0.0, %v1919
        %v1921 = vpop.f32.mrb[0].mxu0
        %v1922 = vpop.f32.mrb[0].mxu0
        %v1923 = vpop.f32.mrb[0].mxu0
        %1924 = vdwg.mxu0
        %1925 = vrot.lane.b32.xlu0 %v1083, 52
        %v1926 = vpop.permute.xlu0 %1925
        %v1928 = vsel %vm1185, %v1876, 0
        %v1931 = vsel %vm1215, %v1926, 0
        %1933 = vmatprep.subr.bf16.mxu0 0
        %1934 = vmatpush1.bf16.msra.mxu0 %v1931
        %1935 = vmatprep.subr.bf16.mxu0 0
        %1936 = vmatpush1.bf16.msra.mxu0 0
        %1937 = vmatprep.subr.bf16.mxu0 0
        %1938 = vmatpush1.bf16.msra.mxu0 0
        %1939 = vmatprep.subr.bf16.mxu0 0
        %1940 = vmatpush1.bf16.msra.mxu0 0
        %1941 = vmatprep.subr.bf16.mxu0 0
        %1942 = vmatpush1.bf16.msra.mxu0 0
        %1943 = vmatprep.subr.bf16.mxu0 0
        %1944 = vmatpush1.bf16.msra.mxu0 0
        %1945 = vmatprep.subr.bf16.mxu0 0
        %1946 = vmatpush1.bf16.msra.mxu0 0
        %1947 = vmatprep.subr.bf16.mxu0 0
        %1948 = vmatpush1.bf16.msra.mxu0 0
        %1949 = vmatprep.subr.bf16.mxu0 0
        %1950 = vmatpush1.bf16.msra.mxu0 0
        %1951 = vmatprep.subr.bf16.mxu0 0
        %1952 = vmatpush1.bf16.msra.mxu0 0
        %1953 = vmatprep.subr.bf16.mxu0 0
        %1954 = vmatpush1.bf16.msra.mxu0 0
        %1955 = vmatprep.subr.bf16.mxu0 0
        %1956 = vmatpush1.bf16.msra.mxu0 0
        %1957 = vmatprep.subr.bf16.mxu0 0
        %1958 = vmatpush1.bf16.msra.mxu0 0
        %1959 = vmatprep.subr.bf16.mxu0 0
        %1960 = vmatpush1.bf16.msra.mxu0 0
        %1961 = vmatprep.subr.bf16.mxu0 0
        %1962 = vmatpush1.bf16.msra.mxu0 0
        %1963 = vmatprep.subr.bf16.mxu0 0
        %1964 = vmatpush1.bf16.msra.mxu0 0
        %1965 = vmatprep.mubr.bf16.mxu0 0
        %1966 = vmatmul.mubr.bf16.gmra.mrb[0].mxu0 %v1928
        %v1967 = vpop.f32.mrb[0].mxu0
        %v1968 = vadd.f32 0.0, %v1967
        %v1969 = vpop.f32.mrb[0].mxu0
        %v1970 = vpop.f32.mrb[0].mxu0
        %v1971 = vpop.f32.mrb[0].mxu0
        %1972 = vdwg.mxu0
        %1973 = vrot.lane.b32.xlu0 %v1082, 112
        %v1974 = vpop.permute.xlu0 %1973
        %1975 = vrot.lane.b32.xlu0 %v1082, 80
        %v1976 = vpop.permute.xlu0 %1975
        %v1978 = vsel %vm1087, %v1974, 0
        %v1981 = vsel %vm1087, %v1976, 0
        %1983 = vmatprep.subr.bf16.mxu0 0
        %1984 = vmatpush1.bf16.xpose.msra.mxu0 %v1981
        %1985 = vmatprep.subr.bf16.mxu0 0
        %1986 = vmatpush1.bf16.xpose.msra.mxu0 0
        %1987 = vmatprep.subr.bf16.mxu0 0
        %1988 = vmatpush1.bf16.xpose.msra.mxu0 0
        %1989 = vmatprep.subr.bf16.mxu0 0
        %1990 = vmatpush1.bf16.xpose.msra.mxu0 0
        %1991 = vmatprep.subr.bf16.mxu0 0
        %1992 = vmatpush1.bf16.xpose.msra.mxu0 0
        %1993 = vmatprep.subr.bf16.mxu0 0
        %1994 = vmatpush1.bf16.xpose.msra.mxu0 0
        %1995 = vmatprep.subr.bf16.mxu0 0
        %1996 = vmatpush1.bf16.xpose.msra.mxu0 0
        %1997 = vmatprep.subr.bf16.mxu0 0
        %1998 = vmatpush1.bf16.xpose.msra.mxu0 0
        %1999 = vmatprep.subr.bf16.mxu0 0
        %2000 = vmatpush1.bf16.xpose.msra.mxu0 0
        %2001 = vmatprep.subr.bf16.mxu0 0
        %2002 = vmatpush1.bf16.xpose.msra.mxu0 0
        %2003 = vmatprep.subr.bf16.mxu0 0
        %2004 = vmatpush1.bf16.xpose.msra.mxu0 0
        %2005 = vmatprep.subr.bf16.mxu0 0
        %2006 = vmatpush1.bf16.xpose.msra.mxu0 0
        %2007 = vmatprep.subr.bf16.mxu0 0
        %2008 = vmatpush1.bf16.xpose.msra.mxu0 0
        %2009 = vmatprep.subr.bf16.mxu0 0
        %2010 = vmatpush1.bf16.xpose.msra.mxu0 0
        %2011 = vmatprep.subr.bf16.mxu0 0
        %2012 = vmatpush1.bf16.xpose.msra.mxu0 0
        %2013 = vmatprep.subr.bf16.mxu0 0
        %2014 = vmatpush1.bf16.xpose.msra.mxu0 0
        %2015 = vmatprep.mubr.bf16.mxu0 0
        %2016 = vmatmul.mubr.bf16.gmra.mrb[0].mxu0 %v1978
        %v2017 = vpop.f32.mrb[0].mxu0
        %v2018 = vadd.f32 0.0, %v2017
        %v2019 = vpop.f32.mrb[0].mxu0
        %v2020 = vpop.f32.mrb[0].mxu0
        %v2021 = vpop.f32.mrb[0].mxu0
        %2022 = vdwg.mxu0
        %2023 = vrot.lane.b32.xlu0 %v1083, 112
        %v2024 = vpop.permute.xlu0 %2023
        %2025 = vrot.lane.b32.xlu0 %v1083, 80
        %v2026 = vpop.permute.xlu0 %2025
        %v2028 = vsel %vm1087, %v2024, 0
        %v2031 = vsel %vm1087, %v2026, 0
        %2033 = vmatprep.subr.bf16.mxu0 0
        %2034 = vmatpush1.bf16.xpose.msra.mxu0 %v2031
        %2035 = vmatprep.subr.bf16.mxu0 0
        %2036 = vmatpush1.bf16.xpose.msra.mxu0 0
        %2037 = vmatprep.subr.bf16.mxu0 0
        %2038 = vmatpush1.bf16.xpose.msra.mxu0 0
        %2039 = vmatprep.subr.bf16.mxu0 0
        %2040 = vmatpush1.bf16.xpose.msra.mxu0 0
        %2041 = vmatprep.subr.bf16.mxu0 0
        %2042 = vmatpush1.bf16.xpose.msra.mxu0 0
        %2043 = vmatprep.subr.bf16.mxu0 0
        %2044 = vmatpush1.bf16.xpose.msra.mxu0 0
        %2045 = vmatprep.subr.bf16.mxu0 0
        %2046 = vmatpush1.bf16.xpose.msra.mxu0 0
        %2047 = vmatprep.subr.bf16.mxu0 0
        %2048 = vmatpush1.bf16.xpose.msra.mxu0 0
        %2049 = vmatprep.subr.bf16.mxu0 0
        %2050 = vmatpush1.bf16.xpose.msra.mxu0 0
        %2051 = vmatprep.subr.bf16.mxu0 0
        %2052 = vmatpush1.bf16.xpose.msra.mxu0 0
        %2053 = vmatprep.subr.bf16.mxu0 0
        %2054 = vmatpush1.bf16.xpose.msra.mxu0 0
        %2055 = vmatprep.subr.bf16.mxu0 0
        %2056 = vmatpush1.bf16.xpose.msra.mxu0 0
        %2057 = vmatprep.subr.bf16.mxu0 0
        %2058 = vmatpush1.bf16.xpose.msra.mxu0 0
        %2059 = vmatprep.subr.bf16.mxu0 0
        %2060 = vmatpush1.bf16.xpose.msra.mxu0 0
        %2061 = vmatprep.subr.bf16.mxu0 0
        %2062 = vmatpush1.bf16.xpose.msra.mxu0 0
        %2063 = vmatprep.subr.bf16.mxu0 0
        %2064 = vmatpush1.bf16.xpose.msra.mxu0 0
        %2065 = vmatprep.mubr.bf16.mxu0 0
        %2066 = vmatmul.mubr.bf16.gmra.mrb[0].mxu0 %v2028
        %v2067 = vpop.f32.mrb[0].mxu0
        %v2068 = vadd.f32 0.0, %v2067
        %v2069 = vpop.f32.mrb[0].mxu0
        %v2070 = vpop.f32.mrb[0].mxu0
        %v2071 = vpop.f32.mrb[0].mxu0
        %2072 = vdwg.mxu0
        %v2073 = vmul.f32 %v2018, 0.5
        %v2074 = vmul.f32 %v2068, 0.5
        %v2075 = vsel %vm1185, %v2073, -inf
        %2076 = vmax.xlane.f32.xlu0 %v2075
        %v2077 = vpop.xlane.xlu0 %2076
        %v2078 = vsel %vm1185, %v2074, -inf
        %2079 = vmax.xlane.f32.xlu0 %v2078
        %v2080 = vpop.xlane.xlu0 %2079
        %v2081 = vsub.f32 %v2073, %v2077
        %v2082 = vsub.f32 %v2074, %v2080
        %v2083 = vmul.f32 %v2081, 1.442695
        %v2084 = vpow.pop %v2083
        %v2085 = vmul.f32 %v2082, 1.442695
        %v2086 = vpow.pop %v2085
        %v2087 = vsel %vm1185, %v2084, 0.0
        %2088 = vadd.xlane.f32.xlu0 %v2087
        %v2089 = vpop.xlane.xlu0 %2088
        %v2090 = vsel %vm1185, %v2086, 0.0
        %2091 = vadd.xlane.f32.xlu0 %v2090
        %v2092 = vpop.xlane.xlu0 %2091
        %v2093 = vrcp.pop %v2089
        %v2094 = vrcp.pop %v2092
        %v2095 = vmul.f32 %v2084, %v2093
        %v2096 = vmul.f32 %v2086, %v2094
        %v2097 = vpack.c.bf16 %v2095, %v2095
        %v2098 = vpack.c.bf16 %v2096, %v2096
        %2099 = vrot.lane.b32.xlu0 %v1082, 48
        %v2100 = vpop.permute.xlu0 %2099
        %v2102 = vsel %vm1185, %v2097, 0
        %v2105 = vsel %vm1215, %v2100, 0
        %2107 = vmatprep.subr.bf16.mxu0 0
        %2108 = vmatpush1.bf16.msra.mxu0 %v2105
        %2109 = vmatprep.subr.bf16.mxu0 0
        %2110 = vmatpush1.bf16.msra.mxu0 0
        %2111 = vmatprep.subr.bf16.mxu0 0
        %2112 = vmatpush1.bf16.msra.mxu0 0
        %2113 = vmatprep.subr.bf16.mxu0 0
        %2114 = vmatpush1.bf16.msra.mxu0 0
        %2115 = vmatprep.subr.bf16.mxu0 0
        %2116 = vmatpush1.bf16.msra.mxu0 0
        %2117 = vmatprep.subr.bf16.mxu0 0
        %2118 = vmatpush1.bf16.msra.mxu0 0
        %2119 = vmatprep.subr.bf16.mxu0 0
        %2120 = vmatpush1.bf16.msra.mxu0 0
        %2121 = vmatprep.subr.bf16.mxu0 0
        %2122 = vmatpush1.bf16.msra.mxu0 0
        %2123 = vmatprep.subr.bf16.mxu0 0
        %2124 = vmatpush1.bf16.msra.mxu0 0
        %2125 = vmatprep.subr.bf16.mxu0 0
        %2126 = vmatpush1.bf16.msra.mxu0 0
        %2127 = vmatprep.subr.bf16.mxu0 0
        %2128 = vmatpush1.bf16.msra.mxu0 0
        %2129 = vmatprep.subr.bf16.mxu0 0
        %2130 = vmatpush1.bf16.msra.mxu0 0
        %2131 = vmatprep.subr.bf16.mxu0 0
        %2132 = vmatpush1.bf16.msra.mxu0 0
        %2133 = vmatprep.subr.bf16.mxu0 0
        %2134 = vmatpush1.bf16.msra.mxu0 0
        %2135 = vmatprep.subr.bf16.mxu0 0
        %2136 = vmatpush1.bf16.msra.mxu0 0
        %2137 = vmatprep.subr.bf16.mxu0 0
        %2138 = vmatpush1.bf16.msra.mxu0 0
        %2139 = vmatprep.mubr.bf16.mxu0 0
        %2140 = vmatmul.mubr.bf16.gmra.mrb[0].mxu0 %v2102
        %v2141 = vpop.f32.mrb[0].mxu0
        %v2142 = vadd.f32 0.0, %v2141
        %v2143 = vpop.f32.mrb[0].mxu0
        %v2144 = vpop.f32.mrb[0].mxu0
        %v2145 = vpop.f32.mrb[0].mxu0
        %2146 = vdwg.mxu0
        %2147 = vrot.lane.b32.xlu0 %v1083, 48
        %v2148 = vpop.permute.xlu0 %2147
        %v2150 = vsel %vm1185, %v2098, 0
        %v2153 = vsel %vm1215, %v2148, 0
        %2155 = vmatprep.subr.bf16.mxu0 0
        %2156 = vmatpush1.bf16.msra.mxu0 %v2153
        %2157 = vmatprep.subr.bf16.mxu0 0
        %2158 = vmatpush1.bf16.msra.mxu0 0
        %2159 = vmatprep.subr.bf16.mxu0 0
        %2160 = vmatpush1.bf16.msra.mxu0 0
        %2161 = vmatprep.subr.bf16.mxu0 0
        %2162 = vmatpush1.bf16.msra.mxu0 0
        %2163 = vmatprep.subr.bf16.mxu0 0
        %2164 = vmatpush1.bf16.msra.mxu0 0
        %2165 = vmatprep.subr.bf16.mxu0 0
        %2166 = vmatpush1.bf16.msra.mxu0 0
        %2167 = vmatprep.subr.bf16.mxu0 0
        %2168 = vmatpush1.bf16.msra.mxu0 0
        %2169 = vmatprep.subr.bf16.mxu0 0
        %2170 = vmatpush1.bf16.msra.mxu0 0
        %2171 = vmatprep.subr.bf16.mxu0 0
        %2172 = vmatpush1.bf16.msra.mxu0 0
        %2173 = vmatprep.subr.bf16.mxu0 0
        %2174 = vmatpush1.bf16.msra.mxu0 0
        %2175 = vmatprep.subr.bf16.mxu0 0
        %2176 = vmatpush1.bf16.msra.mxu0 0
        %2177 = vmatprep.subr.bf16.mxu0 0
        %2178 = vmatpush1.bf16.msra.mxu0 0
        %2179 = vmatprep.subr.bf16.mxu0 0
        %2180 = vmatpush1.bf16.msra.mxu0 0
        %2181 = vmatprep.subr.bf16.mxu0 0
        %2182 = vmatpush1.bf16.msra.mxu0 0
        %2183 = vmatprep.subr.bf16.mxu0 0
        %2184 = vmatpush1.bf16.msra.mxu0 0
        %2185 = vmatprep.subr.bf16.mxu0 0
        %2186 = vmatpush1.bf16.msra.mxu0 0
        %2187 = vmatprep.mubr.bf16.mxu0 0
        %2188 = vmatmul.mubr.bf16.gmra.mrb[0].mxu0 %v2150
        %v2189 = vpop.f32.mrb[0].mxu0
        %v2190 = vadd.f32 0.0, %v2189
        %v2191 = vpop.f32.mrb[0].mxu0
        %v2192 = vpop.f32.mrb[0].mxu0
        %v2193 = vpop.f32.mrb[0].mxu0
        %2194 = vdwg.mxu0
        %2195 = vrot.lane.b32.xlu0 %v1082, 108
        %v2196 = vpop.permute.xlu0 %2195
        %2197 = vrot.lane.b32.xlu0 %v1082, 76
        %v2198 = vpop.permute.xlu0 %2197
        %v2200 = vsel %vm1087, %v2196, 0
        %v2203 = vsel %vm1087, %v2198, 0
        %2205 = vmatprep.subr.bf16.mxu0 0
        %2206 = vmatpush1.bf16.xpose.msra.mxu0 %v2203
        %2207 = vmatprep.subr.bf16.mxu0 0
        %2208 = vmatpush1.bf16.xpose.msra.mxu0 0
        %2209 = vmatprep.subr.bf16.mxu0 0
        %2210 = vmatpush1.bf16.xpose.msra.mxu0 0
        %2211 = vmatprep.subr.bf16.mxu0 0
        %2212 = vmatpush1.bf16.xpose.msra.mxu0 0
        %2213 = vmatprep.subr.bf16.mxu0 0
        %2214 = vmatpush1.bf16.xpose.msra.mxu0 0
        %2215 = vmatprep.subr.bf16.mxu0 0
        %2216 = vmatpush1.bf16.xpose.msra.mxu0 0
        %2217 = vmatprep.subr.bf16.mxu0 0
        %2218 = vmatpush1.bf16.xpose.msra.mxu0 0
        %2219 = vmatprep.subr.bf16.mxu0 0
        %2220 = vmatpush1.bf16.xpose.msra.mxu0 0
        %2221 = vmatprep.subr.bf16.mxu0 0
        %2222 = vmatpush1.bf16.xpose.msra.mxu0 0
        %2223 = vmatprep.subr.bf16.mxu0 0
        %2224 = vmatpush1.bf16.xpose.msra.mxu0 0
        %2225 = vmatprep.subr.bf16.mxu0 0
        %2226 = vmatpush1.bf16.xpose.msra.mxu0 0
        %2227 = vmatprep.subr.bf16.mxu0 0
        %2228 = vmatpush1.bf16.xpose.msra.mxu0 0
        %2229 = vmatprep.subr.bf16.mxu0 0
        %2230 = vmatpush1.bf16.xpose.msra.mxu0 0
        %2231 = vmatprep.subr.bf16.mxu0 0
        %2232 = vmatpush1.bf16.xpose.msra.mxu0 0
        %2233 = vmatprep.subr.bf16.mxu0 0
        %2234 = vmatpush1.bf16.xpose.msra.mxu0 0
        %2235 = vmatprep.subr.bf16.mxu0 0
        %2236 = vmatpush1.bf16.xpose.msra.mxu0 0
        %2237 = vmatprep.mubr.bf16.mxu0 0
        %2238 = vmatmul.mubr.bf16.gmra.mrb[0].mxu0 %v2200
        %v2239 = vpop.f32.mrb[0].mxu0
        %v2240 = vadd.f32 0.0, %v2239
        %v2241 = vpop.f32.mrb[0].mxu0
        %v2242 = vpop.f32.mrb[0].mxu0
        %v2243 = vpop.f32.mrb[0].mxu0
        %2244 = vdwg.mxu0
        %2245 = vrot.lane.b32.xlu0 %v1083, 108
        %v2246 = vpop.permute.xlu0 %2245
        %2247 = vrot.lane.b32.xlu0 %v1083, 76
        %v2248 = vpop.permute.xlu0 %2247
        %v2250 = vsel %vm1087, %v2246, 0
        %v2253 = vsel %vm1087, %v2248, 0
        %2255 = vmatprep.subr.bf16.mxu0 0
        %2256 = vmatpush1.bf16.xpose.msra.mxu0 %v2253
        %2257 = vmatprep.subr.bf16.mxu0 0
        %2258 = vmatpush1.bf16.xpose.msra.mxu0 0
        %2259 = vmatprep.subr.bf16.mxu0 0
        %2260 = vmatpush1.bf16.xpose.msra.mxu0 0
        %2261 = vmatprep.subr.bf16.mxu0 0
        %2262 = vmatpush1.bf16.xpose.msra.mxu0 0
        %2263 = vmatprep.subr.bf16.mxu0 0
        %2264 = vmatpush1.bf16.xpose.msra.mxu0 0
        %2265 = vmatprep.subr.bf16.mxu0 0
        %2266 = vmatpush1.bf16.xpose.msra.mxu0 0
        %2267 = vmatprep.subr.bf16.mxu0 0
        %2268 = vmatpush1.bf16.xpose.msra.mxu0 0
        %2269 = vmatprep.subr.bf16.mxu0 0
        %2270 = vmatpush1.bf16.xpose.msra.mxu0 0
        %2271 = vmatprep.subr.bf16.mxu0 0
        %2272 = vmatpush1.bf16.xpose.msra.mxu0 0
        %2273 = vmatprep.subr.bf16.mxu0 0
        %2274 = vmatpush1.bf16.xpose.msra.mxu0 0
        %2275 = vmatprep.subr.bf16.mxu0 0
        %2276 = vmatpush1.bf16.xpose.msra.mxu0 0
        %2277 = vmatprep.subr.bf16.mxu0 0
        %2278 = vmatpush1.bf16.xpose.msra.mxu0 0
        %2279 = vmatprep.subr.bf16.mxu0 0
        %2280 = vmatpush1.bf16.xpose.msra.mxu0 0
        %2281 = vmatprep.subr.bf16.mxu0 0
        %2282 = vmatpush1.bf16.xpose.msra.mxu0 0
        %2283 = vmatprep.subr.bf16.mxu0 0
        %2284 = vmatpush1.bf16.xpose.msra.mxu0 0
        %2285 = vmatprep.subr.bf16.mxu0 0
        %2286 = vmatpush1.bf16.xpose.msra.mxu0 0
        %2287 = vmatprep.mubr.bf16.mxu0 0
        %2288 = vmatmul.mubr.bf16.gmra.mrb[0].mxu0 %v2250
        %v2289 = vpop.f32.mrb[0].mxu0
        %v2290 = vadd.f32 0.0, %v2289
        %v2291 = vpop.f32.mrb[0].mxu0
        %v2292 = vpop.f32.mrb[0].mxu0
        %v2293 = vpop.f32.mrb[0].mxu0
        %2294 = vdwg.mxu0
        %v2295 = vmul.f32 %v2240, 0.5
        %v2296 = vmul.f32 %v2290, 0.5
        %v2297 = vsel %vm1185, %v2295, -inf
        %2298 = vmax.xlane.f32.xlu0 %v2297
        %v2299 = vpop.xlane.xlu0 %2298
        %v2300 = vsel %vm1185, %v2296, -inf
        %2301 = vmax.xlane.f32.xlu0 %v2300
        %v2302 = vpop.xlane.xlu0 %2301
        %v2303 = vsub.f32 %v2295, %v2299
        %v2304 = vsub.f32 %v2296, %v2302
        %v2305 = vmul.f32 %v2303, 1.442695
        %v2306 = vpow.pop %v2305
        %v2307 = vmul.f32 %v2304, 1.442695
        %v2308 = vpow.pop %v2307
        %v2309 = vsel %vm1185, %v2306, 0.0
        %2310 = vadd.xlane.f32.xlu0 %v2309
        %v2311 = vpop.xlane.xlu0 %2310
        %v2312 = vsel %vm1185, %v2308, 0.0
        %2313 = vadd.xlane.f32.xlu0 %v2312
        %v2314 = vpop.xlane.xlu0 %2313
        %v2315 = vrcp.pop %v2311
        %v2316 = vrcp.pop %v2314
        %v2317 = vmul.f32 %v2306, %v2315
        %v2318 = vmul.f32 %v2308, %v2316
        %v2319 = vpack.c.bf16 %v2317, %v2317
        %v2320 = vpack.c.bf16 %v2318, %v2318
        %2321 = vrot.lane.b32.xlu0 %v1082, 44
        %v2322 = vpop.permute.xlu0 %2321
        %v2324 = vsel %vm1185, %v2319, 0
        %v2327 = vsel %vm1215, %v2322, 0
        %2329 = vmatprep.subr.bf16.mxu0 0
        %2330 = vmatpush1.bf16.msra.mxu0 %v2327
        %2331 = vmatprep.subr.bf16.mxu0 0
        %2332 = vmatpush1.bf16.msra.mxu0 0
        %2333 = vmatprep.subr.bf16.mxu0 0
        %2334 = vmatpush1.bf16.msra.mxu0 0
        %2335 = vmatprep.subr.bf16.mxu0 0
        %2336 = vmatpush1.bf16.msra.mxu0 0
        %2337 = vmatprep.subr.bf16.mxu0 0
        %2338 = vmatpush1.bf16.msra.mxu0 0
        %2339 = vmatprep.subr.bf16.mxu0 0
        %2340 = vmatpush1.bf16.msra.mxu0 0
        %2341 = vmatprep.subr.bf16.mxu0 0
        %2342 = vmatpush1.bf16.msra.mxu0 0
        %2343 = vmatprep.subr.bf16.mxu0 0
        %2344 = vmatpush1.bf16.msra.mxu0 0
        %2345 = vmatprep.subr.bf16.mxu0 0
        %2346 = vmatpush1.bf16.msra.mxu0 0
        %2347 = vmatprep.subr.bf16.mxu0 0
        %2348 = vmatpush1.bf16.msra.mxu0 0
        %2349 = vmatprep.subr.bf16.mxu0 0
        %2350 = vmatpush1.bf16.msra.mxu0 0
        %2351 = vmatprep.subr.bf16.mxu0 0
        %2352 = vmatpush1.bf16.msra.mxu0 0
        %2353 = vmatprep.subr.bf16.mxu0 0
        %2354 = vmatpush1.bf16.msra.mxu0 0
        %2355 = vmatprep.subr.bf16.mxu0 0
        %2356 = vmatpush1.bf16.msra.mxu0 0
        %2357 = vmatprep.subr.bf16.mxu0 0
        %2358 = vmatpush1.bf16.msra.mxu0 0
        %2359 = vmatprep.subr.bf16.mxu0 0
        %2360 = vmatpush1.bf16.msra.mxu0 0
        %2361 = vmatprep.mubr.bf16.mxu0 0
        %2362 = vmatmul.mubr.bf16.gmra.mrb[0].mxu0 %v2324
        %v2363 = vpop.f32.mrb[0].mxu0
        %v2364 = vadd.f32 0.0, %v2363
        %v2365 = vpop.f32.mrb[0].mxu0
        %v2366 = vpop.f32.mrb[0].mxu0
        %v2367 = vpop.f32.mrb[0].mxu0
        %2368 = vdwg.mxu0
        %2369 = vrot.lane.b32.xlu0 %v1083, 44
        %v2370 = vpop.permute.xlu0 %2369
        %v2372 = vsel %vm1185, %v2320, 0
        %v2375 = vsel %vm1215, %v2370, 0
        %2377 = vmatprep.subr.bf16.mxu0 0
        %2378 = vmatpush1.bf16.msra.mxu0 %v2375
        %2379 = vmatprep.subr.bf16.mxu0 0
        %2380 = vmatpush1.bf16.msra.mxu0 0
        %2381 = vmatprep.subr.bf16.mxu0 0
        %2382 = vmatpush1.bf16.msra.mxu0 0
        %2383 = vmatprep.subr.bf16.mxu0 0
        %2384 = vmatpush1.bf16.msra.mxu0 0
        %2385 = vmatprep.subr.bf16.mxu0 0
        %2386 = vmatpush1.bf16.msra.mxu0 0
        %2387 = vmatprep.subr.bf16.mxu0 0
        %2388 = vmatpush1.bf16.msra.mxu0 0
        %2389 = vmatprep.subr.bf16.mxu0 0
        %2390 = vmatpush1.bf16.msra.mxu0 0
        %2391 = vmatprep.subr.bf16.mxu0 0
        %2392 = vmatpush1.bf16.msra.mxu0 0
        %2393 = vmatprep.subr.bf16.mxu0 0
        %2394 = vmatpush1.bf16.msra.mxu0 0
        %2395 = vmatprep.subr.bf16.mxu0 0
        %2396 = vmatpush1.bf16.msra.mxu0 0
        %2397 = vmatprep.subr.bf16.mxu0 0
        %2398 = vmatpush1.bf16.msra.mxu0 0
        %2399 = vmatprep.subr.bf16.mxu0 0
        %2400 = vmatpush1.bf16.msra.mxu0 0
        %2401 = vmatprep.subr.bf16.mxu0 0
        %2402 = vmatpush1.bf16.msra.mxu0 0
        %2403 = vmatprep.subr.bf16.mxu0 0
        %2404 = vmatpush1.bf16.msra.mxu0 0
        %2405 = vmatprep.subr.bf16.mxu0 0
        %2406 = vmatpush1.bf16.msra.mxu0 0
        %2407 = vmatprep.subr.bf16.mxu0 0
        %2408 = vmatpush1.bf16.msra.mxu0 0
        %2409 = vmatprep.mubr.bf16.mxu0 0
        %2410 = vmatmul.mubr.bf16.gmra.mrb[0].mxu0 %v2372
        %v2411 = vpop.f32.mrb[0].mxu0
        %v2412 = vadd.f32 0.0, %v2411
        %v2413 = vpop.f32.mrb[0].mxu0
        %v2414 = vpop.f32.mrb[0].mxu0
        %v2415 = vpop.f32.mrb[0].mxu0
        %2416 = vdwg.mxu0
        %2417 = vrot.lane.b32.xlu0 %v1082, 104
        %v2418 = vpop.permute.xlu0 %2417
        %2419 = vrot.lane.b32.xlu0 %v1082, 72
        %v2420 = vpop.permute.xlu0 %2419
        %v2422 = vsel %vm1087, %v2418, 0
        %v2425 = vsel %vm1087, %v2420, 0
        %2427 = vmatprep.subr.bf16.mxu0 0
        %2428 = vmatpush1.bf16.xpose.msra.mxu0 %v2425
        %2429 = vmatprep.subr.bf16.mxu0 0
        %2430 = vmatpush1.bf16.xpose.msra.mxu0 0
        %2431 = vmatprep.subr.bf16.mxu0 0
        %2432 = vmatpush1.bf16.xpose.msra.mxu0 0
        %2433 = vmatprep.subr.bf16.mxu0 0
        %2434 = vmatpush1.bf16.xpose.msra.mxu0 0
        %2435 = vmatprep.subr.bf16.mxu0 0
        %2436 = vmatpush1.bf16.xpose.msra.mxu0 0
        %2437 = vmatprep.subr.bf16.mxu0 0
        %2438 = vmatpush1.bf16.xpose.msra.mxu0 0
        %2439 = vmatprep.subr.bf16.mxu0 0
        %2440 = vmatpush1.bf16.xpose.msra.mxu0 0
        %2441 = vmatprep.subr.bf16.mxu0 0
        %2442 = vmatpush1.bf16.xpose.msra.mxu0 0
        %2443 = vmatprep.subr.bf16.mxu0 0
        %2444 = vmatpush1.bf16.xpose.msra.mxu0 0
        %2445 = vmatprep.subr.bf16.mxu0 0
        %2446 = vmatpush1.bf16.xpose.msra.mxu0 0
        %2447 = vmatprep.subr.bf16.mxu0 0
        %2448 = vmatpush1.bf16.xpose.msra.mxu0 0
        %2449 = vmatprep.subr.bf16.mxu0 0
        %2450 = vmatpush1.bf16.xpose.msra.mxu0 0
        %2451 = vmatprep.subr.bf16.mxu0 0
        %2452 = vmatpush1.bf16.xpose.msra.mxu0 0
        %2453 = vmatprep.subr.bf16.mxu0 0
        %2454 = vmatpush1.bf16.xpose.msra.mxu0 0
        %2455 = vmatprep.subr.bf16.mxu0 0
        %2456 = vmatpush1.bf16.xpose.msra.mxu0 0
        %2457 = vmatprep.subr.bf16.mxu0 0
        %2458 = vmatpush1.bf16.xpose.msra.mxu0 0
        %2459 = vmatprep.mubr.bf16.mxu0 0
        %2460 = vmatmul.mubr.bf16.gmra.mrb[0].mxu0 %v2422
        %v2461 = vpop.f32.mrb[0].mxu0
        %v2462 = vadd.f32 0.0, %v2461
        %v2463 = vpop.f32.mrb[0].mxu0
        %v2464 = vpop.f32.mrb[0].mxu0
        %v2465 = vpop.f32.mrb[0].mxu0
        %2466 = vdwg.mxu0
        %2467 = vrot.lane.b32.xlu0 %v1083, 104
        %v2468 = vpop.permute.xlu0 %2467
        %2469 = vrot.lane.b32.xlu0 %v1083, 72
        %v2470 = vpop.permute.xlu0 %2469
        %v2472 = vsel %vm1087, %v2468, 0
        %v2475 = vsel %vm1087, %v2470, 0
        %2477 = vmatprep.subr.bf16.mxu0 0
        %2478 = vmatpush1.bf16.xpose.msra.mxu0 %v2475
        %2479 = vmatprep.subr.bf16.mxu0 0
        %2480 = vmatpush1.bf16.xpose.msra.mxu0 0
        %2481 = vmatprep.subr.bf16.mxu0 0
        %2482 = vmatpush1.bf16.xpose.msra.mxu0 0
        %2483 = vmatprep.subr.bf16.mxu0 0
        %2484 = vmatpush1.bf16.xpose.msra.mxu0 0
        %2485 = vmatprep.subr.bf16.mxu0 0
        %2486 = vmatpush1.bf16.xpose.msra.mxu0 0
        %2487 = vmatprep.subr.bf16.mxu0 0
        %2488 = vmatpush1.bf16.xpose.msra.mxu0 0
        %2489 = vmatprep.subr.bf16.mxu0 0
        %2490 = vmatpush1.bf16.xpose.msra.mxu0 0
        %2491 = vmatprep.subr.bf16.mxu0 0
        %2492 = vmatpush1.bf16.xpose.msra.mxu0 0
        %2493 = vmatprep.subr.bf16.mxu0 0
        %2494 = vmatpush1.bf16.xpose.msra.mxu0 0
        %2495 = vmatprep.subr.bf16.mxu0 0
        %2496 = vmatpush1.bf16.xpose.msra.mxu0 0
        %2497 = vmatprep.subr.bf16.mxu0 0
        %2498 = vmatpush1.bf16.xpose.msra.mxu0 0
        %2499 = vmatprep.subr.bf16.mxu0 0
        %2500 = vmatpush1.bf16.xpose.msra.mxu0 0
        %2501 = vmatprep.subr.bf16.mxu0 0
        %2502 = vmatpush1.bf16.xpose.msra.mxu0 0
        %2503 = vmatprep.subr.bf16.mxu0 0
        %2504 = vmatpush1.bf16.xpose.msra.mxu0 0
        %2505 = vmatprep.subr.bf16.mxu0 0
        %2506 = vmatpush1.bf16.xpose.msra.mxu0 0
        %2507 = vmatprep.subr.bf16.mxu0 0
        %2508 = vmatpush1.bf16.xpose.msra.mxu0 0
        %2509 = vmatprep.mubr.bf16.mxu0 0
        %2510 = vmatmul.mubr.bf16.gmra.mrb[0].mxu0 %v2472
        %v2511 = vpop.f32.mrb[0].mxu0
        %v2512 = vadd.f32 0.0, %v2511
        %v2513 = vpop.f32.mrb[0].mxu0
        %v2514 = vpop.f32.mrb[0].mxu0
        %v2515 = vpop.f32.mrb[0].mxu0
        %2516 = vdwg.mxu0
        %v2517 = vmul.f32 %v2462, 0.5
        %v2518 = vmul.f32 %v2512, 0.5
        %v2519 = vsel %vm1185, %v2517, -inf
        %2520 = vmax.xlane.f32.xlu0 %v2519
        %v2521 = vpop.xlane.xlu0 %2520
        %v2522 = vsel %vm1185, %v2518, -inf
        %2523 = vmax.xlane.f32.xlu0 %v2522
        %v2524 = vpop.xlane.xlu0 %2523
        %v2525 = vsub.f32 %v2517, %v2521
        %v2526 = vsub.f32 %v2518, %v2524
        %v2527 = vmul.f32 %v2525, 1.442695
        %v2528 = vpow.pop %v2527
        %v2529 = vmul.f32 %v2526, 1.442695
        %v2530 = vpow.pop %v2529
        %v2531 = vsel %vm1185, %v2528, 0.0
        %2532 = vadd.xlane.f32.xlu0 %v2531
        %v2533 = vpop.xlane.xlu0 %2532
        %v2534 = vsel %vm1185, %v2530, 0.0
        %2535 = vadd.xlane.f32.xlu0 %v2534
        %v2536 = vpop.xlane.xlu0 %2535
        %v2537 = vrcp.pop %v2533
        %v2538 = vrcp.pop %v2536
        %v2539 = vmul.f32 %v2528, %v2537
        %v2540 = vmul.f32 %v2530, %v2538
        %v2541 = vpack.c.bf16 %v2539, %v2539
        %v2542 = vpack.c.bf16 %v2540, %v2540
        %2543 = vrot.lane.b32.xlu0 %v1082, 40
        %v2544 = vpop.permute.xlu0 %2543
        %v2546 = vsel %vm1185, %v2541, 0
        %v2549 = vsel %vm1215, %v2544, 0
        %2551 = vmatprep.subr.bf16.mxu0 0
        %2552 = vmatpush1.bf16.msra.mxu0 %v2549
        %2553 = vmatprep.subr.bf16.mxu0 0
        %2554 = vmatpush1.bf16.msra.mxu0 0
        %2555 = vmatprep.subr.bf16.mxu0 0
        %2556 = vmatpush1.bf16.msra.mxu0 0
        %2557 = vmatprep.subr.bf16.mxu0 0
        %2558 = vmatpush1.bf16.msra.mxu0 0
        %2559 = vmatprep.subr.bf16.mxu0 0
        %2560 = vmatpush1.bf16.msra.mxu0 0
        %2561 = vmatprep.subr.bf16.mxu0 0
        %2562 = vmatpush1.bf16.msra.mxu0 0
        %2563 = vmatprep.subr.bf16.mxu0 0
        %2564 = vmatpush1.bf16.msra.mxu0 0
        %2565 = vmatprep.subr.bf16.mxu0 0
        %2566 = vmatpush1.bf16.msra.mxu0 0
        %2567 = vmatprep.subr.bf16.mxu0 0
        %2568 = vmatpush1.bf16.msra.mxu0 0
        %2569 = vmatprep.subr.bf16.mxu0 0
        %2570 = vmatpush1.bf16.msra.mxu0 0
        %2571 = vmatprep.subr.bf16.mxu0 0
        %2572 = vmatpush1.bf16.msra.mxu0 0
        %2573 = vmatprep.subr.bf16.mxu0 0
        %2574 = vmatpush1.bf16.msra.mxu0 0
        %2575 = vmatprep.subr.bf16.mxu0 0
        %2576 = vmatpush1.bf16.msra.mxu0 0
        %2577 = vmatprep.subr.bf16.mxu0 0
        %2578 = vmatpush1.bf16.msra.mxu0 0
        %2579 = vmatprep.subr.bf16.mxu0 0
        %2580 = vmatpush1.bf16.msra.mxu0 0
        %2581 = vmatprep.subr.bf16.mxu0 0
        %2582 = vmatpush1.bf16.msra.mxu0 0
        %2583 = vmatprep.mubr.bf16.mxu0 0
        %2584 = vmatmul.mubr.bf16.gmra.mrb[0].mxu0 %v2546
        %v2585 = vpop.f32.mrb[0].mxu0
        %v2586 = vadd.f32 0.0, %v2585
        %v2587 = vpop.f32.mrb[0].mxu0
        %v2588 = vpop.f32.mrb[0].mxu0
        %v2589 = vpop.f32.mrb[0].mxu0
        %2590 = vdwg.mxu0
        %2591 = vrot.lane.b32.xlu0 %v1083, 40
        %v2592 = vpop.permute.xlu0 %2591
        %v2594 = vsel %vm1185, %v2542, 0
        %v2597 = vsel %vm1215, %v2592, 0
        %2599 = vmatprep.subr.bf16.mxu0 0
        %2600 = vmatpush1.bf16.msra.mxu0 %v2597
        %2601 = vmatprep.subr.bf16.mxu0 0
        %2602 = vmatpush1.bf16.msra.mxu0 0
        %2603 = vmatprep.subr.bf16.mxu0 0
        %2604 = vmatpush1.bf16.msra.mxu0 0
        %2605 = vmatprep.subr.bf16.mxu0 0
        %2606 = vmatpush1.bf16.msra.mxu0 0
        %2607 = vmatprep.subr.bf16.mxu0 0
        %2608 = vmatpush1.bf16.msra.mxu0 0
        %2609 = vmatprep.subr.bf16.mxu0 0
        %2610 = vmatpush1.bf16.msra.mxu0 0
        %2611 = vmatprep.subr.bf16.mxu0 0
        %2612 = vmatpush1.bf16.msra.mxu0 0
        %2613 = vmatprep.subr.bf16.mxu0 0
        %2614 = vmatpush1.bf16.msra.mxu0 0
        %2615 = vmatprep.subr.bf16.mxu0 0
        %2616 = vmatpush1.bf16.msra.mxu0 0
        %2617 = vmatprep.subr.bf16.mxu0 0
        %2618 = vmatpush1.bf16.msra.mxu0 0
        %2619 = vmatprep.subr.bf16.mxu0 0
        %2620 = vmatpush1.bf16.msra.mxu0 0
        %2621 = vmatprep.subr.bf16.mxu0 0
        %2622 = vmatpush1.bf16.msra.mxu0 0
        %2623 = vmatprep.subr.bf16.mxu0 0
        %2624 = vmatpush1.bf16.msra.mxu0 0
        %2625 = vmatprep.subr.bf16.mxu0 0
        %2626 = vmatpush1.bf16.msra.mxu0 0
        %2627 = vmatprep.subr.bf16.mxu0 0
        %2628 = vmatpush1.bf16.msra.mxu0 0
        %2629 = vmatprep.subr.bf16.mxu0 0
        %2630 = vmatpush1.bf16.msra.mxu0 0
        %2631 = vmatprep.mubr.bf16.mxu0 0
        %2632 = vmatmul.mubr.bf16.gmra.mrb[0].mxu0 %v2594
        %v2633 = vpop.f32.mrb[0].mxu0
        %v2634 = vadd.f32 0.0, %v2633
        %v2635 = vpop.f32.mrb[0].mxu0
        %v2636 = vpop.f32.mrb[0].mxu0
        %v2637 = vpop.f32.mrb[0].mxu0
        %2638 = vdwg.mxu0
        %2639 = vrot.lane.b32.xlu0 %v1082, 100
        %v2640 = vpop.permute.xlu0 %2639
        %2641 = vrot.lane.b32.xlu0 %v1082, 68
        %v2642 = vpop.permute.xlu0 %2641
        %v2644 = vsel %vm1087, %v2640, 0
        %v2647 = vsel %vm1087, %v2642, 0
        %2649 = vmatprep.subr.bf16.mxu0 0
        %2650 = vmatpush1.bf16.xpose.msra.mxu0 %v2647
        %2651 = vmatprep.subr.bf16.mxu0 0
        %2652 = vmatpush1.bf16.xpose.msra.mxu0 0
        %2653 = vmatprep.subr.bf16.mxu0 0
        %2654 = vmatpush1.bf16.xpose.msra.mxu0 0
        %2655 = vmatprep.subr.bf16.mxu0 0
        %2656 = vmatpush1.bf16.xpose.msra.mxu0 0
        %2657 = vmatprep.subr.bf16.mxu0 0
        %2658 = vmatpush1.bf16.xpose.msra.mxu0 0
        %2659 = vmatprep.subr.bf16.mxu0 0
        %2660 = vmatpush1.bf16.xpose.msra.mxu0 0
        %2661 = vmatprep.subr.bf16.mxu0 0
        %2662 = vmatpush1.bf16.xpose.msra.mxu0 0
        %2663 = vmatprep.subr.bf16.mxu0 0
        %2664 = vmatpush1.bf16.xpose.msra.mxu0 0
        %2665 = vmatprep.subr.bf16.mxu0 0
        %2666 = vmatpush1.bf16.xpose.msra.mxu0 0
        %2667 = vmatprep.subr.bf16.mxu0 0
        %2668 = vmatpush1.bf16.xpose.msra.mxu0 0
        %2669 = vmatprep.subr.bf16.mxu0 0
        %2670 = vmatpush1.bf16.xpose.msra.mxu0 0
        %2671 = vmatprep.subr.bf16.mxu0 0
        %2672 = vmatpush1.bf16.xpose.msra.mxu0 0
        %2673 = vmatprep.subr.bf16.mxu0 0
        %2674 = vmatpush1.bf16.xpose.msra.mxu0 0
        %2675 = vmatprep.subr.bf16.mxu0 0
        %2676 = vmatpush1.bf16.xpose.msra.mxu0 0
        %2677 = vmatprep.subr.bf16.mxu0 0
        %2678 = vmatpush1.bf16.xpose.msra.mxu0 0
        %2679 = vmatprep.subr.bf16.mxu0 0
        %2680 = vmatpush1.bf16.xpose.msra.mxu0 0
        %2681 = vmatprep.mubr.bf16.mxu0 0
        %2682 = vmatmul.mubr.bf16.gmra.mrb[0].mxu0 %v2644
        %v2683 = vpop.f32.mrb[0].mxu0
        %v2684 = vadd.f32 0.0, %v2683
        %v2685 = vpop.f32.mrb[0].mxu0
        %v2686 = vpop.f32.mrb[0].mxu0
        %v2687 = vpop.f32.mrb[0].mxu0
        %2688 = vdwg.mxu0
        %2689 = vrot.lane.b32.xlu0 %v1083, 100
        %v2690 = vpop.permute.xlu0 %2689
        %2691 = vrot.lane.b32.xlu0 %v1083, 68
        %v2692 = vpop.permute.xlu0 %2691
        %v2694 = vsel %vm1087, %v2690, 0
        %v2697 = vsel %vm1087, %v2692, 0
        %2699 = vmatprep.subr.bf16.mxu0 0
        %2700 = vmatpush1.bf16.xpose.msra.mxu0 %v2697
        %2701 = vmatprep.subr.bf16.mxu0 0
        %2702 = vmatpush1.bf16.xpose.msra.mxu0 0
        %2703 = vmatprep.subr.bf16.mxu0 0
        %2704 = vmatpush1.bf16.xpose.msra.mxu0 0
        %2705 = vmatprep.subr.bf16.mxu0 0
        %2706 = vmatpush1.bf16.xpose.msra.mxu0 0
        %2707 = vmatprep.subr.bf16.mxu0 0
        %2708 = vmatpush1.bf16.xpose.msra.mxu0 0
        %2709 = vmatprep.subr.bf16.mxu0 0
        %2710 = vmatpush1.bf16.xpose.msra.mxu0 0
        %2711 = vmatprep.subr.bf16.mxu0 0
        %2712 = vmatpush1.bf16.xpose.msra.mxu0 0
        %2713 = vmatprep.subr.bf16.mxu0 0
        %2714 = vmatpush1.bf16.xpose.msra.mxu0 0
        %2715 = vmatprep.subr.bf16.mxu0 0
        %2716 = vmatpush1.bf16.xpose.msra.mxu0 0
        %2717 = vmatprep.subr.bf16.mxu0 0
        %2718 = vmatpush1.bf16.xpose.msra.mxu0 0
        %2719 = vmatprep.subr.bf16.mxu0 0
        %2720 = vmatpush1.bf16.xpose.msra.mxu0 0
        %2721 = vmatprep.subr.bf16.mxu0 0
        %2722 = vmatpush1.bf16.xpose.msra.mxu0 0
        %2723 = vmatprep.subr.bf16.mxu0 0
        %2724 = vmatpush1.bf16.xpose.msra.mxu0 0
        %2725 = vmatprep.subr.bf16.mxu0 0
        %2726 = vmatpush1.bf16.xpose.msra.mxu0 0
        %2727 = vmatprep.subr.bf16.mxu0 0
        %2728 = vmatpush1.bf16.xpose.msra.mxu0 0
        %2729 = vmatprep.subr.bf16.mxu0 0
        %2730 = vmatpush1.bf16.xpose.msra.mxu0 0
        %2731 = vmatprep.mubr.bf16.mxu0 0
        %2732 = vmatmul.mubr.bf16.gmra.mrb[0].mxu0 %v2694
        %v2733 = vpop.f32.mrb[0].mxu0
        %v2734 = vadd.f32 0.0, %v2733
        %v2735 = vpop.f32.mrb[0].mxu0
        %v2736 = vpop.f32.mrb[0].mxu0
        %v2737 = vpop.f32.mrb[0].mxu0
        %2738 = vdwg.mxu0
        %v2739 = vmul.f32 %v2684, 0.5
        %v2740 = vmul.f32 %v2734, 0.5
        %v2741 = vsel %vm1185, %v2739, -inf
        %2742 = vmax.xlane.f32.xlu0 %v2741
        %v2743 = vpop.xlane.xlu0 %2742
        %v2744 = vsel %vm1185, %v2740, -inf
        %2745 = vmax.xlane.f32.xlu0 %v2744
        %v2746 = vpop.xlane.xlu0 %2745
        %v2747 = vsub.f32 %v2739, %v2743
        %v2748 = vsub.f32 %v2740, %v2746
        %v2749 = vmul.f32 %v2747, 1.442695
        %v2750 = vpow.pop %v2749
        %v2751 = vmul.f32 %v2748, 1.442695
        %v2752 = vpow.pop %v2751
        %v2753 = vsel %vm1185, %v2750, 0.0
        %2754 = vadd.xlane.f32.xlu0 %v2753
        %v2755 = vpop.xlane.xlu0 %2754
        %v2756 = vsel %vm1185, %v2752, 0.0
        %2757 = vadd.xlane.f32.xlu0 %v2756
        %v2758 = vpop.xlane.xlu0 %2757
        %v2759 = vrcp.pop %v2755
        %v2760 = vrcp.pop %v2758
        %v2761 = vmul.f32 %v2750, %v2759
        %v2762 = vmul.f32 %v2752, %v2760
        %v2763 = vpack.c.bf16 %v2761, %v2761
        %v2764 = vpack.c.bf16 %v2762, %v2762
        %2765 = vrot.lane.b32.xlu0 %v1082, 36
        %v2766 = vpop.permute.xlu0 %2765
        %v2768 = vsel %vm1185, %v2763, 0
        %v2771 = vsel %vm1215, %v2766, 0
        %2773 = vmatprep.subr.bf16.mxu0 0
        %2774 = vmatpush1.bf16.msra.mxu0 %v2771
        %2775 = vmatprep.subr.bf16.mxu0 0
        %2776 = vmatpush1.bf16.msra.mxu0 0
        %2777 = vmatprep.subr.bf16.mxu0 0
        %2778 = vmatpush1.bf16.msra.mxu0 0
        %2779 = vmatprep.subr.bf16.mxu0 0
        %2780 = vmatpush1.bf16.msra.mxu0 0
        %2781 = vmatprep.subr.bf16.mxu0 0
        %2782 = vmatpush1.bf16.msra.mxu0 0
        %2783 = vmatprep.subr.bf16.mxu0 0
        %2784 = vmatpush1.bf16.msra.mxu0 0
        %2785 = vmatprep.subr.bf16.mxu0 0
        %2786 = vmatpush1.bf16.msra.mxu0 0
        %2787 = vmatprep.subr.bf16.mxu0 0
        %2788 = vmatpush1.bf16.msra.mxu0 0
        %2789 = vmatprep.subr.bf16.mxu0 0
        %2790 = vmatpush1.bf16.msra.mxu0 0
        %2791 = vmatprep.subr.bf16.mxu0 0
        %2792 = vmatpush1.bf16.msra.mxu0 0
        %2793 = vmatprep.subr.bf16.mxu0 0
        %2794 = vmatpush1.bf16.msra.mxu0 0
        %2795 = vmatprep.subr.bf16.mxu0 0
        %2796 = vmatpush1.bf16.msra.mxu0 0
        %2797 = vmatprep.subr.bf16.mxu0 0
        %2798 = vmatpush1.bf16.msra.mxu0 0
        %2799 = vmatprep.subr.bf16.mxu0 0
        %2800 = vmatpush1.bf16.msra.mxu0 0
        %2801 = vmatprep.subr.bf16.mxu0 0
        %2802 = vmatpush1.bf16.msra.mxu0 0
        %2803 = vmatprep.subr.bf16.mxu0 0
        %2804 = vmatpush1.bf16.msra.mxu0 0
        %2805 = vmatprep.mubr.bf16.mxu0 0
        %2806 = vmatmul.mubr.bf16.gmra.mrb[0].mxu0 %v2768
        %v2807 = vpop.f32.mrb[0].mxu0
        %v2808 = vadd.f32 0.0, %v2807
        %v2809 = vpop.f32.mrb[0].mxu0
        %v2810 = vpop.f32.mrb[0].mxu0
        %v2811 = vpop.f32.mrb[0].mxu0
        %2812 = vdwg.mxu0
        %2813 = vrot.lane.b32.xlu0 %v1083, 36
        %v2814 = vpop.permute.xlu0 %2813
        %v2816 = vsel %vm1185, %v2764, 0
        %v2819 = vsel %vm1215, %v2814, 0
        %2821 = vmatprep.subr.bf16.mxu0 0
        %2822 = vmatpush1.bf16.msra.mxu0 %v2819
        %2823 = vmatprep.subr.bf16.mxu0 0
        %2824 = vmatpush1.bf16.msra.mxu0 0
        %2825 = vmatprep.subr.bf16.mxu0 0
        %2826 = vmatpush1.bf16.msra.mxu0 0
        %2827 = vmatprep.subr.bf16.mxu0 0
        %2828 = vmatpush1.bf16.msra.mxu0 0
        %2829 = vmatprep.subr.bf16.mxu0 0
        %2830 = vmatpush1.bf16.msra.mxu0 0
        %2831 = vmatprep.subr.bf16.mxu0 0
        %2832 = vmatpush1.bf16.msra.mxu0 0
        %2833 = vmatprep.subr.bf16.mxu0 0
        %2834 = vmatpush1.bf16.msra.mxu0 0
        %2835 = vmatprep.subr.bf16.mxu0 0
        %2836 = vmatpush1.bf16.msra.mxu0 0
        %2837 = vmatprep.subr.bf16.mxu0 0
        %2838 = vmatpush1.bf16.msra.mxu0 0
        %2839 = vmatprep.subr.bf16.mxu0 0
        %2840 = vmatpush1.bf16.msra.mxu0 0
        %2841 = vmatprep.subr.bf16.mxu0 0
        %2842 = vmatpush1.bf16.msra.mxu0 0
        %2843 = vmatprep.subr.bf16.mxu0 0
        %2844 = vmatpush1.bf16.msra.mxu0 0
        %2845 = vmatprep.subr.bf16.mxu0 0
        %2846 = vmatpush1.bf16.msra.mxu0 0
        %2847 = vmatprep.subr.bf16.mxu0 0
        %2848 = vmatpush1.bf16.msra.mxu0 0
        %2849 = vmatprep.subr.bf16.mxu0 0
        %2850 = vmatpush1.bf16.msra.mxu0 0
        %2851 = vmatprep.subr.bf16.mxu0 0
        %2852 = vmatpush1.bf16.msra.mxu0 0
        %2853 = vmatprep.mubr.bf16.mxu0 0
        %2854 = vmatmul.mubr.bf16.gmra.mrb[0].mxu0 %v2816
        %v2855 = vpop.f32.mrb[0].mxu0
        %v2856 = vadd.f32 0.0, %v2855
        %v2857 = vpop.f32.mrb[0].mxu0
        %v2858 = vpop.f32.mrb[0].mxu0
        %v2859 = vpop.f32.mrb[0].mxu0
        %2860 = vdwg.mxu0
        %2863 = vrot.lane.b32.xlu0 %v1476, 4
        %v2864 = vpop.permute.xlu0 %2863
        %2865 = vrot.lane.b32.xlu0 %v1524, 4
        %v2866 = vpop.permute.xlu0 %2865
        %2871 = vrot.lane.b32.xlu0 %v1698, 8
        %v2872 = vpop.permute.xlu0 %2871
        %2873 = vrot.lane.b32.xlu0 %v1746, 8
        %v2874 = vpop.permute.xlu0 %2873
        %2879 = vrot.lane.b32.xlu0 %v1920, 12
        %v2880 = vpop.permute.xlu0 %2879
        %2881 = vrot.lane.b32.xlu0 %v1968, 12
        %v2882 = vpop.permute.xlu0 %2881
        %2887 = vrot.lane.b32.xlu0 %v2142, 16
        %v2888 = vpop.permute.xlu0 %2887
        %2889 = vrot.lane.b32.xlu0 %v2190, 16
        %v2890 = vpop.permute.xlu0 %2889
        %2895 = vrot.lane.b32.xlu0 %v2364, 20
        %v2896 = vpop.permute.xlu0 %2895
        %2897 = vrot.lane.b32.xlu0 %v2412, 20
        %v2898 = vpop.permute.xlu0 %2897
        %2903 = vrot.lane.b32.xlu0 %v2586, 24
        %v2904 = vpop.permute.xlu0 %2903
        %2905 = vrot.lane.b32.xlu0 %v2634, 24
        %v2906 = vpop.permute.xlu0 %2905
        %2911 = vrot.lane.b32.xlu0 %v2808, 28
        %v2912 = vpop.permute.xlu0 %2911
        %2913 = vrot.lane.b32.xlu0 %v2856, 28
        %v2914 = vpop.permute.xlu0 %2913
        %v2917 = vsel %vm1087, %v1254, %v2864
        %v2918 = vsel %vm1087, %v1302, %v2866
        %v2919 = vsel %vm1185, %v2917, %v2872
        %v2920 = vsel %vm1185, %v2918, %v2874
        %vm2921 = vcmask 97280
        %v2922 = vsel %vm2921, %v2919, %v2880
        %v2923 = vsel %vm2921, %v2920, %v2882
        %vm2924 = vcmask 130048
        %v2925 = vsel %vm2924, %v2922, %v2888
        %v2926 = vsel %vm2924, %v2923, %v2890
        %vm2927 = vcmask 162816
        %v2928 = vsel %vm2927, %v2925, %v2896
        %v2929 = vsel %vm2927, %v2926, %v2898
        %vm2930 = vcmask 195584
        %v2931 = vsel %vm2930, %v2928, %v2904
        %v2932 = vsel %vm2930, %v2929, %v2906
        %vm2933 = vcmask 228352
        %v2934 = vsel %vm2933, %v2931, %v2912
        %v2935 = vsel %vm2933, %v2932, %v2914
        %v2936 = vpack.c.bf16 %v2935, %v2934
        %v2937 = vld [vmem:[%s845] sm:$0xf]
        %v2938 = vld [vmem:[%s845 + $0x4] sm:$0xf]
        %v2939 = vld [vmem:[%s845 + $0x8] sm:$0xf]
        %v2940 = vld [vmem:[%s845 + $0xc] sm:$0xf]
        %v2941 = vld [vmem:[%s848] sm:$0x1]
        %v2943 = vlaneseq
        %v2944 = vshrl.u32 %v2943, 7
        %v2945 = vsub.s32 0, %v2944
        %v2946 = vrot.slane %v2941, %v2945
        %v2952 = vunpack.c.l.b16 %v2937
        %v2953 = vunpack.c.l.b16 %v2938
        %v2954 = vunpack.c.l.b16 %v2939
        %v2955 = vunpack.c.l.b16 %v2940
        %v2956 = vpack.c.b16 %v2953, %v2952
        %v2957 = vpack.c.b16 %v2955, %v2954
        %v2961 = vsel %vm968, %v2936, 0
        %2963 = vmatprep.subr.bf16.mxu0 0
        %2964 = vmatpush1.bf16.msra.mxu0 %v2956
        %2965 = vmatprep.subr.bf16.mxu0 0
        %2966 = vmatpush1.bf16.msra.mxu0 %v2957
        %2967 = vmatprep.subr.bf16.mxu0 0
        %2968 = vmatpush1.bf16.msra.mxu0 0
        %2969 = vmatprep.subr.bf16.mxu0 0
        %2970 = vmatpush1.bf16.msra.mxu0 0
        %2971 = vmatprep.subr.bf16.mxu0 0
        %2972 = vmatpush1.bf16.msra.mxu0 0
        %2973 = vmatprep.subr.bf16.mxu0 0
        %2974 = vmatpush1.bf16.msra.mxu0 0
        %2975 = vmatprep.subr.bf16.mxu0 0
        %2976 = vmatpush1.bf16.msra.mxu0 0
        %2977 = vmatprep.subr.bf16.mxu0 0
        %2978 = vmatpush1.bf16.msra.mxu0 0
        %2979 = vmatprep.subr.bf16.mxu0 0
        %2980 = vmatpush1.bf16.msra.mxu0 0
        %2981 = vmatprep.subr.bf16.mxu0 0
        %2982 = vmatpush1.bf16.msra.mxu0 0
        %2983 = vmatprep.subr.bf16.mxu0 0
        %2984 = vmatpush1.bf16.msra.mxu0 0
        %2985 = vmatprep.subr.bf16.mxu0 0
        %2986 = vmatpush1.bf16.msra.mxu0 0
        %2987 = vmatprep.subr.bf16.mxu0 0
        %2988 = vmatpush1.bf16.msra.mxu0 0
        %2989 = vmatprep.subr.bf16.mxu0 0
        %2990 = vmatpush1.bf16.msra.mxu0 0
        %2991 = vmatprep.subr.bf16.mxu0 0
        %2992 = vmatpush1.bf16.msra.mxu0 0
        %2993 = vmatprep.subr.bf16.mxu0 0
        %2994 = vmatpush1.bf16.msra.mxu0 0
        %2995 = vmatprep.mubr.bf16.mxu0 0
        %2996 = vmatmul.mubr.bf16.gmra.mrb[0].mxu0 %v2961
        %v2997 = vpop.f32.mrb[0].mxu0
        %v2998 = vadd.f32 %v2946, %v2997
        %v2999 = vpop.f32.mrb[0].mxu0
        %v3000 = vpop.f32.mrb[0].mxu0
        %v3001 = vadd.f32 %v2946, %v3000
        %v3002 = vpop.f32.mrb[0].mxu0
        %3003 = vdwg.mxu0
        %v3004 = vpack.c.bf16 %v1012, %v1012
        %v3005 = vpack.c.bf16 %v1013, %v1013
        %v3006 = vld [vmem:[#allocation2] sm:$0xf]
        %v3007 = vld [vmem:[#allocation2 + $0x4] sm:$0xf]
        %v3009 = vsel %vm1185, %v3006, 0
        %v3012 = vsel %vm1215, %v3004, 0
        %3014 = vmatprep.subr.bf16.mxu0 0
        %3015 = vmatpush1.bf16.msra.mxu0 %v3012
        %3016 = vmatprep.subr.bf16.mxu0 0
        %3017 = vmatpush1.bf16.msra.mxu0 0
        %3018 = vmatprep.subr.bf16.mxu0 0
        %3019 = vmatpush1.bf16.msra.mxu0 0
        %3020 = vmatprep.subr.bf16.mxu0 0
        %3021 = vmatpush1.bf16.msra.mxu0 0
        %3022 = vmatprep.subr.bf16.mxu0 0
        %3023 = vmatpush1.bf16.msra.mxu0 0
        %3024 = vmatprep.subr.bf16.mxu0 0
        %3025 = vmatpush1.bf16.msra.mxu0 0
        %3026 = vmatprep.subr.bf16.mxu0 0
        %3027 = vmatpush1.bf16.msra.mxu0 0
        %3028 = vmatprep.subr.bf16.mxu0 0
        %3029 = vmatpush1.bf16.msra.mxu0 0
        %3030 = vmatprep.subr.bf16.mxu0 0
        %3031 = vmatpush1.bf16.msra.mxu0 0
        %3032 = vmatprep.subr.bf16.mxu0 0
        %3033 = vmatpush1.bf16.msra.mxu0 0
        %3034 = vmatprep.subr.bf16.mxu0 0
        %3035 = vmatpush1.bf16.msra.mxu0 0
        %3036 = vmatprep.subr.bf16.mxu0 0
        %3037 = vmatpush1.bf16.msra.mxu0 0
        %3038 = vmatprep.subr.bf16.mxu0 0
        %3039 = vmatpush1.bf16.msra.mxu0 0
        %3040 = vmatprep.subr.bf16.mxu0 0
        %3041 = vmatpush1.bf16.msra.mxu0 0
        %3042 = vmatprep.subr.bf16.mxu0 0
        %3043 = vmatpush1.bf16.msra.mxu0 0
        %3044 = vmatprep.subr.bf16.mxu0 0
        %3045 = vmatpush1.bf16.msra.mxu0 0
        %3046 = vmatprep.mubr.bf16.mxu0 0
        %3047 = vmatmul.mubr.bf16.gmra.mrb[0].mxu0 %v3009
        %v3048 = vpop.f32.mrb[0].mxu0
        %v3049 = vadd.f32 0.0, %v3048
        %v3050 = vpop.f32.mrb[0].mxu0
        %v3051 = vpop.f32.mrb[0].mxu0
        %v3052 = vpop.f32.mrb[0].mxu0
        %3053 = vdwg.mxu0
        %v3055 = vsel %vm1185, %v3007, 0
        %v3058 = vsel %vm1215, %v3005, 0
        %3060 = vmatprep.subr.bf16.mxu0 0
        %3061 = vmatpush1.bf16.msra.mxu0 %v3058
        %3062 = vmatprep.subr.bf16.mxu0 0
        %3063 = vmatpush1.bf16.msra.mxu0 0
        %3064 = vmatprep.subr.bf16.mxu0 0
        %3065 = vmatpush1.bf16.msra.mxu0 0
        %3066 = vmatprep.subr.bf16.mxu0 0
        %3067 = vmatpush1.bf16.msra.mxu0 0
        %3068 = vmatprep.subr.bf16.mxu0 0
        %3069 = vmatpush1.bf16.msra.mxu0 0
        %3070 = vmatprep.subr.bf16.mxu0 0
        %3071 = vmatpush1.bf16.msra.mxu0 0
        %3072 = vmatprep.subr.bf16.mxu0 0
        %3073 = vmatpush1.bf16.msra.mxu0 0
        %3074 = vmatprep.subr.bf16.mxu0 0
        %3075 = vmatpush1.bf16.msra.mxu0 0
        %3076 = vmatprep.subr.bf16.mxu0 0
        %3077 = vmatpush1.bf16.msra.mxu0 0
        %3078 = vmatprep.subr.bf16.mxu0 0
        %3079 = vmatpush1.bf16.msra.mxu0 0
        %3080 = vmatprep.subr.bf16.mxu0 0
        %3081 = vmatpush1.bf16.msra.mxu0 0
        %3082 = vmatprep.subr.bf16.mxu0 0
        %3083 = vmatpush1.bf16.msra.mxu0 0
        %3084 = vmatprep.subr.bf16.mxu0 0
        %3085 = vmatpush1.bf16.msra.mxu0 0
        %3086 = vmatprep.subr.bf16.mxu0 0
        %3087 = vmatpush1.bf16.msra.mxu0 0
        %3088 = vmatprep.subr.bf16.mxu0 0
        %3089 = vmatpush1.bf16.msra.mxu0 0
        %3090 = vmatprep.subr.bf16.mxu0 0
        %3091 = vmatpush1.bf16.msra.mxu0 0
        %3092 = vmatprep.mubr.bf16.mxu0 0
        %3093 = vmatmul.mubr.bf16.gmra.mrb[0].mxu0 %v3055
        %v3094 = vpop.f32.mrb[0].mxu0
        %v3095 = vadd.f32 0.0, %v3094
        %v3096 = vpop.f32.mrb[0].mxu0
        %v3097 = vpop.f32.mrb[0].mxu0
        %v3098 = vpop.f32.mrb[0].mxu0
        %3099 = vdwg.mxu0
        %s3100 = sld [smem:[#allocation7 + %s37]]
        %v3101 = vstv %s3100
        %v3102 = vmul.f32 %v3101, %v2998
        %v3103 = vmul.f32 %v3101, %v3001
        %v3104 = vadd.f32 %v966, %v3102
        %v3105 = vadd.f32 %v967, %v3103
        %s3106 = ssub.f32 1.0, %s3100
        %v3107 = vstv %s3106
        %v3108 = vmul.f32 %v3107, %v3049
        %v3109 = vmul.f32 %v3107, %v3095
        %v3110 = vadd.f32 %v3104, %v3108
        %v3111 = vadd.f32 %v3105, %v3109
        %v3112 = vsel %vm968, %v3110, 0.0
        %3113 = vadd.xlane.f32.xlu0 %v3112
        %v3114 = vpop.xlane.xlu0 %3113
        %v3115 = vsel %vm968, %v3111, 0.0
        %3116 = vadd.xlane.f32.xlu0 %v3115
        %v3117 = vpop.xlane.xlu0 %3116
        %v3118 = vmul.f32 %v3114, %v975
        %v3119 = vmul.f32 %v3117, %v975
        %v3120 = vsub.f32 %v3110, %v3118
        %v3121 = vsub.f32 %v3111, %v3119
        %v3122 = vmul.f32 %v3120, %v3120
        %v3123 = vmul.f32 %v3121, %v3121
        %v3124 = vsel %vm968, %v3122, 0.0
        %3125 = vadd.xlane.f32.xlu0 %v3124
        %v3126 = vpop.xlane.xlu0 %3125
        %v3127 = vsel %vm968, %v3123, 0.0
        %3128 = vadd.xlane.f32.xlu0 %v3127
        %v3129 = vpop.xlane.xlu0 %3128
        %v3130 = vmul.f32 %v3126, %v975
        %v3131 = vmul.f32 %v3129, %v975
        %v3132 = vadd.f32 %v3130, 1e-05
        %v3133 = vadd.f32 %v3131, 1e-05
        %v3134 = vrsqrt.pop %v3132
        %v3135 = vrsqrt.pop %v3133
        %v3136 = vmul.f32 %v3120, %v3134
        %v3137 = vmul.f32 %v3121, %v3135
        %v3138 = vld [vmem:[%s851] sm:$0x1]
        %v3140 = vlaneseq
        %v3141 = vshrl.u32 %v3140, 7
        %v3142 = vsub.s32 0, %v3141
        %v3143 = vrot.slane %v3138, %v3142
        %v3145 = vmul.f32 %v3136, %v3143
        %v3146 = vmul.f32 %v3137, %v3143
        %v3147 = vld [vmem:[%s854] sm:$0x1]
        %v3149 = vlaneseq
        %v3150 = vshrl.u32 %v3149, 7
        %v3151 = vsub.s32 0, %v3150
        %v3152 = vrot.slane %v3147, %v3151
        %v3154 = vadd.f32 %v3145, %v3152
        %v3155 = vadd.f32 %v3146, %v3152
        %v3156 = vpack.c.bf16 %v3155, %v3154
        %v3157 = vld [vmem:[%s859] sm:$0xf]
        %v3158 = vld [vmem:[%s859 + $0x4] sm:$0xf]
        %v3159 = vld [vmem:[%s859 + $0x8] sm:$0xf]
        %v3160 = vld [vmem:[%s859 + $0xc] sm:$0xf]
        %v3161 = vld [vmem:[%s862] sm:$0x1]
        %v3163 = vlaneseq
        %v3164 = vshrl.u32 %v3163, 7
        %v3165 = vsub.s32 0, %v3164
        %v3166 = vrot.slane %v3161, %v3165
        %v3172 = vunpack.c.l.b16 %v3157
        %v3173 = vunpack.c.l.b16 %v3158
        %v3174 = vunpack.c.l.b16 %v3159
        %v3175 = vunpack.c.l.b16 %v3160
        %v3176 = vpack.c.b16 %v3173, %v3172
        %v3177 = vpack.c.b16 %v3175, %v3174
        %v3181 = vsel %vm968, %v3156, 0
        %3183 = vmatprep.subr.bf16.mxu0 0
        %3184 = vmatpush1.bf16.msra.mxu0 %v3176
        %3185 = vmatprep.subr.bf16.mxu0 0
        %3186 = vmatpush1.bf16.msra.mxu0 %v3177
        %3187 = vmatprep.subr.bf16.mxu0 0
        %3188 = vmatpush1.bf16.msra.mxu0 0
        %3189 = vmatprep.subr.bf16.mxu0 0
        %3190 = vmatpush1.bf16.msra.mxu0 0
        %3191 = vmatprep.subr.bf16.mxu0 0
        %3192 = vmatpush1.bf16.msra.mxu0 0
        %3193 = vmatprep.subr.bf16.mxu0 0
        %3194 = vmatpush1.bf16.msra.mxu0 0
        %3195 = vmatprep.subr.bf16.mxu0 0
        %3196 = vmatpush1.bf16.msra.mxu0 0
        %3197 = vmatprep.subr.bf16.mxu0 0
        %3198 = vmatpush1.bf16.msra.mxu0 0
        %3199 = vmatprep.subr.bf16.mxu0 0
        %3200 = vmatpush1.bf16.msra.mxu0 0
        %3201 = vmatprep.subr.bf16.mxu0 0
        %3202 = vmatpush1.bf16.msra.mxu0 0
        %3203 = vmatprep.subr.bf16.mxu0 0
        %3204 = vmatpush1.bf16.msra.mxu0 0
        %3205 = vmatprep.subr.bf16.mxu0 0
        %3206 = vmatpush1.bf16.msra.mxu0 0
        %3207 = vmatprep.subr.bf16.mxu0 0
        %3208 = vmatpush1.bf16.msra.mxu0 0
        %3209 = vmatprep.subr.bf16.mxu0 0
        %3210 = vmatpush1.bf16.msra.mxu0 0
        %3211 = vmatprep.subr.bf16.mxu0 0
        %3212 = vmatpush1.bf16.msra.mxu0 0
        %3213 = vmatprep.subr.bf16.mxu0 0
        %3214 = vmatpush1.bf16.msra.mxu0 0
        %3215 = vmatprep.mubr.bf16.mxu0 0
        %3216 = vmatmul.mubr.bf16.gmra.mrb[0].mxu0 %v3181
        %v3217 = vpop.f32.mrb[0].mxu0
        %v3218 = vadd.f32 %v3166, %v3217
        %v3219 = vpop.f32.mrb[0].mxu0
        %v3220 = vpop.f32.mrb[0].mxu0
        %v3221 = vadd.f32 %v3166, %v3220
        %v3222 = vpop.f32.mrb[0].mxu0
        %3223 = vdwg.mxu0
        %v3224 = vmul.f32 %v3218, 0.5
        %v3225 = vmul.f32 %v3221, 0.5
        %v3226 = vmul.f32 %v3218, 0.70710677
        %v3227 = vmul.f32 %v3221, 0.70710677
        %v3228 = verf.f32.pop %v3226
        %v3229 = verf.f32.pop %v3227
        %v3230 = vadd.f32 %v3228, 1.0
        %v3231 = vadd.f32 %v3229, 1.0
        %v3232 = vmul.f32 %v3224, %v3230
        %v3233 = vmul.f32 %v3225, %v3231
        %v3234 = vpack.c.bf16 %v3233, %v3232
        %v3235 = vld [vmem:[%s867] sm:$0xf]
        %v3236 = vld [vmem:[%s867 + $0x4] sm:$0xf]
        %v3237 = vld [vmem:[%s867 + $0x8] sm:$0xf]
        %v3238 = vld [vmem:[%s867 + $0xc] sm:$0xf]
        %v3239 = vld [vmem:[%s867 + $0x10] sm:$0xf]
        %v3240 = vld [vmem:[%s867 + $0x14] sm:$0xf]
        %v3241 = vld [vmem:[%s867 + $0x18] sm:$0xf]
        %v3242 = vld [vmem:[%s867 + $0x1c] sm:$0xf]
        %v3243 = vld [vmem:[%s867 + $0x20] sm:$0xf]
        %v3244 = vld [vmem:[%s867 + $0x24] sm:$0xf]
        %v3245 = vld [vmem:[%s867 + $0x28] sm:$0xf]
        %v3246 = vld [vmem:[%s867 + $0x2c] sm:$0xf]
        %v3247 = vld [vmem:[%s867 + $0x30] sm:$0xf]
        %v3248 = vld [vmem:[%s867 + $0x34] sm:$0xf]
        %v3249 = vld [vmem:[%s867 + $0x38] sm:$0xf]
        %v3250 = vld [vmem:[%s867 + $0x3c] sm:$0xf]
        %v3251 = vld [vmem:[%s870] sm:$0x1]
        %v3253 = vlaneseq
        %v3254 = vshrl.u32 %v3253, 7
        %v3255 = vsub.s32 0, %v3254
        %v3256 = vrot.slane %v3251, %v3255
        %v3274 = vunpack.c.l.b16 %v3235
        %v3275 = vunpack.c.l.b16 %v3236
        %v3276 = vunpack.c.l.b16 %v3237
        %v3277 = vunpack.c.l.b16 %v3238
        %v3278 = vunpack.c.l.b16 %v3239
        %v3279 = vunpack.c.l.b16 %v3240
        %v3280 = vunpack.c.l.b16 %v3241
        %v3281 = vunpack.c.l.b16 %v3242
        %v3282 = vunpack.c.l.b16 %v3243
        %v3283 = vunpack.c.l.b16 %v3244
        %v3284 = vunpack.c.l.b16 %v3245
        %v3285 = vunpack.c.l.b16 %v3246
        %v3286 = vunpack.c.l.b16 %v3247
        %v3287 = vunpack.c.l.b16 %v3248
        %v3288 = vunpack.c.l.b16 %v3249
        %v3289 = vunpack.c.l.b16 %v3250
        %v3290 = vpack.c.b16 %v3275, %v3274
        %v3291 = vpack.c.b16 %v3277, %v3276
        %v3292 = vpack.c.b16 %v3279, %v3278
        %v3293 = vpack.c.b16 %v3281, %v3280
        %v3294 = vpack.c.b16 %v3283, %v3282
        %v3295 = vpack.c.b16 %v3285, %v3284
        %v3296 = vpack.c.b16 %v3287, %v3286
        %v3297 = vpack.c.b16 %v3289, %v3288
        %3306 = vmatprep.subr.bf16.mxu0 0
        %3307 = vmatpush1.bf16.msra.mxu0 %v3290
        %3308 = vmatprep.subr.bf16.mxu0 0
        %3309 = vmatpush1.bf16.msra.mxu0 %v3291
        %3310 = vmatprep.subr.bf16.mxu0 0
        %3311 = vmatpush1.bf16.msra.mxu0 %v3292
        %3312 = vmatprep.subr.bf16.mxu0 0
        %3313 = vmatpush1.bf16.msra.mxu0 %v3293
        %3314 = vmatprep.subr.bf16.mxu0 0
        %3315 = vmatpush1.bf16.msra.mxu0 %v3294
        %3316 = vmatprep.subr.bf16.mxu0 0
        %3317 = vmatpush1.bf16.msra.mxu0 %v3295
        %3318 = vmatprep.subr.bf16.mxu0 0
        %3319 = vmatpush1.bf16.msra.mxu0 %v3296
        %3320 = vmatprep.subr.bf16.mxu0 0
        %3321 = vmatpush1.bf16.msra.mxu0 %v3297
        %3322 = vmatprep.subr.bf16.mxu0 0
        %3323 = vmatpush1.bf16.msra.mxu0 0
        %3324 = vmatprep.subr.bf16.mxu0 0
        %3325 = vmatpush1.bf16.msra.mxu0 0
        %3326 = vmatprep.subr.bf16.mxu0 0
        %3327 = vmatpush1.bf16.msra.mxu0 0
        %3328 = vmatprep.subr.bf16.mxu0 0
        %3329 = vmatpush1.bf16.msra.mxu0 0
        %3330 = vmatprep.subr.bf16.mxu0 0
        %3331 = vmatpush1.bf16.msra.mxu0 0
        %3332 = vmatprep.subr.bf16.mxu0 0
        %3333 = vmatpush1.bf16.msra.mxu0 0
        %3334 = vmatprep.subr.bf16.mxu0 0
        %3335 = vmatpush1.bf16.msra.mxu0 0
        %3336 = vmatprep.subr.bf16.mxu0 0
        %3337 = vmatpush1.bf16.msra.mxu0 0
        %3338 = vmatprep.mubr.bf16.mxu0 0
        %3339 = vmatmul.mubr.bf16.gmra.mrb[0].mxu0 %v3234
        %v3340 = vpop.f32.mrb[0].mxu0
        %v3341 = vadd.f32 %v3256, %v3340
        %v3342 = vpop.f32.mrb[0].mxu0
        %v3343 = vpop.f32.mrb[0].mxu0
        %v3344 = vadd.f32 %v3256, %v3343
        %v3345 = vpop.f32.mrb[0].mxu0
        %3346 = vdwg.mxu0
        %v3347 = vadd.f32 %v3110, %v3341
        %v3348 = vadd.f32 %v3111, %v3344
        %3349 = vst.msk [vmem:[#allocation8] sm:$0xff] %vm968, %v3347
        %3350 = vst.msk [vmem:[#allocation8 + $0x8] sm:$0xff] %vm968, %v3348
        // Predicated region
        $region105: #{tpu_custom_call.1} parent=91 // pred_check
          %p3351 = pneg %p525
        $region106: #{tpu_custom_call.1} parent=91 // pred_check_branch
          %3353 = sbr.rel (%p3351) target = $region108
        $region107: #{tpu_custom_call.1} parent=91 // pred_region
          %s3354 = smul.u32 2, %s36
          %s3356 = ssub.s32 256, 256
          %3357 = vsyncadd [#allocation5], %s3356
          %s3358 = smul.addr %s3354, 128
          %s3359 = scalar_lea.hbm %s18, %s3358
          %s3360 = sshll.u32 [#allocation8], 4
          %s3361 = int_to_ptr.vmem [resolvable:$true] %s3360
          %3366 = dma.vmem_to_hbm [thread:$0]  %s3361, 256, %s3359, [#allocation5], 128, 128, 8
        $region108: #{tpu_custom_call.1} parent=91 // pred_fallthru
          _
        // Predicated region
        $region109: #{tpu_custom_call.1} parent=91 // pred_check
          %p3367 = pneg %p525
        $region110: #{tpu_custom_call.1} parent=91 // pred_check_branch
          %3369 = sbr.rel (%p3367) target = $region112
        $region111: #{tpu_custom_call.1} parent=91 // pred_region
          %3370 = dma.done [#allocation5], 256
        $region112: #{tpu_custom_call.1} parent=91 // pred_fallthru
          _
      $region92: #{tpu_custom_call.1} parent=5 // pred_fallthru
        _
      %p3371 = scmp.le.s32.totalorder 2, %s27
      // Predicated region
      $region113: #{tpu_custom_call.1} parent=5 // pred_check
        %p3372 = pneg %p3371
      $region114: #{tpu_custom_call.1} parent=5 // pred_check_branch
        %3374 = sbr.rel (%p3372) target = $region116
      $region115: #{tpu_custom_call.1} parent=5 // pred_region
        %s3375 = ssub.s32 %s27, 2
      $region116: #{tpu_custom_call.1} parent=5 // pred_fallthru
        _
    $region6: #{tpu_custom_call.1} parent=1 // loop_footer
      %s31 = sadd.s32 1, %s27
    $region7: #{tpu_custom_call.1} parent=1 // loop_footer_branch
      %26 = sbr.rel target = $region3
    $region8: #{tpu_custom_call.1} parent=1 // loop_exit
      _
    %3376 = vsyncpa [#allocation4], 1
    %s3377 = scalar_lea.sflag [#allocation4], 1
    %3378 = vsyncpa %s3377, 1
    %3379 = vsyncpa [#allocation5], 1
    %s3380 = scalar_lea.sflag [#allocation5], 1
    %3381 = vsyncpa %s3380, 1
    %3382 = vsyncpa [#allocation6], 1
    %s3383 = scalar_lea.sflag [#allocation6], 1
    %3384 = vsyncpa %s3383, 1

</llo_original>
